<compile_context>
chip_gen: v7x
topology: tpu7x:2x2x1
jax: 0.10.0
libtpu: 0.0.40
codegen_flags: <defaults>
</compile_context>

<pallas_src>
from functools import partial
import math

import jax
import jax.numpy as jnp
import numpy as np
from jax import lax
from jax.experimental import pallas as pl
from jax.experimental.pallas import tpu as pltpu

_VMEM_LIMIT_BYTES = 32 * 1024 * 1024   # safe on v5e/v6e (128 MiB) and v7x (64 MiB)


# ----------------------------------------------------------------------------
# Fused OuterBlock kernel: one grid step == one batch element pushed through
# the whole res_block chain.  Activations are channel-major (C, H*W) values
# (spatial on lanes); every matmul is W(Cout,Cin) @ x(Cin,P) on the MXU with
# bf16 operands and f32 accumulation.
# ----------------------------------------------------------------------------
def _outer_block_kernel(*refs, plan, ksize, pad, n_masks, has_sel):
    f32, bf16 = jnp.float32, jnp.bfloat16

    # --- parse positional refs (order fixed by the wrapper) -------------------
    idx = 0
    x_ref = refs[idx]; idx += 1
    sel_ref = None
    if has_sel:
        sel_ref = refs[idx]; idx += 1
    mask_refs = [refs[idx + t] for t in range(n_masks)]; idx += n_masks
    layer_refs = []
    for (_lstride, has_proj, conv_plans) in plan:
        convs = []
        for _ in conv_plans:
            convs.append((refs[idx], refs[idx + 1])); idx += 2
        proj = None
        if has_proj:
            proj = (refs[idx], refs[idx + 1]); idx += 2
        layer_refs.append((convs, proj))
    out_ref = refs[idx]

    def shift_lanes(x, off):
        # y[:, p] = x[:, p + off] (zero fill); out-of-range lanes are killed by
        # the tap mask anyway.  Static lane shift, no scratch, no relayout.
        if off == 0:
            return x
        c, p = x.shape
        z = jnp.zeros((c, abs(off)), x.dtype)
        if off > 0:
            return jnp.concatenate([x[:, off:], z], axis=1)
        return jnp.concatenate([z, x[:, :p + off]], axis=1)

    def conv_same(h_in, w_ref, mask_ref, in_w, select):
        # kxk "same"-padded stride-1 conv on the flat (Cin, P) activation:
        #     out = sum_t W_t @ (mask_t * shift_t(x))   -- k*k lane-dense matmuls.
        # If `select`, each bf16 tap is exactly subsampled (one-hot bf16 matmul
        # with S) before the weight matmul, which realizes the strided conv.
        hb = h_in.astype(bf16)
        acc = None
        for kh in range(ksize):
            for kw in range(ksize):
                t = kh * ksize + kw
                dh, dw = kh - pad, kw - pad
                tap = shift_lanes(hb, dh * in_w + dw)
                if not (dh == 0 and dw == 0):
                    tap = tap * mask_ref[t]            # (Cin,P) * (1,P), bf16 0/1
                if select:
                    tap = jnp.dot(tap, sel_ref[...],
                                  preferred_element_type=f32).astype(bf16)
                part = jnp.dot(w_ref[t], tap, preferred_element_type=f32)
                acc = part if acc is None else acc + part
        return acc                                      # (Cout, P_out) f32

    # --- run the res_block chain ----------------------------------------------
    h = x_ref[0]                                        # (Cin0, H*W) f32
    for (lstride, has_proj, conv_plans), (convs, proj) in zip(plan, layer_refs):
        x_block = h
        # shortcut branch (fused; uses the already-resident activation)
        if has_proj:
            ws_ref, bs_ref = proj
            xb = x_block.astype(bf16)
            if lstride > 1:                             # strided 1x1 projection
                xb = jnp.dot(xb, sel_ref[...],
                             preferred_element_type=f32).astype(bf16)
            sc = jnp.dot(ws_ref[...], xb, preferred_element_type=f32) + bs_ref[...]
        else:
            sc = x_block                                # identity skip, exact f32
        # conv chain
        nconv = len(conv_plans)
        hcur = x_block
        for j, ((in_w, strided, mslot), (w_ref, b_ref)) in enumerate(
                zip(conv_plans, convs)):
            acc = conv_same(hcur, w_ref, mask_refs[mslot], in_w, strided)
            acc = acc + b_ref[...]                      # (Cout,1) lane-broadcast
            if j == nconv - 1:
                acc = acc + sc                          # fused residual add
            hcur = jnp.maximum(acc, 0.0)
        h = hcur
    out_ref[0] = h                                      # lane-dense (Cout, P) store


# ----------------------------------------------------------------------------
# Wrapper: ONE pallas_call for the whole OuterBlock, grid over batch.
# ----------------------------------------------------------------------------
def _make_tap_masks(h, w, k, pad):
    # (k*k, 1, h*w) bf16 0/1 masks implementing zero "same" padding for the
    # lane-shift conv taps (computed once at trace time, resident in VMEM).
    p = h * w
    rows = np.arange(p) // w
    cols = np.arange(p) % w
    m = np.zeros((k * k, 1, p), np.float32)
    for kh in range(k):
        for kw in range(k):
            dh, dw = kh - pad, kw - pad
            ok = ((rows + dh >= 0) & (rows + dh < h) &
                  (cols + dw >= 0) & (cols + dw < w))
            m[kh * k + kw, 0, :] = ok.astype(np.float32)
    return jnp.asarray(m, jnp.bfloat16)


def _make_selection(h, w, ho, wo, s):
    # One-hot (h*w, ho*wo) matrix selecting the stride-s output positions;
    # bf16 so tap @ S is an exact subsample on the MXU.
    sel = np.zeros((h * w, ho * wo), np.float32)
    for i in range(ho):
        for j in range(wo):
            sel[(i * s) * w + j * s, i * wo + j] = 1.0
    return jnp.asarray(sel, jnp.bfloat16)


def outer_block_forward(layers, x_nchw, size, stride):
    """x_nchw: (N, Cin, H, W) float32.  Returns (N, Cout, Ho, Wo) float32."""
    n, cin0, H, W = x_nchw.shape
    k = size
    assert k % 2 == 1, "res_block assumes odd kernel size (same padding)"
    pad = k // 2

    # ---- static plan ---------------------------------------------------------
    plan = []
    mask_slot = {}
    cur_c, curH, curW = cin0, H, W
    sel_dims = None
    for li, lp in enumerate(layers):
        lstride = stride if li == 0 else 1
        in_c = cur_c
        outH = (curH + 2 * pad - k) // lstride + 1
        outW = (curW + 2 * pad - k) // lstride + 1
        if lstride > 1:
            assert sel_dims is None, "only layer 0 may be strided (OuterBlock)"
            sel_dims = (curH, curW, outH, outW, lstride)
        conv_plans = []
        for j, (wj, bj) in enumerate(lp["convs"]):
            kk, coutj, cinj = wj.shape
            assert kk == k * k and cinj == cur_c
            in_hw = (curH, curW) if j == 0 else (outH, outW)
            if in_hw not in mask_slot:
                mask_slot[in_hw] = len(mask_slot)
            conv_plans.append((in_hw[1], j == 0 and lstride > 1, mask_slot[in_hw]))
            cur_c = coutj
        has_proj = lp["shortcut"] is not None
        assert has_proj or (lstride == 1 and in_c == cur_c)
        plan.append((lstride, has_proj, tuple(conv_plans)))
        curH, curW = outH, outW
    cout_last, p_out = cur_c, curH * curW

    # ---- inputs + BlockSpecs (order must match the kernel's ref parsing) -----
    def _const_spec(a):
        nd = a.ndim
        return pl.BlockSpec(a.shape, lambda i, _nd=nd: (0,) * _nd)

    x_flat = x_nchw.reshape(n, cin0, H * W)             # channel-major, spatial on lanes
    inputs = [x_flat]
    in_specs = [pl.BlockSpec((1, cin0, H * W), lambda i: (i, 0, 0))]

    has_sel = sel_dims is not None
    if has_sel:
        sel = _make_selection(*sel_dims)
        inputs.append(sel); in_specs.append(_const_spec(sel))
    masks = [None] * len(mask_slot)
    for (hh, ww), slot in mask_slot.items():
        masks[slot] = _make_tap_masks(hh, ww, k, pad)
    for m in masks:
        inputs.append(m); in_specs.append(_const_spec(m))
    for lp in layers:
        for wj, bj in lp["convs"]:
            inputs += [wj, bj]; in_specs += [_const_spec(wj), _const_spec(bj)]
        if lp["shortcut"] is not None:
            ws, bs = lp["shortcut"]
            inputs += [ws, bs]; in_specs += [_const_spec(ws), _const_spec(bs)]

    out_shape = jax.ShapeDtypeStruct((n, cout_last, p_out), jnp.float32)
    out_spec = pl.BlockSpec((1, cout_last, p_out), lambda i: (i, 0, 0))

    # VMEM sanity check (everything is tiny here; big maps need the tiling TODO).
    vmem_est = 2 * (cin0 * H * W * 4) + 2 * (cout_last * p_out * 4)
    vmem_est += 2 * sum(int(np.prod(a.shape)) * a.dtype.itemsize for a in inputs[1:])
    assert vmem_est < int(0.75 * _VMEM_LIMIT_BYTES), (
        "OuterBlock VMEM footprint too large; add spatial tiling")

    kernel = partial(_outer_block_kernel, plan=tuple(plan), ksize=k, pad=pad,
                     n_masks=len(masks), has_sel=has_sel)

    out = pl.pallas_call(
        kernel,
        out_shape=out_shape,
        grid_spec=pltpu.PrefetchScalarGridSpec(
            num_scalar_prefetch=0,
            grid=(n,),
            in_specs=in_specs,
            out_specs=out_spec),
        compiler_params=pltpu.CompilerParams(
            dimension_semantics=("parallel",),          # v7x megacore sharding
            vmem_limit_bytes=_VMEM_LIMIT_BYTES),
    )(*inputs)
    return out.reshape(n, cout_last, curH, curW)        # NCHW, no transpose needed


# ----------------------------------------------------------------------------
# Parameter init (deterministic).  Weights are stored directly in the flipped
# lane-dense layout (k*k, Cout, Cin) and in bf16 to feed the MXU natively.
# ----------------------------------------------------------------------------
def init_conv(key, cin, cout, k):
    kw_, kb_ = jax.random.split(key)
    fan_in = cin * k * k
    w = jax.random.normal(kw_, (k, k, cin, cout),
                          jnp.float32) * math.sqrt(2.0 / fan_in)
    w_pack = jnp.transpose(w, (0, 1, 3, 2)).reshape(k * k, cout, cin).astype(jnp.bfloat16)
    b = (jax.random.normal(kb_, (cout,), jnp.float32) * 0.01).reshape(cout, 1)
    return w_pack, b


def init_res_block(key, in_ch, out_chs, size, stride):
    keys = jax.random.split(key, len(out_chs) + 1)
    chs = [in_ch] + list(out_chs)
    convs = [init_conv(keys[i], chs[i], chs[i + 1], size)
             for i in range(len(out_chs))]
    shortcut = None
    if in_ch != out_chs[-1] or stride != 1:
        ws, bs = init_conv(keys[-1], in_ch, out_chs[-1], 1)
        shortcut = (ws[0], bs)            # (Cout, Cin) bf16, (Cout, 1) f32
    return {"convs": convs, "shortcut": shortcut}


def init_outer_block(key, in_repr, out_reprs, size, stride):
    reprs = [[in_repr]] + [list(r) for r in out_reprs]
    keys = jax.random.split(key, len(reprs) - 1)
    layers = []
    for i in range(len(reprs) - 1):
        s = stride if i == 0 else 1
        layers.append(init_res_block(keys[i], reprs[i][-1], reprs[i + 1], size, s))
    return layers


# ----------------------------------------------------------------------------
# Pure-JAX reference (mirrors the kernel's bf16 MXU operands, f32 epilogue).
# ----------------------------------------------------------------------------
def ref_conv_nchw(x, w_pack, b, *, k, stride, padding, residual=None, relu=True):
    kk, cout, cin = w_pack.shape
    w_oihw = (w_pack.astype(jnp.float32)
              .reshape(k, k, cout, cin).transpose(2, 3, 0, 1))
    xb = x.astype(jnp.bfloat16).astype(jnp.float32)
    out = lax.conv_general_dilated(
        xb, w_oihw, (stride, stride), [(padding, padding)] * 2,
        dimension_numbers=("NCHW", "OIHW", "NCHW"),
        precision=lax.Precision.HIGHEST)
    out = out + b.astype(jnp.float32).reshape(1, cout, 1, 1)
    if residual is not None:
        out = out + residual
    if relu:
        out = jnp.maximum(out, 0.0)
    return out


def ref_res_block_forward(p, x, size, stride):
    pad = size // 2
    if p["shortcut"] is None:
        sc = x
    else:
        ws, bs = p["shortcut"]
        sc = ref_conv_nchw(x, ws[None], bs, k=1, stride=stride, padding=0, relu=False)
    h = x
    nconv = len(p["convs"])
    for j, (wj, bj) in enumerate(p["convs"]):
        s = stride if j == 0 else 1
        h = ref_conv_nchw(h, wj, bj, k=size, stride=s, padding=pad,
                          residual=sc if j == nconv - 1 else None, relu=True)
    return h


def ref_outer_block_forward(layers, x_nchw, size, stride):
    x = x_nchw
    for i, lp in enumerate(layers):
        x = ref_res_block_forward(lp, x, size, stride if i == 0 else 1)
    return x


# ----------------------------------------------------------------------------
if __name__ == "__main__":
    key = jax.random.PRNGKey(0)
    k_param, k_x = jax.random.split(key)

    in_repr = 4
    out_reprs = [[8], [8, 8]]   # block 0: 4->8 (projection skip); block 1: 8->8->8 (identity skip)
    size = 3

    x = jax.random.normal(k_x, (2, in_repr, 16, 16), jnp.float32)   # NCHW

    fwd = jax.jit(outer_block_forward, static_argnums=(2, 3))

    for stride in (1, 2):       # stride=2 exercises the selection-matmul path
        layers = init_outer_block(k_param, in_repr, out_reprs, size, stride)
        out = jax.block_until_ready(fwd(layers, x, size, stride))
        hw = 16 // stride
        assert out.shape == (2, out_reprs[-1][-1], hw, hw), out.shape
        ref = jax.block_until_ready(
            ref_outer_block_forward(layers, x, size, stride))
        np.testing.assert_allclose(np.asarray(out), np.asarray(ref),
                                   rtol=2e-3, atol=2e-3)

    print("KERNEL_OK")
</pallas_src>

<mosaic_0001>
module attributes {stable_mosaic.version = 11 : i64} {
  func.func @_outer_block_kernel(%arg0: i32, %arg1: memref<1x4x256xf32, #tpu.memory_space<vmem>>, %arg2: memref<9x1x256xbf16, #tpu.memory_space<vmem>>, %arg3: memref<9x8x4xbf16, #tpu.memory_space<vmem>>, %arg4: memref<8x1xf32, #tpu.memory_space<vmem>>, %arg5: memref<8x4xbf16, #tpu.memory_space<vmem>>, %arg6: memref<8x1xf32, #tpu.memory_space<vmem>>, %arg7: memref<9x8x8xbf16, #tpu.memory_space<vmem>>, %arg8: memref<8x1xf32, #tpu.memory_space<vmem>>, %arg9: memref<9x8x8xbf16, #tpu.memory_space<vmem>>, %arg10: memref<8x1xf32, #tpu.memory_space<vmem>>, %arg11: memref<1x8x256xf32, #tpu.memory_space<vmem>>) attributes {dimension_semantics = [#tpu.dimension_semantics<parallel>], iteration_bounds = array<i64: 2>, scalar_prefetch = 0 : i64, scratch_operands = 0 : i64, tpu.core_type = #tpu.core_type<tc>, window_params = [{transform_indices = @transform_0, window_bounds = array<i64: 1, 4, 256>}, {pipeline_mode = #tpu.pipeline_mode<synchronous>, transform_indices = @transform_1, window_bounds = array<i64: 9, 1, 256>}, {pipeline_mode = #tpu.pipeline_mode<synchronous>, transform_indices = @transform_2, window_bounds = array<i64: 9, 8, 4>}, {pipeline_mode = #tpu.pipeline_mode<synchronous>, transform_indices = @transform_3, window_bounds = array<i64: 8, 1>}, {pipeline_mode = #tpu.pipeline_mode<synchronous>, transform_indices = @transform_4, window_bounds = array<i64: 8, 4>}, {pipeline_mode = #tpu.pipeline_mode<synchronous>, transform_indices = @transform_5, window_bounds = array<i64: 8, 1>}, {pipeline_mode = #tpu.pipeline_mode<synchronous>, transform_indices = @transform_6, window_bounds = array<i64: 9, 8, 8>}, {pipeline_mode = #tpu.pipeline_mode<synchronous>, transform_indices = @transform_7, window_bounds = array<i64: 8, 1>}, {pipeline_mode = #tpu.pipeline_mode<synchronous>, transform_indices = @transform_8, window_bounds = array<i64: 9, 8, 8>}, {pipeline_mode = #tpu.pipeline_mode<synchronous>, transform_indices = @transform_9, window_bounds = array<i64: 8, 1>}, {transform_indices = @transform_10, window_bounds = array<i64: 1, 8, 256>}]} {
    %c0 = arith.constant 0 : index
    %c0_0 = arith.constant 0 : index
    %c0_1 = arith.constant 0 : index
    %0 = vector.load %arg1[%c0, %c0_0, %c0_1] : memref<1x4x256xf32, #tpu.memory_space<vmem>>, vector<1x4x256xf32>
    %1 = vector.shape_cast %0 : vector<1x4x256xf32> to vector<4x256xf32>
    %2 = arith.truncf %1 : vector<4x256xf32> to vector<4x256xbf16>
    %c0_2 = arith.constant 0 : index
    %c0_3 = arith.constant 0 : index
    %3 = vector.load %arg5[%c0_2, %c0_3] : memref<8x4xbf16, #tpu.memory_space<vmem>>, vector<8x4xbf16>
    %cst = arith.constant dense<0.000000e+00> : vector<8x256xf32>
    %4 = tpu.matmul %3, %2, %cst {dimension_numbers = #tpu.dot_dimension_numbers<[1], [0], [0], [1], [0, 0, 1, 1], [], []>} : vector<8x4xbf16>, vector<4x256xbf16>, vector<8x256xf32> -> vector<8x256xf32>
    %c0_4 = arith.constant 0 : index
    %c0_5 = arith.constant 0 : index
    %5 = vector.load %arg6[%c0_4, %c0_5] : memref<8x1xf32, #tpu.memory_space<vmem>>, vector<8x1xf32>
    %6 = vector.broadcast %5 : vector<8x1xf32> to vector<8x256xf32>
    %7 = arith.addf %4, %6 : vector<8x256xf32>
    %8 = arith.truncf %1 : vector<4x256xf32> to vector<4x256xbf16>
    %cst_6 = arith.constant 0.000000e+00 : bf16
    %9 = vector.broadcast %cst_6 : bf16 to vector<4x17xbf16>
    %10 = vector.extract_strided_slice %8 {offsets = [0, 0], sizes = [4, 239], strides = [1, 1]} : vector<4x256xbf16> to vector<4x239xbf16>
    %11 = tpu.concatenate %9, %10 in 1 : vector<4x17xbf16>, vector<4x239xbf16> -> vector<4x256xbf16>
    %c0_7 = arith.constant 0 : index
    %c0_8 = arith.constant 0 : index
    %c0_9 = arith.constant 0 : index
    %12 = vector.load %arg2[%c0_7, %c0_8, %c0_9] : memref<9x1x256xbf16, #tpu.memory_space<vmem>>, vector<1x1x256xbf16>
    %13 = vector.shape_cast %12 : vector<1x1x256xbf16> to vector<1x256xbf16>
    %14 = vector.broadcast %13 : vector<1x256xbf16> to vector<4x256xbf16>
    %15 = arith.mulf %11, %14 : vector<4x256xbf16>
    %c0_10 = arith.constant 0 : index
    %c0_11 = arith.constant 0 : index
    %c0_12 = arith.constant 0 : index
    %16 = vector.load %arg3[%c0_10, %c0_11, %c0_12] : memref<9x8x4xbf16, #tpu.memory_space<vmem>>, vector<1x8x4xbf16>
    %17 = vector.shape_cast %16 : vector<1x8x4xbf16> to vector<8x4xbf16>
    %cst_13 = arith.constant dense<0.000000e+00> : vector<8x256xf32>
    %18 = tpu.matmul %17, %15, %cst_13 {dimension_numbers = #tpu.dot_dimension_numbers<[1], [0], [0], [1], [0, 0, 1, 1], [], []>} : vector<8x4xbf16>, vector<4x256xbf16>, vector<8x256xf32> -> vector<8x256xf32>
    %cst_14 = arith.constant 0.000000e+00 : bf16
    %19 = vector.broadcast %cst_14 : bf16 to vector<4x16xbf16>
    %20 = vector.extract_strided_slice %8 {offsets = [0, 0], sizes = [4, 240], strides = [1, 1]} : vector<4x256xbf16> to vector<4x240xbf16>
    %21 = tpu.concatenate %19, %20 in 1 : vector<4x16xbf16>, vector<4x240xbf16> -> vector<4x256xbf16>
    %c1 = arith.constant 1 : index
    %c0_15 = arith.constant 0 : index
    %c0_16 = arith.constant 0 : index
    %22 = vector.load %arg2[%c1, %c0_15, %c0_16] : memref<9x1x256xbf16, #tpu.memory_space<vmem>>, vector<1x1x256xbf16>
    %23 = vector.shape_cast %22 : vector<1x1x256xbf16> to vector<1x256xbf16>
    %24 = vector.broadcast %23 : vector<1x256xbf16> to vector<4x256xbf16>
    %25 = arith.mulf %21, %24 : vector<4x256xbf16>
    %c1_17 = arith.constant 1 : index
    %c0_18 = arith.constant 0 : index
    %c0_19 = arith.constant 0 : index
    %26 = vector.load %arg3[%c1_17, %c0_18, %c0_19] : memref<9x8x4xbf16, #tpu.memory_space<vmem>>, vector<1x8x4xbf16>
    %27 = vector.shape_cast %26 : vector<1x8x4xbf16> to vector<8x4xbf16>
    %cst_20 = arith.constant dense<0.000000e+00> : vector<8x256xf32>
    %28 = tpu.matmul %27, %25, %cst_20 {dimension_numbers = #tpu.dot_dimension_numbers<[1], [0], [0], [1], [0, 0, 1, 1], [], []>} : vector<8x4xbf16>, vector<4x256xbf16>, vector<8x256xf32> -> vector<8x256xf32>
    %29 = arith.addf %18, %28 : vector<8x256xf32>
    %cst_21 = arith.constant 0.000000e+00 : bf16
    %30 = vector.broadcast %cst_21 : bf16 to vector<4x15xbf16>
    %31 = vector.extract_strided_slice %8 {offsets = [0, 0], sizes = [4, 241], strides = [1, 1]} : vector<4x256xbf16> to vector<4x241xbf16>
    %32 = tpu.concatenate %30, %31 in 1 : vector<4x15xbf16>, vector<4x241xbf16> -> vector<4x256xbf16>
    %c2 = arith.constant 2 : index
    %c0_22 = arith.constant 0 : index
    %c0_23 = arith.constant 0 : index
    %33 = vector.load %arg2[%c2, %c0_22, %c0_23] : memref<9x1x256xbf16, #tpu.memory_space<vmem>>, vector<1x1x256xbf16>
    %34 = vector.shape_cast %33 : vector<1x1x256xbf16> to vector<1x256xbf16>
    %35 = vector.broadcast %34 : vector<1x256xbf16> to vector<4x256xbf16>
    %36 = arith.mulf %32, %35 : vector<4x256xbf16>
    %c2_24 = arith.constant 2 : index
    %c0_25 = arith.constant 0 : index
    %c0_26 = arith.constant 0 : index
    %37 = vector.load %arg3[%c2_24, %c0_25, %c0_26] : memref<9x8x4xbf16, #tpu.memory_space<vmem>>, vector<1x8x4xbf16>
    %38 = vector.shape_cast %37 : vector<1x8x4xbf16> to vector<8x4xbf16>
    %cst_27 = arith.constant dense<0.000000e+00> : vector<8x256xf32>
    %39 = tpu.matmul %38, %36, %cst_27 {dimension_numbers = #tpu.dot_dimension_numbers<[1], [0], [0], [1], [0, 0, 1, 1], [], []>} : vector<8x4xbf16>, vector<4x256xbf16>, vector<8x256xf32> -> vector<8x256xf32>
    %40 = arith.addf %29, %39 : vector<8x256xf32>
    %cst_28 = arith.constant 0.000000e+00 : bf16
    %41 = vector.broadcast %cst_28 : bf16 to vector<4x1xbf16>
    %42 = vector.extract_strided_slice %8 {offsets = [0, 0], sizes = [4, 255], strides = [1, 1]} : vector<4x256xbf16> to vector<4x255xbf16>
    %43 = tpu.concatenate %41, %42 in 1 : vector<4x1xbf16>, vector<4x255xbf16> -> vector<4x256xbf16>
    %c3 = arith.constant 3 : index
    %c0_29 = arith.constant 0 : index
    %c0_30 = arith.constant 0 : index
    %44 = vector.load %arg2[%c3, %c0_29, %c0_30] : memref<9x1x256xbf16, #tpu.memory_space<vmem>>, vector<1x1x256xbf16>
    %45 = vector.shape_cast %44 : vector<1x1x256xbf16> to vector<1x256xbf16>
    %46 = vector.broadcast %45 : vector<1x256xbf16> to vector<4x256xbf16>
    %47 = arith.mulf %43, %46 : vector<4x256xbf16>
    %c3_31 = arith.constant 3 : index
    %c0_32 = arith.constant 0 : index
    %c0_33 = arith.constant 0 : index
    %48 = vector.load %arg3[%c3_31, %c0_32, %c0_33] : memref<9x8x4xbf16, #tpu.memory_space<vmem>>, vector<1x8x4xbf16>
    %49 = vector.shape_cast %48 : vector<1x8x4xbf16> to vector<8x4xbf16>
    %cst_34 = arith.constant dense<0.000000e+00> : vector<8x256xf32>
    %50 = tpu.matmul %49, %47, %cst_34 {dimension_numbers = #tpu.dot_dimension_numbers<[1], [0], [0], [1], [0, 0, 1, 1], [], []>} : vector<8x4xbf16>, vector<4x256xbf16>, vector<8x256xf32> -> vector<8x256xf32>
    %51 = arith.addf %40, %50 : vector<8x256xf32>
    %c4 = arith.constant 4 : index
    %c0_35 = arith.constant 0 : index
    %c0_36 = arith.constant 0 : index
    %52 = vector.load %arg3[%c4, %c0_35, %c0_36] : memref<9x8x4xbf16, #tpu.memory_space<vmem>>, vector<1x8x4xbf16>
    %53 = vector.shape_cast %52 : vector<1x8x4xbf16> to vector<8x4xbf16>
    %cst_37 = arith.constant dense<0.000000e+00> : vector<8x256xf32>
    %54 = tpu.matmul %53, %8, %cst_37 {dimension_numbers = #tpu.dot_dimension_numbers<[1], [0], [0], [1], [0, 0, 1, 1], [], []>} : vector<8x4xbf16>, vector<4x256xbf16>, vector<8x256xf32> -> vector<8x256xf32>
    %55 = arith.addf %51, %54 : vector<8x256xf32>
    %cst_38 = arith.constant 0.000000e+00 : bf16
    %56 = vector.broadcast %cst_38 : bf16 to vector<4x1xbf16>
    %57 = vector.extract_strided_slice %8 {offsets = [0, 1], sizes = [4, 255], strides = [1, 1]} : vector<4x256xbf16> to vector<4x255xbf16>
    %58 = tpu.concatenate %57, %56 in 1 : vector<4x255xbf16>, vector<4x1xbf16> -> vector<4x256xbf16>
    %c5 = arith.constant 5 : index
    %c0_39 = arith.constant 0 : index
    %c0_40 = arith.constant 0 : index
    %59 = vector.load %arg2[%c5, %c0_39, %c0_40] : memref<9x1x256xbf16, #tpu.memory_space<vmem>>, vector<1x1x256xbf16>
    %60 = vector.shape_cast %59 : vector<1x1x256xbf16> to vector<1x256xbf16>
    %61 = vector.broadcast %60 : vector<1x256xbf16> to vector<4x256xbf16>
    %62 = arith.mulf %58, %61 : vector<4x256xbf16>
    %c5_41 = arith.constant 5 : index
    %c0_42 = arith.constant 0 : index
    %c0_43 = arith.constant 0 : index
    %63 = vector.load %arg3[%c5_41, %c0_42, %c0_43] : memref<9x8x4xbf16, #tpu.memory_space<vmem>>, vector<1x8x4xbf16>
    %64 = vector.shape_cast %63 : vector<1x8x4xbf16> to vector<8x4xbf16>
    %cst_44 = arith.constant dense<0.000000e+00> : vector<8x256xf32>
    %65 = tpu.matmul %64, %62, %cst_44 {dimension_numbers = #tpu.dot_dimension_numbers<[1], [0], [0], [1], [0, 0, 1, 1], [], []>} : vector<8x4xbf16>, vector<4x256xbf16>, vector<8x256xf32> -> vector<8x256xf32>
    %66 = arith.addf %55, %65 : vector<8x256xf32>
    %cst_45 = arith.constant 0.000000e+00 : bf16
    %67 = vector.broadcast %cst_45 : bf16 to vector<4x15xbf16>
    %68 = vector.extract_strided_slice %8 {offsets = [0, 15], sizes = [4, 241], strides = [1, 1]} : vector<4x256xbf16> to vector<4x241xbf16>
    %69 = tpu.concatenate %68, %67 in 1 : vector<4x241xbf16>, vector<4x15xbf16> -> vector<4x256xbf16>
    %c6 = arith.constant 6 : index
    %c0_46 = arith.constant 0 : index
    %c0_47 = arith.constant 0 : index
    %70 = vector.load %arg2[%c6, %c0_46, %c0_47] : memref<9x1x256xbf16, #tpu.memory_space<vmem>>, vector<1x1x256xbf16>
    %71 = vector.shape_cast %70 : vector<1x1x256xbf16> to vector<1x256xbf16>
    %72 = vector.broadcast %71 : vector<1x256xbf16> to vector<4x256xbf16>
    %73 = arith.mulf %69, %72 : vector<4x256xbf16>
    %c6_48 = arith.constant 6 : index
    %c0_49 = arith.constant 0 : index
    %c0_50 = arith.constant 0 : index
    %74 = vector.load %arg3[%c6_48, %c0_49, %c0_50] : memref<9x8x4xbf16, #tpu.memory_space<vmem>>, vector<1x8x4xbf16>
    %75 = vector.shape_cast %74 : vector<1x8x4xbf16> to vector<8x4xbf16>
    %cst_51 = arith.constant dense<0.000000e+00> : vector<8x256xf32>
    %76 = tpu.matmul %75, %73, %cst_51 {dimension_numbers = #tpu.dot_dimension_numbers<[1], [0], [0], [1], [0, 0, 1, 1], [], []>} : vector<8x4xbf16>, vector<4x256xbf16>, vector<8x256xf32> -> vector<8x256xf32>
    %77 = arith.addf %66, %76 : vector<8x256xf32>
    %cst_52 = arith.constant 0.000000e+00 : bf16
    %78 = vector.broadcast %cst_52 : bf16 to vector<4x16xbf16>
    %79 = vector.extract_strided_slice %8 {offsets = [0, 16], sizes = [4, 240], strides = [1, 1]} : vector<4x256xbf16> to vector<4x240xbf16>
    %80 = tpu.concatenate %79, %78 in 1 : vector<4x240xbf16>, vector<4x16xbf16> -> vector<4x256xbf16>
    %c7 = arith.constant 7 : index
    %c0_53 = arith.constant 0 : index
    %c0_54 = arith.constant 0 : index
    %81 = vector.load %arg2[%c7, %c0_53, %c0_54] : memref<9x1x256xbf16, #tpu.memory_space<vmem>>, vector<1x1x256xbf16>
    %82 = vector.shape_cast %81 : vector<1x1x256xbf16> to vector<1x256xbf16>
    %83 = vector.broadcast %82 : vector<1x256xbf16> to vector<4x256xbf16>
    %84 = arith.mulf %80, %83 : vector<4x256xbf16>
    %c7_55 = arith.constant 7 : index
    %c0_56 = arith.constant 0 : index
    %c0_57 = arith.constant 0 : index
    %85 = vector.load %arg3[%c7_55, %c0_56, %c0_57] : memref<9x8x4xbf16, #tpu.memory_space<vmem>>, vector<1x8x4xbf16>
    %86 = vector.shape_cast %85 : vector<1x8x4xbf16> to vector<8x4xbf16>
    %cst_58 = arith.constant dense<0.000000e+00> : vector<8x256xf32>
    %87 = tpu.matmul %86, %84, %cst_58 {dimension_numbers = #tpu.dot_dimension_numbers<[1], [0], [0], [1], [0, 0, 1, 1], [], []>} : vector<8x4xbf16>, vector<4x256xbf16>, vector<8x256xf32> -> vector<8x256xf32>
    %88 = arith.addf %77, %87 : vector<8x256xf32>
    %cst_59 = arith.constant 0.000000e+00 : bf16
    %89 = vector.broadcast %cst_59 : bf16 to vector<4x17xbf16>
    %90 = vector.extract_strided_slice %8 {offsets = [0, 17], sizes = [4, 239], strides = [1, 1]} : vector<4x256xbf16> to vector<4x239xbf16>
    %91 = tpu.concatenate %90, %89 in 1 : vector<4x239xbf16>, vector<4x17xbf16> -> vector<4x256xbf16>
    %c8 = arith.constant 8 : index
    %c0_60 = arith.constant 0 : index
    %c0_61 = arith.constant 0 : index
    %92 = vector.load %arg2[%c8, %c0_60, %c0_61] : memref<9x1x256xbf16, #tpu.memory_space<vmem>>, vector<1x1x256xbf16>
    %93 = vector.shape_cast %92 : vector<1x1x256xbf16> to vector<1x256xbf16>
    %94 = vector.broadcast %93 : vector<1x256xbf16> to vector<4x256xbf16>
    %95 = arith.mulf %91, %94 : vector<4x256xbf16>
    %c8_62 = arith.constant 8 : index
    %c0_63 = arith.constant 0 : index
    %c0_64 = arith.constant 0 : index
    %96 = vector.load %arg3[%c8_62, %c0_63, %c0_64] : memref<9x8x4xbf16, #tpu.memory_space<vmem>>, vector<1x8x4xbf16>
    %97 = vector.shape_cast %96 : vector<1x8x4xbf16> to vector<8x4xbf16>
    %cst_65 = arith.constant dense<0.000000e+00> : vector<8x256xf32>
    %98 = tpu.matmul %97, %95, %cst_65 {dimension_numbers = #tpu.dot_dimension_numbers<[1], [0], [0], [1], [0, 0, 1, 1], [], []>} : vector<8x4xbf16>, vector<4x256xbf16>, vector<8x256xf32> -> vector<8x256xf32>
    %99 = arith.addf %88, %98 : vector<8x256xf32>
    %c0_66 = arith.constant 0 : index
    %c0_67 = arith.constant 0 : index
    %100 = vector.load %arg4[%c0_66, %c0_67] : memref<8x1xf32, #tpu.memory_space<vmem>>, vector<8x1xf32>
    %101 = vector.broadcast %100 : vector<8x1xf32> to vector<8x256xf32>
    %102 = arith.addf %99, %101 : vector<8x256xf32>
    %103 = arith.addf %102, %7 : vector<8x256xf32>
    %cst_68 = arith.constant 0.000000e+00 : f32
    %104 = vector.broadcast %cst_68 : f32 to vector<8x256xf32>
    %105 = arith.maximumf %103, %104 : vector<8x256xf32>
    %106 = arith.truncf %105 : vector<8x256xf32> to vector<8x256xbf16>
    %cst_69 = arith.constant 0.000000e+00 : bf16
    %107 = vector.broadcast %cst_69 : bf16 to vector<8x17xbf16>
    %108 = vector.extract_strided_slice %106 {offsets = [0, 0], sizes = [8, 239], strides = [1, 1]} : vector<8x256xbf16> to vector<8x239xbf16>
    %109 = tpu.concatenate %107, %108 in 1 : vector<8x17xbf16>, vector<8x239xbf16> -> vector<8x256xbf16>
    %c0_70 = arith.constant 0 : index
    %c0_71 = arith.constant 0 : index
    %c0_72 = arith.constant 0 : index
    %110 = vector.load %arg2[%c0_70, %c0_71, %c0_72] : memref<9x1x256xbf16, #tpu.memory_space<vmem>>, vector<1x1x256xbf16>
    %111 = vector.shape_cast %110 : vector<1x1x256xbf16> to vector<1x256xbf16>
    %112 = vector.broadcast %111 : vector<1x256xbf16> to vector<8x256xbf16>
    %113 = arith.mulf %109, %112 : vector<8x256xbf16>
    %c0_73 = arith.constant 0 : index
    %c0_74 = arith.constant 0 : index
    %c0_75 = arith.constant 0 : index
    %114 = vector.load %arg7[%c0_73, %c0_74, %c0_75] : memref<9x8x8xbf16, #tpu.memory_space<vmem>>, vector<1x8x8xbf16>
    %115 = vector.shape_cast %114 : vector<1x8x8xbf16> to vector<8x8xbf16>
    %cst_76 = arith.constant dense<0.000000e+00> : vector<8x256xf32>
    %116 = tpu.matmul %115, %113, %cst_76 {dimension_numbers = #tpu.dot_dimension_numbers<[1], [0], [0], [1], [0, 0, 1, 1], [], []>} : vector<8x8xbf16>, vector<8x256xbf16>, vector<8x256xf32> -> vector<8x256xf32>
    %cst_77 = arith.constant 0.000000e+00 : bf16
    %117 = vector.broadcast %cst_77 : bf16 to vector<8x16xbf16>
    %118 = vector.extract_strided_slice %106 {offsets = [0, 0], sizes = [8, 240], strides = [1, 1]} : vector<8x256xbf16> to vector<8x240xbf16>
    %119 = tpu.concatenate %117, %118 in 1 : vector<8x16xbf16>, vector<8x240xbf16> -> vector<8x256xbf16>
    %c1_78 = arith.constant 1 : index
    %c0_79 = arith.constant 0 : index
    %c0_80 = arith.constant 0 : index
    %120 = vector.load %arg2[%c1_78, %c0_79, %c0_80] : memref<9x1x256xbf16, #tpu.memory_space<vmem>>, vector<1x1x256xbf16>
    %121 = vector.shape_cast %120 : vector<1x1x256xbf16> to vector<1x256xbf16>
    %122 = vector.broadcast %121 : vector<1x256xbf16> to vector<8x256xbf16>
    %123 = arith.mulf %119, %122 : vector<8x256xbf16>
    %c1_81 = arith.constant 1 : index
    %c0_82 = arith.constant 0 : index
    %c0_83 = arith.constant 0 : index
    %124 = vector.load %arg7[%c1_81, %c0_82, %c0_83] : memref<9x8x8xbf16, #tpu.memory_space<vmem>>, vector<1x8x8xbf16>
    %125 = vector.shape_cast %124 : vector<1x8x8xbf16> to vector<8x8xbf16>
    %cst_84 = arith.constant dense<0.000000e+00> : vector<8x256xf32>
    %126 = tpu.matmul %125, %123, %cst_84 {dimension_numbers = #tpu.dot_dimension_numbers<[1], [0], [0], [1], [0, 0, 1, 1], [], []>} : vector<8x8xbf16>, vector<8x256xbf16>, vector<8x256xf32> -> vector<8x256xf32>
    %127 = arith.addf %116, %126 : vector<8x256xf32>
    %cst_85 = arith.constant 0.000000e+00 : bf16
    %128 = vector.broadcast %cst_85 : bf16 to vector<8x15xbf16>
    %129 = vector.extract_strided_slice %106 {offsets = [0, 0], sizes = [8, 241], strides = [1, 1]} : vector<8x256xbf16> to vector<8x241xbf16>
    %130 = tpu.concatenate %128, %129 in 1 : vector<8x15xbf16>, vector<8x241xbf16> -> vector<8x256xbf16>
    %c2_86 = arith.constant 2 : index
    %c0_87 = arith.constant 0 : index
    %c0_88 = arith.constant 0 : index
    %131 = vector.load %arg2[%c2_86, %c0_87, %c0_88] : memref<9x1x256xbf16, #tpu.memory_space<vmem>>, vector<1x1x256xbf16>
    %132 = vector.shape_cast %131 : vector<1x1x256xbf16> to vector<1x256xbf16>
    %133 = vector.broadcast %132 : vector<1x256xbf16> to vector<8x256xbf16>
    %134 = arith.mulf %130, %133 : vector<8x256xbf16>
    %c2_89 = arith.constant 2 : index
    %c0_90 = arith.constant 0 : index
    %c0_91 = arith.constant 0 : index
    %135 = vector.load %arg7[%c2_89, %c0_90, %c0_91] : memref<9x8x8xbf16, #tpu.memory_space<vmem>>, vector<1x8x8xbf16>
    %136 = vector.shape_cast %135 : vector<1x8x8xbf16> to vector<8x8xbf16>
    %cst_92 = arith.constant dense<0.000000e+00> : vector<8x256xf32>
    %137 = tpu.matmul %136, %134, %cst_92 {dimension_numbers = #tpu.dot_dimension_numbers<[1], [0], [0], [1], [0, 0, 1, 1], [], []>} : vector<8x8xbf16>, vector<8x256xbf16>, vector<8x256xf32> -> vector<8x256xf32>
    %138 = arith.addf %127, %137 : vector<8x256xf32>
    %cst_93 = arith.constant 0.000000e+00 : bf16
    %139 = vector.broadcast %cst_93 : bf16 to vector<8x1xbf16>
    %140 = vector.extract_strided_slice %106 {offsets = [0, 0], sizes = [8, 255], strides = [1, 1]} : vector<8x256xbf16> to vector<8x255xbf16>
    %141 = tpu.concatenate %139, %140 in 1 : vector<8x1xbf16>, vector<8x255xbf16> -> vector<8x256xbf16>
    %c3_94 = arith.constant 3 : index
    %c0_95 = arith.constant 0 : index
    %c0_96 = arith.constant 0 : index
    %142 = vector.load %arg2[%c3_94, %c0_95, %c0_96] : memref<9x1x256xbf16, #tpu.memory_space<vmem>>, vector<1x1x256xbf16>
    %143 = vector.shape_cast %142 : vector<1x1x256xbf16> to vector<1x256xbf16>
    %144 = vector.broadcast %143 : vector<1x256xbf16> to vector<8x256xbf16>
    %145 = arith.mulf %141, %144 : vector<8x256xbf16>
    %c3_97 = arith.constant 3 : index
    %c0_98 = arith.constant 0 : index
    %c0_99 = arith.constant 0 : index
    %146 = vector.load %arg7[%c3_97, %c0_98, %c0_99] : memref<9x8x8xbf16, #tpu.memory_space<vmem>>, vector<1x8x8xbf16>
    %147 = vector.shape_cast %146 : vector<1x8x8xbf16> to vector<8x8xbf16>
    %cst_100 = arith.constant dense<0.000000e+00> : vector<8x256xf32>
    %148 = tpu.matmul %147, %145, %cst_100 {dimension_numbers = #tpu.dot_dimension_numbers<[1], [0], [0], [1], [0, 0, 1, 1], [], []>} : vector<8x8xbf16>, vector<8x256xbf16>, vector<8x256xf32> -> vector<8x256xf32>
    %149 = arith.addf %138, %148 : vector<8x256xf32>
    %c4_101 = arith.constant 4 : index
    %c0_102 = arith.constant 0 : index
    %c0_103 = arith.constant 0 : index
    %150 = vector.load %arg7[%c4_101, %c0_102, %c0_103] : memref<9x8x8xbf16, #tpu.memory_space<vmem>>, vector<1x8x8xbf16>
    %151 = vector.shape_cast %150 : vector<1x8x8xbf16> to vector<8x8xbf16>
    %cst_104 = arith.constant dense<0.000000e+00> : vector<8x256xf32>
    %152 = tpu.matmul %151, %106, %cst_104 {dimension_numbers = #tpu.dot_dimension_numbers<[1], [0], [0], [1], [0, 0, 1, 1], [], []>} : vector<8x8xbf16>, vector<8x256xbf16>, vector<8x256xf32> -> vector<8x256xf32>
    %153 = arith.addf %149, %152 : vector<8x256xf32>
    %cst_105 = arith.constant 0.000000e+00 : bf16
    %154 = vector.broadcast %cst_105 : bf16 to vector<8x1xbf16>
    %155 = vector.extract_strided_slice %106 {offsets = [0, 1], sizes = [8, 255], strides = [1, 1]} : vector<8x256xbf16> to vector<8x255xbf16>
    %156 = tpu.concatenate %155, %154 in 1 : vector<8x255xbf16>, vector<8x1xbf16> -> vector<8x256xbf16>
    %c5_106 = arith.constant 5 : index
    %c0_107 = arith.constant 0 : index
    %c0_108 = arith.constant 0 : index
    %157 = vector.load %arg2[%c5_106, %c0_107, %c0_108] : memref<9x1x256xbf16, #tpu.memory_space<vmem>>, vector<1x1x256xbf16>
    %158 = vector.shape_cast %157 : vector<1x1x256xbf16> to vector<1x256xbf16>
    %159 = vector.broadcast %158 : vector<1x256xbf16> to vector<8x256xbf16>
    %160 = arith.mulf %156, %159 : vector<8x256xbf16>
    %c5_109 = arith.constant 5 : index
    %c0_110 = arith.constant 0 : index
    %c0_111 = arith.constant 0 : index
    %161 = vector.load %arg7[%c5_109, %c0_110, %c0_111] : memref<9x8x8xbf16, #tpu.memory_space<vmem>>, vector<1x8x8xbf16>
    %162 = vector.shape_cast %161 : vector<1x8x8xbf16> to vector<8x8xbf16>
    %cst_112 = arith.constant dense<0.000000e+00> : vector<8x256xf32>
    %163 = tpu.matmul %162, %160, %cst_112 {dimension_numbers = #tpu.dot_dimension_numbers<[1], [0], [0], [1], [0, 0, 1, 1], [], []>} : vector<8x8xbf16>, vector<8x256xbf16>, vector<8x256xf32> -> vector<8x256xf32>
    %164 = arith.addf %153, %163 : vector<8x256xf32>
    %cst_113 = arith.constant 0.000000e+00 : bf16
    %165 = vector.broadcast %cst_113 : bf16 to vector<8x15xbf16>
    %166 = vector.extract_strided_slice %106 {offsets = [0, 15], sizes = [8, 241], strides = [1, 1]} : vector<8x256xbf16> to vector<8x241xbf16>
    %167 = tpu.concatenate %166, %165 in 1 : vector<8x241xbf16>, vector<8x15xbf16> -> vector<8x256xbf16>
    %c6_114 = arith.constant 6 : index
    %c0_115 = arith.constant 0 : index
    %c0_116 = arith.constant 0 : index
    %168 = vector.load %arg2[%c6_114, %c0_115, %c0_116] : memref<9x1x256xbf16, #tpu.memory_space<vmem>>, vector<1x1x256xbf16>
    %169 = vector.shape_cast %168 : vector<1x1x256xbf16> to vector<1x256xbf16>
    %170 = vector.broadcast %169 : vector<1x256xbf16> to vector<8x256xbf16>
    %171 = arith.mulf %167, %170 : vector<8x256xbf16>
    %c6_117 = arith.constant 6 : index
    %c0_118 = arith.constant 0 : index
    %c0_119 = arith.constant 0 : index
    %172 = vector.load %arg7[%c6_117, %c0_118, %c0_119] : memref<9x8x8xbf16, #tpu.memory_space<vmem>>, vector<1x8x8xbf16>
    %173 = vector.shape_cast %172 : vector<1x8x8xbf16> to vector<8x8xbf16>
    %cst_120 = arith.constant dense<0.000000e+00> : vector<8x256xf32>
    %174 = tpu.matmul %173, %171, %cst_120 {dimension_numbers = #tpu.dot_dimension_numbers<[1], [0], [0], [1], [0, 0, 1, 1], [], []>} : vector<8x8xbf16>, vector<8x256xbf16>, vector<8x256xf32> -> vector<8x256xf32>
    %175 = arith.addf %164, %174 : vector<8x256xf32>
    %cst_121 = arith.constant 0.000000e+00 : bf16
    %176 = vector.broadcast %cst_121 : bf16 to vector<8x16xbf16>
    %177 = vector.extract_strided_slice %106 {offsets = [0, 16], sizes = [8, 240], strides = [1, 1]} : vector<8x256xbf16> to vector<8x240xbf16>
    %178 = tpu.concatenate %177, %176 in 1 : vector<8x240xbf16>, vector<8x16xbf16> -> vector<8x256xbf16>
    %c7_122 = arith.constant 7 : index
    %c0_123 = arith.constant 0 : index
    %c0_124 = arith.constant 0 : index
    %179 = vector.load %arg2[%c7_122, %c0_123, %c0_124] : memref<9x1x256xbf16, #tpu.memory_space<vmem>>, vector<1x1x256xbf16>
    %180 = vector.shape_cast %179 : vector<1x1x256xbf16> to vector<1x256xbf16>
    %181 = vector.broadcast %180 : vector<1x256xbf16> to vector<8x256xbf16>
    %182 = arith.mulf %178, %181 : vector<8x256xbf16>
    %c7_125 = arith.constant 7 : index
    %c0_126 = arith.constant 0 : index
    %c0_127 = arith.constant 0 : index
    %183 = vector.load %arg7[%c7_125, %c0_126, %c0_127] : memref<9x8x8xbf16, #tpu.memory_space<vmem>>, vector<1x8x8xbf16>
    %184 = vector.shape_cast %183 : vector<1x8x8xbf16> to vector<8x8xbf16>
    %cst_128 = arith.constant dense<0.000000e+00> : vector<8x256xf32>
    %185 = tpu.matmul %184, %182, %cst_128 {dimension_numbers = #tpu.dot_dimension_numbers<[1], [0], [0], [1], [0, 0, 1, 1], [], []>} : vector<8x8xbf16>, vector<8x256xbf16>, vector<8x256xf32> -> vector<8x256xf32>
    %186 = arith.addf %175, %185 : vector<8x256xf32>
    %cst_129 = arith.constant 0.000000e+00 : bf16
    %187 = vector.broadcast %cst_129 : bf16 to vector<8x17xbf16>
    %188 = vector.extract_strided_slice %106 {offsets = [0, 17], sizes = [8, 239], strides = [1, 1]} : vector<8x256xbf16> to vector<8x239xbf16>
    %189 = tpu.concatenate %188, %187 in 1 : vector<8x239xbf16>, vector<8x17xbf16> -> vector<8x256xbf16>
    %c8_130 = arith.constant 8 : index
    %c0_131 = arith.constant 0 : index
    %c0_132 = arith.constant 0 : index
    %190 = vector.load %arg2[%c8_130, %c0_131, %c0_132] : memref<9x1x256xbf16, #tpu.memory_space<vmem>>, vector<1x1x256xbf16>
    %191 = vector.shape_cast %190 : vector<1x1x256xbf16> to vector<1x256xbf16>
    %192 = vector.broadcast %191 : vector<1x256xbf16> to vector<8x256xbf16>
    %193 = arith.mulf %189, %192 : vector<8x256xbf16>
    %c8_133 = arith.constant 8 : index
    %c0_134 = arith.constant 0 : index
    %c0_135 = arith.constant 0 : index
    %194 = vector.load %arg7[%c8_133, %c0_134, %c0_135] : memref<9x8x8xbf16, #tpu.memory_space<vmem>>, vector<1x8x8xbf16>
    %195 = vector.shape_cast %194 : vector<1x8x8xbf16> to vector<8x8xbf16>
    %cst_136 = arith.constant dense<0.000000e+00> : vector<8x256xf32>
    %196 = tpu.matmul %195, %193, %cst_136 {dimension_numbers = #tpu.dot_dimension_numbers<[1], [0], [0], [1], [0, 0, 1, 1], [], []>} : vector<8x8xbf16>, vector<8x256xbf16>, vector<8x256xf32> -> vector<8x256xf32>
    %197 = arith.addf %186, %196 : vector<8x256xf32>
    %c0_137 = arith.constant 0 : index
    %c0_138 = arith.constant 0 : index
    %198 = vector.load %arg8[%c0_137, %c0_138] : memref<8x1xf32, #tpu.memory_space<vmem>>, vector<8x1xf32>
    %199 = vector.broadcast %198 : vector<8x1xf32> to vector<8x256xf32>
    %200 = arith.addf %197, %199 : vector<8x256xf32>
    %cst_139 = arith.constant 0.000000e+00 : f32
    %201 = vector.broadcast %cst_139 : f32 to vector<8x256xf32>
    %202 = arith.maximumf %200, %201 : vector<8x256xf32>
    %203 = arith.truncf %202 : vector<8x256xf32> to vector<8x256xbf16>
    %cst_140 = arith.constant 0.000000e+00 : bf16
    %204 = vector.broadcast %cst_140 : bf16 to vector<8x17xbf16>
    %205 = vector.extract_strided_slice %203 {offsets = [0, 0], sizes = [8, 239], strides = [1, 1]} : vector<8x256xbf16> to vector<8x239xbf16>
    %206 = tpu.concatenate %204, %205 in 1 : vector<8x17xbf16>, vector<8x239xbf16> -> vector<8x256xbf16>
    %c0_141 = arith.constant 0 : index
    %c0_142 = arith.constant 0 : index
    %c0_143 = arith.constant 0 : index
    %207 = vector.load %arg2[%c0_141, %c0_142, %c0_143] : memref<9x1x256xbf16, #tpu.memory_space<vmem>>, vector<1x1x256xbf16>
    %208 = vector.shape_cast %207 : vector<1x1x256xbf16> to vector<1x256xbf16>
    %209 = vector.broadcast %208 : vector<1x256xbf16> to vector<8x256xbf16>
    %210 = arith.mulf %206, %209 : vector<8x256xbf16>
    %c0_144 = arith.constant 0 : index
    %c0_145 = arith.constant 0 : index
    %c0_146 = arith.constant 0 : index
    %211 = vector.load %arg9[%c0_144, %c0_145, %c0_146] : memref<9x8x8xbf16, #tpu.memory_space<vmem>>, vector<1x8x8xbf16>
    %212 = vector.shape_cast %211 : vector<1x8x8xbf16> to vector<8x8xbf16>
    %cst_147 = arith.constant dense<0.000000e+00> : vector<8x256xf32>
    %213 = tpu.matmul %212, %210, %cst_147 {dimension_numbers = #tpu.dot_dimension_numbers<[1], [0], [0], [1], [0, 0, 1, 1], [], []>} : vector<8x8xbf16>, vector<8x256xbf16>, vector<8x256xf32> -> vector<8x256xf32>
    %cst_148 = arith.constant 0.000000e+00 : bf16
    %214 = vector.broadcast %cst_148 : bf16 to vector<8x16xbf16>
    %215 = vector.extract_strided_slice %203 {offsets = [0, 0], sizes = [8, 240], strides = [1, 1]} : vector<8x256xbf16> to vector<8x240xbf16>
    %216 = tpu.concatenate %214, %215 in 1 : vector<8x16xbf16>, vector<8x240xbf16> -> vector<8x256xbf16>
    %c1_149 = arith.constant 1 : index
    %c0_150 = arith.constant 0 : index
    %c0_151 = arith.constant 0 : index
    %217 = vector.load %arg2[%c1_149, %c0_150, %c0_151] : memref<9x1x256xbf16, #tpu.memory_space<vmem>>, vector<1x1x256xbf16>
    %218 = vector.shape_cast %217 : vector<1x1x256xbf16> to vector<1x256xbf16>
    %219 = vector.broadcast %218 : vector<1x256xbf16> to vector<8x256xbf16>
    %220 = arith.mulf %216, %219 : vector<8x256xbf16>
    %c1_152 = arith.constant 1 : index
    %c0_153 = arith.constant 0 : index
    %c0_154 = arith.constant 0 : index
    %221 = vector.load %arg9[%c1_152, %c0_153, %c0_154] : memref<9x8x8xbf16, #tpu.memory_space<vmem>>, vector<1x8x8xbf16>
    %222 = vector.shape_cast %221 : vector<1x8x8xbf16> to vector<8x8xbf16>
    %cst_155 = arith.constant dense<0.000000e+00> : vector<8x256xf32>
    %223 = tpu.matmul %222, %220, %cst_155 {dimension_numbers = #tpu.dot_dimension_numbers<[1], [0], [0], [1], [0, 0, 1, 1], [], []>} : vector<8x8xbf16>, vector<8x256xbf16>, vector<8x256xf32> -> vector<8x256xf32>
    %224 = arith.addf %213, %223 : vector<8x256xf32>
    %cst_156 = arith.constant 0.000000e+00 : bf16
    %225 = vector.broadcast %cst_156 : bf16 to vector<8x15xbf16>
    %226 = vector.extract_strided_slice %203 {offsets = [0, 0], sizes = [8, 241], strides = [1, 1]} : vector<8x256xbf16> to vector<8x241xbf16>
    %227 = tpu.concatenate %225, %226 in 1 : vector<8x15xbf16>, vector<8x241xbf16> -> vector<8x256xbf16>
    %c2_157 = arith.constant 2 : index
    %c0_158 = arith.constant 0 : index
    %c0_159 = arith.constant 0 : index
    %228 = vector.load %arg2[%c2_157, %c0_158, %c0_159] : memref<9x1x256xbf16, #tpu.memory_space<vmem>>, vector<1x1x256xbf16>
    %229 = vector.shape_cast %228 : vector<1x1x256xbf16> to vector<1x256xbf16>
    %230 = vector.broadcast %229 : vector<1x256xbf16> to vector<8x256xbf16>
    %231 = arith.mulf %227, %230 : vector<8x256xbf16>
    %c2_160 = arith.constant 2 : index
    %c0_161 = arith.constant 0 : index
    %c0_162 = arith.constant 0 : index
    %232 = vector.load %arg9[%c2_160, %c0_161, %c0_162] : memref<9x8x8xbf16, #tpu.memory_space<vmem>>, vector<1x8x8xbf16>
    %233 = vector.shape_cast %232 : vector<1x8x8xbf16> to vector<8x8xbf16>
    %cst_163 = arith.constant dense<0.000000e+00> : vector<8x256xf32>
    %234 = tpu.matmul %233, %231, %cst_163 {dimension_numbers = #tpu.dot_dimension_numbers<[1], [0], [0], [1], [0, 0, 1, 1], [], []>} : vector<8x8xbf16>, vector<8x256xbf16>, vector<8x256xf32> -> vector<8x256xf32>
    %235 = arith.addf %224, %234 : vector<8x256xf32>
    %cst_164 = arith.constant 0.000000e+00 : bf16
    %236 = vector.broadcast %cst_164 : bf16 to vector<8x1xbf16>
    %237 = vector.extract_strided_slice %203 {offsets = [0, 0], sizes = [8, 255], strides = [1, 1]} : vector<8x256xbf16> to vector<8x255xbf16>
    %238 = tpu.concatenate %236, %237 in 1 : vector<8x1xbf16>, vector<8x255xbf16> -> vector<8x256xbf16>
    %c3_165 = arith.constant 3 : index
    %c0_166 = arith.constant 0 : index
    %c0_167 = arith.constant 0 : index
    %239 = vector.load %arg2[%c3_165, %c0_166, %c0_167] : memref<9x1x256xbf16, #tpu.memory_space<vmem>>, vector<1x1x256xbf16>
    %240 = vector.shape_cast %239 : vector<1x1x256xbf16> to vector<1x256xbf16>
    %241 = vector.broadcast %240 : vector<1x256xbf16> to vector<8x256xbf16>
    %242 = arith.mulf %238, %241 : vector<8x256xbf16>
    %c3_168 = arith.constant 3 : index
    %c0_169 = arith.constant 0 : index
    %c0_170 = arith.constant 0 : index
    %243 = vector.load %arg9[%c3_168, %c0_169, %c0_170] : memref<9x8x8xbf16, #tpu.memory_space<vmem>>, vector<1x8x8xbf16>
    %244 = vector.shape_cast %243 : vector<1x8x8xbf16> to vector<8x8xbf16>
    %cst_171 = arith.constant dense<0.000000e+00> : vector<8x256xf32>
    %245 = tpu.matmul %244, %242, %cst_171 {dimension_numbers = #tpu.dot_dimension_numbers<[1], [0], [0], [1], [0, 0, 1, 1], [], []>} : vector<8x8xbf16>, vector<8x256xbf16>, vector<8x256xf32> -> vector<8x256xf32>
    %246 = arith.addf %235, %245 : vector<8x256xf32>
    %c4_172 = arith.constant 4 : index
    %c0_173 = arith.constant 0 : index
    %c0_174 = arith.constant 0 : index
    %247 = vector.load %arg9[%c4_172, %c0_173, %c0_174] : memref<9x8x8xbf16, #tpu.memory_space<vmem>>, vector<1x8x8xbf16>
    %248 = vector.shape_cast %247 : vector<1x8x8xbf16> to vector<8x8xbf16>
    %cst_175 = arith.constant dense<0.000000e+00> : vector<8x256xf32>
    %249 = tpu.matmul %248, %203, %cst_175 {dimension_numbers = #tpu.dot_dimension_numbers<[1], [0], [0], [1], [0, 0, 1, 1], [], []>} : vector<8x8xbf16>, vector<8x256xbf16>, vector<8x256xf32> -> vector<8x256xf32>
    %250 = arith.addf %246, %249 : vector<8x256xf32>
    %cst_176 = arith.constant 0.000000e+00 : bf16
    %251 = vector.broadcast %cst_176 : bf16 to vector<8x1xbf16>
    %252 = vector.extract_strided_slice %203 {offsets = [0, 1], sizes = [8, 255], strides = [1, 1]} : vector<8x256xbf16> to vector<8x255xbf16>
    %253 = tpu.concatenate %252, %251 in 1 : vector<8x255xbf16>, vector<8x1xbf16> -> vector<8x256xbf16>
    %c5_177 = arith.constant 5 : index
    %c0_178 = arith.constant 0 : index
    %c0_179 = arith.constant 0 : index
    %254 = vector.load %arg2[%c5_177, %c0_178, %c0_179] : memref<9x1x256xbf16, #tpu.memory_space<vmem>>, vector<1x1x256xbf16>
    %255 = vector.shape_cast %254 : vector<1x1x256xbf16> to vector<1x256xbf16>
    %256 = vector.broadcast %255 : vector<1x256xbf16> to vector<8x256xbf16>
    %257 = arith.mulf %253, %256 : vector<8x256xbf16>
    %c5_180 = arith.constant 5 : index
    %c0_181 = arith.constant 0 : index
    %c0_182 = arith.constant 0 : index
    %258 = vector.load %arg9[%c5_180, %c0_181, %c0_182] : memref<9x8x8xbf16, #tpu.memory_space<vmem>>, vector<1x8x8xbf16>
    %259 = vector.shape_cast %258 : vector<1x8x8xbf16> to vector<8x8xbf16>
    %cst_183 = arith.constant dense<0.000000e+00> : vector<8x256xf32>
    %260 = tpu.matmul %259, %257, %cst_183 {dimension_numbers = #tpu.dot_dimension_numbers<[1], [0], [0], [1], [0, 0, 1, 1], [], []>} : vector<8x8xbf16>, vector<8x256xbf16>, vector<8x256xf32> -> vector<8x256xf32>
    %261 = arith.addf %250, %260 : vector<8x256xf32>
    %cst_184 = arith.constant 0.000000e+00 : bf16
    %262 = vector.broadcast %cst_184 : bf16 to vector<8x15xbf16>
    %263 = vector.extract_strided_slice %203 {offsets = [0, 15], sizes = [8, 241], strides = [1, 1]} : vector<8x256xbf16> to vector<8x241xbf16>
    %264 = tpu.concatenate %263, %262 in 1 : vector<8x241xbf16>, vector<8x15xbf16> -> vector<8x256xbf16>
    %c6_185 = arith.constant 6 : index
    %c0_186 = arith.constant 0 : index
    %c0_187 = arith.constant 0 : index
    %265 = vector.load %arg2[%c6_185, %c0_186, %c0_187] : memref<9x1x256xbf16, #tpu.memory_space<vmem>>, vector<1x1x256xbf16>
    %266 = vector.shape_cast %265 : vector<1x1x256xbf16> to vector<1x256xbf16>
    %267 = vector.broadcast %266 : vector<1x256xbf16> to vector<8x256xbf16>
    %268 = arith.mulf %264, %267 : vector<8x256xbf16>
    %c6_188 = arith.constant 6 : index
    %c0_189 = arith.constant 0 : index
    %c0_190 = arith.constant 0 : index
    %269 = vector.load %arg9[%c6_188, %c0_189, %c0_190] : memref<9x8x8xbf16, #tpu.memory_space<vmem>>, vector<1x8x8xbf16>
    %270 = vector.shape_cast %269 : vector<1x8x8xbf16> to vector<8x8xbf16>
    %cst_191 = arith.constant dense<0.000000e+00> : vector<8x256xf32>
    %271 = tpu.matmul %270, %268, %cst_191 {dimension_numbers = #tpu.dot_dimension_numbers<[1], [0], [0], [1], [0, 0, 1, 1], [], []>} : vector<8x8xbf16>, vector<8x256xbf16>, vector<8x256xf32> -> vector<8x256xf32>
    %272 = arith.addf %261, %271 : vector<8x256xf32>
    %cst_192 = arith.constant 0.000000e+00 : bf16
    %273 = vector.broadcast %cst_192 : bf16 to vector<8x16xbf16>
    %274 = vector.extract_strided_slice %203 {offsets = [0, 16], sizes = [8, 240], strides = [1, 1]} : vector<8x256xbf16> to vector<8x240xbf16>
    %275 = tpu.concatenate %274, %273 in 1 : vector<8x240xbf16>, vector<8x16xbf16> -> vector<8x256xbf16>
    %c7_193 = arith.constant 7 : index
    %c0_194 = arith.constant 0 : index
    %c0_195 = arith.constant 0 : index
    %276 = vector.load %arg2[%c7_193, %c0_194, %c0_195] : memref<9x1x256xbf16, #tpu.memory_space<vmem>>, vector<1x1x256xbf16>
    %277 = vector.shape_cast %276 : vector<1x1x256xbf16> to vector<1x256xbf16>
    %278 = vector.broadcast %277 : vector<1x256xbf16> to vector<8x256xbf16>
    %279 = arith.mulf %275, %278 : vector<8x256xbf16>
    %c7_196 = arith.constant 7 : index
    %c0_197 = arith.constant 0 : index
    %c0_198 = arith.constant 0 : index
    %280 = vector.load %arg9[%c7_196, %c0_197, %c0_198] : memref<9x8x8xbf16, #tpu.memory_space<vmem>>, vector<1x8x8xbf16>
    %281 = vector.shape_cast %280 : vector<1x8x8xbf16> to vector<8x8xbf16>
    %cst_199 = arith.constant dense<0.000000e+00> : vector<8x256xf32>
    %282 = tpu.matmul %281, %279, %cst_199 {dimension_numbers = #tpu.dot_dimension_numbers<[1], [0], [0], [1], [0, 0, 1, 1], [], []>} : vector<8x8xbf16>, vector<8x256xbf16>, vector<8x256xf32> -> vector<8x256xf32>
    %283 = arith.addf %272, %282 : vector<8x256xf32>
    %cst_200 = arith.constant 0.000000e+00 : bf16
    %284 = vector.broadcast %cst_200 : bf16 to vector<8x17xbf16>
    %285 = vector.extract_strided_slice %203 {offsets = [0, 17], sizes = [8, 239], strides = [1, 1]} : vector<8x256xbf16> to vector<8x239xbf16>
    %286 = tpu.concatenate %285, %284 in 1 : vector<8x239xbf16>, vector<8x17xbf16> -> vector<8x256xbf16>
    %c8_201 = arith.constant 8 : index
    %c0_202 = arith.constant 0 : index
    %c0_203 = arith.constant 0 : index
    %287 = vector.load %arg2[%c8_201, %c0_202, %c0_203] : memref<9x1x256xbf16, #tpu.memory_space<vmem>>, vector<1x1x256xbf16>
    %288 = vector.shape_cast %287 : vector<1x1x256xbf16> to vector<1x256xbf16>
    %289 = vector.broadcast %288 : vector<1x256xbf16> to vector<8x256xbf16>
    %290 = arith.mulf %286, %289 : vector<8x256xbf16>
    %c8_204 = arith.constant 8 : index
    %c0_205 = arith.constant 0 : index
    %c0_206 = arith.constant 0 : index
    %291 = vector.load %arg9[%c8_204, %c0_205, %c0_206] : memref<9x8x8xbf16, #tpu.memory_space<vmem>>, vector<1x8x8xbf16>
    %292 = vector.shape_cast %291 : vector<1x8x8xbf16> to vector<8x8xbf16>
    %cst_207 = arith.constant dense<0.000000e+00> : vector<8x256xf32>
    %293 = tpu.matmul %292, %290, %cst_207 {dimension_numbers = #tpu.dot_dimension_numbers<[1], [0], [0], [1], [0, 0, 1, 1], [], []>} : vector<8x8xbf16>, vector<8x256xbf16>, vector<8x256xf32> -> vector<8x256xf32>
    %294 = arith.addf %283, %293 : vector<8x256xf32>
    %c0_208 = arith.constant 0 : index
    %c0_209 = arith.constant 0 : index
    %295 = vector.load %arg10[%c0_208, %c0_209] : memref<8x1xf32, #tpu.memory_space<vmem>>, vector<8x1xf32>
    %296 = vector.broadcast %295 : vector<8x1xf32> to vector<8x256xf32>
    %297 = arith.addf %294, %296 : vector<8x256xf32>
    %298 = arith.addf %297, %105 : vector<8x256xf32>
    %cst_210 = arith.constant 0.000000e+00 : f32
    %299 = vector.broadcast %cst_210 : f32 to vector<8x256xf32>
    %300 = arith.maximumf %298, %299 : vector<8x256xf32>
    %c0_211 = arith.constant 0 : index
    %c0_212 = arith.constant 0 : index
    %c0_213 = arith.constant 0 : index
    %301 = vector.load %arg11[%c0_211, %c0_212, %c0_213] : memref<1x8x256xf32, #tpu.memory_space<vmem>>, vector<1x8x256xf32>
    %302 = vector.shape_cast %301 : vector<1x8x256xf32> to vector<8x256xf32>
    %303 = vector.shape_cast %300 : vector<8x256xf32> to vector<1x8x256xf32>
    tpu.vector_store %arg11[%c0_211, %c0_212, %c0_213], %303 {strides = array<i32>} : memref<1x8x256xf32, #tpu.memory_space<vmem>>, vector<1x8x256xf32>,
    return
  }
  func.func @transform_0(%arg0: i32) -> (i32, i32, i32) {
    %c0_i32 = arith.constant 0 : i32
    %c0_i32_0 = arith.constant 0 : i32
    %c0_i32_1 = arith.constant 0 : i32
    return %arg0, %c0_i32, %c0_i32_0 : i32, i32, i32
  }
  func.func @transform_1(%arg0: i32) -> (i32, i32, i32) {
    %c0_i32 = arith.constant 0 : i32
    %c0_i32_0 = arith.constant 0 : i32
    %c0_i32_1 = arith.constant 0 : i32
    %c0_i32_2 = arith.constant 0 : i32
    return %c0_i32, %c0_i32_0, %c0_i32_1 : i32, i32, i32
  }
  func.func @transform_2(%arg0: i32) -> (i32, i32, i32) {
    %c0_i32 = arith.constant 0 : i32
    %c0_i32_0 = arith.constant 0 : i32
    %c0_i32_1 = arith.constant 0 : i32
    %c0_i32_2 = arith.constant 0 : i32
    return %c0_i32, %c0_i32_0, %c0_i32_1 : i32, i32, i32
  }
  func.func @transform_3(%arg0: i32) -> (i32, i32) {
    %c0_i32 = arith.constant 0 : i32
    %c0_i32_0 = arith.constant 0 : i32
    %c0_i32_1 = arith.constant 0 : i32
    return %c0_i32, %c0_i32_0 : i32, i32
  }
  func.func @transform_4(%arg0: i32) -> (i32, i32) {
    %c0_i32 = arith.constant 0 : i32
    %c0_i32_0 = arith.constant 0 : i32
    %c0_i32_1 = arith.constant 0 : i32
    return %c0_i32, %c0_i32_0 : i32, i32
  }
  func.func @transform_5(%arg0: i32) -> (i32, i32) {
    %c0_i32 = arith.constant 0 : i32
    %c0_i32_0 = arith.constant 0 : i32
    %c0_i32_1 = arith.constant 0 : i32
    return %c0_i32, %c0_i32_0 : i32, i32
  }
  func.func @transform_6(%arg0: i32) -> (i32, i32, i32) {
    %c0_i32 = arith.constant 0 : i32
    %c0_i32_0 = arith.constant 0 : i32
    %c0_i32_1 = arith.constant 0 : i32
    %c0_i32_2 = arith.constant 0 : i32
    return %c0_i32, %c0_i32_0, %c0_i32_1 : i32, i32, i32
  }
  func.func @transform_7(%arg0: i32) -> (i32, i32) {
    %c0_i32 = arith.constant 0 : i32
    %c0_i32_0 = arith.constant 0 : i32
    %c0_i32_1 = arith.constant 0 : i32
    return %c0_i32, %c0_i32_0 : i32, i32
  }
  func.func @transform_8(%arg0: i32) -> (i32, i32, i32) {
    %c0_i32 = arith.constant 0 : i32
    %c0_i32_0 = arith.constant 0 : i32
    %c0_i32_1 = arith.constant 0 : i32
    %c0_i32_2 = arith.constant 0 : i32
    return %c0_i32, %c0_i32_0, %c0_i32_1 : i32, i32, i32
  }
  func.func @transform_9(%arg0: i32) -> (i32, i32) {
    %c0_i32 = arith.constant 0 : i32
    %c0_i32_0 = arith.constant 0 : i32
    %c0_i32_1 = arith.constant 0 : i32
    return %c0_i32, %c0_i32_0 : i32, i32
  }
  func.func @transform_10(%arg0: i32) -> (i32, i32, i32) {
    %c0_i32 = arith.constant 0 : i32
    %c0_i32_0 = arith.constant 0 : i32
    %c0_i32_1 = arith.constant 0 : i32
    return %arg0, %c0_i32, %c0_i32_0 : i32, i32, i32
  }
}

</mosaic_0001>

<llo_original>
// kernel: outer_block_forward.1
$region0: #{outer_block_forward.1}
  #allocation0 [shape = 'u32[]', space=smem, size = 0x4, offset = 0x4, fixed_abs, tag = 'smem constant byte address 0x4 - core index']
  #allocation1 [shape = 'u32[144,128]{1,0:T(1,128)}', space=vmem, size = 0x12000, scoped, tag = 'internal scratch']
  %s0 = inlined_call_operand.vmem [shape: f32[2,4,256], index: 0, kind: input, shape index: {}]
  %s1 = inlined_call_operand.vmem [shape: bf16[9,1,256], index: 1, kind: input, shape index: {}]
  %s2 = inlined_call_operand.vmem [shape: bf16[9,8,4], index: 2, kind: input, shape index: {}]
  %s3 = inlined_call_operand.vmem [shape: f32[8,1], index: 3, kind: input, shape index: {}]
  %s4 = inlined_call_operand.vmem [shape: bf16[8,4], index: 4, kind: input, shape index: {}]
  %s5 = inlined_call_operand.vmem [shape: f32[8,1], index: 5, kind: input, shape index: {}]
  %s6 = inlined_call_operand.vmem [shape: bf16[9,8,8], index: 6, kind: input, shape index: {}]
  %s7 = inlined_call_operand.vmem [shape: f32[8,1], index: 7, kind: input, shape index: {}]
  %s8 = inlined_call_operand.vmem [shape: bf16[9,8,8], index: 8, kind: input, shape index: {}]
  %s9 = inlined_call_operand.vmem [shape: f32[8,1], index: 9, kind: input, shape index: {}]
  %s10 = inlined_call_operand.vmem [shape: f32[2,8,256], index: 10, kind: output, shape index: {}]
  %s11 = sld [smem:[#allocation0]]
  $region73: #{outer_block_forward.1} parent=0
    _
  %s13 = ssub.s32 1, %s11
  %s14 = scalar_select 0, %s13, %s11
  loop: start=0, step=1, limit=4
  $region2: #{outer_block_forward.1} parent=0 // loop_pre_header
    _
  $region3: #{outer_block_forward.1} parent=0 // loop_header
    %s16 = sphi 0, %s20
    %p17 = scmp.ge.s32.totalorder %s16, 4
    %s26 = sphi 0, %s28
    %s29 = sphi 0, %s26
    %s30 = sphi 0, %s29
    %s46 = sphi 0, %s30
    %s50 = sphi 0, %s50
    %s52 = sphi 0, %s50
    %s53 = sphi 0, %s52
    %s67 = sphi 0, %s53
    %s71 = sphi 0, %s71
    %s73 = sphi 0, %s71
    %s74 = sphi 0, %s73
    %s88 = sphi 0, %s74
    %s92 = sphi 0, %s92
    %s94 = sphi 0, %s92
    %s95 = sphi 0, %s94
    %s109 = sphi 0, %s95
    %s113 = sphi 0, %s113
    %s115 = sphi 0, %s113
    %s116 = sphi 0, %s115
    %s130 = sphi 0, %s116
    %s134 = sphi 0, %s134
    %s136 = sphi 0, %s134
    %s137 = sphi 0, %s136
    %s151 = sphi 0, %s137
    %s155 = sphi 0, %s155
    %s157 = sphi 0, %s155
    %s158 = sphi 0, %s157
    %s172 = sphi 0, %s158
    %s176 = sphi 0, %s176
    %s178 = sphi 0, %s176
    %s179 = sphi 0, %s178
    %s193 = sphi 0, %s179
    %s197 = sphi 0, %s197
    %s199 = sphi 0, %s197
    %s200 = sphi 0, %s199
    %s214 = sphi 0, %s200
    %s218 = sphi 0, %s218
    %s220 = sphi 0, %s218
    %s221 = sphi 0, %s220
    %s235 = sphi 0, %s221
    %s241 = sphi 0, %s243
    %s244 = sphi 0, %s241
    %s245 = sphi 0, %s244
    %s261 = sphi 0, %s245
  $region4: #{outer_block_forward.1} parent=0 // loop_header_branch
    %19 = sbr.rel (%p17) target = $region8
  $region5: #{outer_block_forward.1} parent=0 // loop_body
    %s21 = ssub.s32 %s16, 1
    %s22 = ssub.s32 %s16, 2
    %s23 = sadd.s32 %s16, 1
    %s24 = ssub.s32 %s16, %s23
    %p25 = scmp.eq.s32.totalorder %s24, 0
    %s27 = sadd.s32 %s26, 1
    %s28 = scalar_select %p25, %s26, %s27
    %p31 = pneg %p25
    %p32 = scmp.eq.s32.totalorder %s16, 1
    %p33 = por %p31, %p32
    %p34 = scmp.ne.s32.totalorder %s26, %s29
    %p35 = scmp.eq.s32.totalorder %s16, 0
    %p36 = por %p34, %p35
    %p37 = scmp.ne.s32.totalorder %s26, %s29
    %p38 = scmp.eq.s32.totalorder %s21, 1
    %p39 = por %p37, %p38
    %p40 = scmp.ne.s32.totalorder %s29, %s30
    %p41 = scmp.eq.s32.totalorder %s21, 0
    %p42 = por %p40, %p41
    %p43 = scmp.ne.s32.totalorder %s29, %s30
    %p44 = scmp.eq.s32.totalorder %s22, 1
    %p45 = por %p43, %p44
    %p47 = scmp.ne.s32.totalorder %s30, %s46
    %p48 = scmp.eq.s32.totalorder %s22, 0
    %p49 = por %p47, %p48
    %s51 = sadd.s32 %s50, 1
    %p54 = scmp.eq.s32.totalorder %s16, 1
    %p55 = scmp.ne.s32.totalorder %s50, %s52
    %p56 = scmp.eq.s32.totalorder %s16, 0
    %p57 = por %p55, %p56
    %p58 = scmp.ne.s32.totalorder %s50, %s52
    %p59 = scmp.eq.s32.totalorder %s21, 1
    %p60 = por %p58, %p59
    %p61 = scmp.ne.s32.totalorder %s52, %s53
    %p62 = scmp.eq.s32.totalorder %s21, 0
    %p63 = por %p61, %p62
    %p64 = scmp.ne.s32.totalorder %s52, %s53
    %p65 = scmp.eq.s32.totalorder %s22, 1
    %p66 = por %p64, %p65
    %p68 = scmp.ne.s32.totalorder %s53, %s67
    %p69 = scmp.eq.s32.totalorder %s22, 0
    %p70 = por %p68, %p69
    %s72 = sadd.s32 %s71, 1
    %p75 = scmp.eq.s32.totalorder %s16, 1
    %p76 = scmp.ne.s32.totalorder %s71, %s73
    %p77 = scmp.eq.s32.totalorder %s16, 0
    %p78 = por %p76, %p77
    %p79 = scmp.ne.s32.totalorder %s71, %s73
    %p80 = scmp.eq.s32.totalorder %s21, 1
    %p81 = por %p79, %p80
    %p82 = scmp.ne.s32.totalorder %s73, %s74
    %p83 = scmp.eq.s32.totalorder %s21, 0
    %p84 = por %p82, %p83
    %p85 = scmp.ne.s32.totalorder %s73, %s74
    %p86 = scmp.eq.s32.totalorder %s22, 1
    %p87 = por %p85, %p86
    %p89 = scmp.ne.s32.totalorder %s74, %s88
    %p90 = scmp.eq.s32.totalorder %s22, 0
    %p91 = por %p89, %p90
    %s93 = sadd.s32 %s92, 1
    %p96 = scmp.eq.s32.totalorder %s16, 1
    %p97 = scmp.ne.s32.totalorder %s92, %s94
    %p98 = scmp.eq.s32.totalorder %s16, 0
    %p99 = por %p97, %p98
    %p100 = scmp.ne.s32.totalorder %s92, %s94
    %p101 = scmp.eq.s32.totalorder %s21, 1
    %p102 = por %p100, %p101
    %p103 = scmp.ne.s32.totalorder %s94, %s95
    %p104 = scmp.eq.s32.totalorder %s21, 0
    %p105 = por %p103, %p104
    %p106 = scmp.ne.s32.totalorder %s94, %s95
    %p107 = scmp.eq.s32.totalorder %s22, 1
    %p108 = por %p106, %p107
    %p110 = scmp.ne.s32.totalorder %s95, %s109
    %p111 = scmp.eq.s32.totalorder %s22, 0
    %p112 = por %p110, %p111
    %s114 = sadd.s32 %s113, 1
    %p117 = scmp.eq.s32.totalorder %s16, 1
    %p118 = scmp.ne.s32.totalorder %s113, %s115
    %p119 = scmp.eq.s32.totalorder %s16, 0
    %p120 = por %p118, %p119
    %p121 = scmp.ne.s32.totalorder %s113, %s115
    %p122 = scmp.eq.s32.totalorder %s21, 1
    %p123 = por %p121, %p122
    %p124 = scmp.ne.s32.totalorder %s115, %s116
    %p125 = scmp.eq.s32.totalorder %s21, 0
    %p126 = por %p124, %p125
    %p127 = scmp.ne.s32.totalorder %s115, %s116
    %p128 = scmp.eq.s32.totalorder %s22, 1
    %p129 = por %p127, %p128
    %p131 = scmp.ne.s32.totalorder %s116, %s130
    %p132 = scmp.eq.s32.totalorder %s22, 0
    %p133 = por %p131, %p132
    %s135 = sadd.s32 %s134, 1
    %p138 = scmp.eq.s32.totalorder %s16, 1
    %p139 = scmp.ne.s32.totalorder %s134, %s136
    %p140 = scmp.eq.s32.totalorder %s16, 0
    %p141 = por %p139, %p140
    %p142 = scmp.ne.s32.totalorder %s134, %s136
    %p143 = scmp.eq.s32.totalorder %s21, 1
    %p144 = por %p142, %p143
    %p145 = scmp.ne.s32.totalorder %s136, %s137
    %p146 = scmp.eq.s32.totalorder %s21, 0
    %p147 = por %p145, %p146
    %p148 = scmp.ne.s32.totalorder %s136, %s137
    %p149 = scmp.eq.s32.totalorder %s22, 1
    %p150 = por %p148, %p149
    %p152 = scmp.ne.s32.totalorder %s137, %s151
    %p153 = scmp.eq.s32.totalorder %s22, 0
    %p154 = por %p152, %p153
    %s156 = sadd.s32 %s155, 1
    %p159 = scmp.eq.s32.totalorder %s16, 1
    %p160 = scmp.ne.s32.totalorder %s155, %s157
    %p161 = scmp.eq.s32.totalorder %s16, 0
    %p162 = por %p160, %p161
    %p163 = scmp.ne.s32.totalorder %s155, %s157
    %p164 = scmp.eq.s32.totalorder %s21, 1
    %p165 = por %p163, %p164
    %p166 = scmp.ne.s32.totalorder %s157, %s158
    %p167 = scmp.eq.s32.totalorder %s21, 0
    %p168 = por %p166, %p167
    %p169 = scmp.ne.s32.totalorder %s157, %s158
    %p170 = scmp.eq.s32.totalorder %s22, 1
    %p171 = por %p169, %p170
    %p173 = scmp.ne.s32.totalorder %s158, %s172
    %p174 = scmp.eq.s32.totalorder %s22, 0
    %p175 = por %p173, %p174
    %s177 = sadd.s32 %s176, 1
    %p180 = scmp.eq.s32.totalorder %s16, 1
    %p181 = scmp.ne.s32.totalorder %s176, %s178
    %p182 = scmp.eq.s32.totalorder %s16, 0
    %p183 = por %p181, %p182
    %p184 = scmp.ne.s32.totalorder %s176, %s178
    %p185 = scmp.eq.s32.totalorder %s21, 1
    %p186 = por %p184, %p185
    %p187 = scmp.ne.s32.totalorder %s178, %s179
    %p188 = scmp.eq.s32.totalorder %s21, 0
    %p189 = por %p187, %p188
    %p190 = scmp.ne.s32.totalorder %s178, %s179
    %p191 = scmp.eq.s32.totalorder %s22, 1
    %p192 = por %p190, %p191
    %p194 = scmp.ne.s32.totalorder %s179, %s193
    %p195 = scmp.eq.s32.totalorder %s22, 0
    %p196 = por %p194, %p195
    %s198 = sadd.s32 %s197, 1
    %p201 = scmp.eq.s32.totalorder %s16, 1
    %p202 = scmp.ne.s32.totalorder %s197, %s199
    %p203 = scmp.eq.s32.totalorder %s16, 0
    %p204 = por %p202, %p203
    %p205 = scmp.ne.s32.totalorder %s197, %s199
    %p206 = scmp.eq.s32.totalorder %s21, 1
    %p207 = por %p205, %p206
    %p208 = scmp.ne.s32.totalorder %s199, %s200
    %p209 = scmp.eq.s32.totalorder %s21, 0
    %p210 = por %p208, %p209
    %p211 = scmp.ne.s32.totalorder %s199, %s200
    %p212 = scmp.eq.s32.totalorder %s22, 1
    %p213 = por %p211, %p212
    %p215 = scmp.ne.s32.totalorder %s200, %s214
    %p216 = scmp.eq.s32.totalorder %s22, 0
    %p217 = por %p215, %p216
    %s219 = sadd.s32 %s218, 1
    %p222 = scmp.eq.s32.totalorder %s16, 1
    %p223 = scmp.ne.s32.totalorder %s218, %s220
    %p224 = scmp.eq.s32.totalorder %s16, 0
    %p225 = por %p223, %p224
    %p226 = scmp.ne.s32.totalorder %s218, %s220
    %p227 = scmp.eq.s32.totalorder %s21, 1
    %p228 = por %p226, %p227
    %p229 = scmp.ne.s32.totalorder %s220, %s221
    %p230 = scmp.eq.s32.totalorder %s21, 0
    %p231 = por %p229, %p230
    %p232 = scmp.ne.s32.totalorder %s220, %s221
    %p233 = scmp.eq.s32.totalorder %s22, 1
    %p234 = por %p232, %p233
    %p236 = scmp.ne.s32.totalorder %s221, %s235
    %p237 = scmp.eq.s32.totalorder %s22, 0
    %p238 = por %p236, %p237
    %s239 = ssub.s32 %s16, %s23
    %p240 = scmp.eq.s32.totalorder %s239, 0
    %s242 = sadd.s32 %s241, 1
    %s243 = scalar_select %p240, %s241, %s242
    %p246 = pneg %p240
    %p247 = scmp.eq.s32.totalorder %s16, 1
    %p248 = por %p246, %p247
    %p249 = scmp.ne.s32.totalorder %s241, %s244
    %p250 = scmp.eq.s32.totalorder %s16, 0
    %p251 = por %p249, %p250
    %p252 = scmp.ne.s32.totalorder %s241, %s244
    %p253 = scmp.eq.s32.totalorder %s21, 1
    %p254 = por %p252, %p253
    %p255 = scmp.ne.s32.totalorder %s244, %s245
    %p256 = scmp.eq.s32.totalorder %s21, 0
    %p257 = por %p255, %p256
    %p258 = scmp.ne.s32.totalorder %s244, %s245
    %p259 = scmp.eq.s32.totalorder %s22, 1
    %p260 = por %p258, %p259
    %p262 = scmp.ne.s32.totalorder %s245, %s261
    %p263 = scmp.eq.s32.totalorder %s22, 0
    %p264 = por %p262, %p263
    %p265 = scmp.le.s32.totalorder 1, %s16
    %p266 = scmp.lt.s32.totalorder %s16, 3
    %p267 = pnand %p265, %p266
    %p268 = pneg %p267
    // Predicated region
    $region9: #{outer_block_forward.1} parent=5 // pred_check
      _
    $region10: #{outer_block_forward.1} parent=5 // pred_check_branch
      %270 = sbr.rel (%p267) target = $region12
    $region11: #{outer_block_forward.1} parent=5 // pred_region
      %s271 = ssub.s32 %s16, 1
      // Predicated region
      $region13: #{outer_block_forward.1} parent=11 // pred_check
        %p272 = pneg %p63
      $region14: #{outer_block_forward.1} parent=11 // pred_check_branch
        %274 = sbr.rel (%p272) target = $region16
      $region15: #{outer_block_forward.1} parent=11 // pred_region
        _
      $region16: #{outer_block_forward.1} parent=11 // pred_fallthru
        _
      // Predicated region
      $region17: #{outer_block_forward.1} parent=11 // pred_check
        %p275 = pneg %p84
      $region18: #{outer_block_forward.1} parent=11 // pred_check_branch
        %277 = sbr.rel (%p275) target = $region20
      $region19: #{outer_block_forward.1} parent=11 // pred_region
        _
      $region20: #{outer_block_forward.1} parent=11 // pred_fallthru
        _
      // Predicated region
      $region21: #{outer_block_forward.1} parent=11 // pred_check
        %p278 = pneg %p105
      $region22: #{outer_block_forward.1} parent=11 // pred_check_branch
        %280 = sbr.rel (%p278) target = $region24
      $region23: #{outer_block_forward.1} parent=11 // pred_region
        _
      $region24: #{outer_block_forward.1} parent=11 // pred_fallthru
        _
      // Predicated region
      $region25: #{outer_block_forward.1} parent=11 // pred_check
        %p281 = pneg %p126
      $region26: #{outer_block_forward.1} parent=11 // pred_check_branch
        %283 = sbr.rel (%p281) target = $region28
      $region27: #{outer_block_forward.1} parent=11 // pred_region
        _
      $region28: #{outer_block_forward.1} parent=11 // pred_fallthru
        _
      // Predicated region
      $region29: #{outer_block_forward.1} parent=11 // pred_check
        %p284 = pneg %p147
      $region30: #{outer_block_forward.1} parent=11 // pred_check_branch
        %286 = sbr.rel (%p284) target = $region32
      $region31: #{outer_block_forward.1} parent=11 // pred_region
        _
      $region32: #{outer_block_forward.1} parent=11 // pred_fallthru
        _
      // Predicated region
      $region33: #{outer_block_forward.1} parent=11 // pred_check
        %p287 = pneg %p168
      $region34: #{outer_block_forward.1} parent=11 // pred_check_branch
        %289 = sbr.rel (%p287) target = $region36
      $region35: #{outer_block_forward.1} parent=11 // pred_region
        _
      $region36: #{outer_block_forward.1} parent=11 // pred_fallthru
        _
      // Predicated region
      $region37: #{outer_block_forward.1} parent=11 // pred_check
        %p290 = pneg %p189
      $region38: #{outer_block_forward.1} parent=11 // pred_check_branch
        %292 = sbr.rel (%p290) target = $region40
      $region39: #{outer_block_forward.1} parent=11 // pred_region
        _
      $region40: #{outer_block_forward.1} parent=11 // pred_fallthru
        _
      // Predicated region
      $region41: #{outer_block_forward.1} parent=11 // pred_check
        %p293 = pneg %p210
      $region42: #{outer_block_forward.1} parent=11 // pred_check_branch
        %295 = sbr.rel (%p293) target = $region44
      $region43: #{outer_block_forward.1} parent=11 // pred_region
        _
      $region44: #{outer_block_forward.1} parent=11 // pred_fallthru
        _
      // Predicated region
      $region45: #{outer_block_forward.1} parent=11 // pred_check
        %p296 = pneg %p231
      $region46: #{outer_block_forward.1} parent=11 // pred_check_branch
        %298 = sbr.rel (%p296) target = $region48
      $region47: #{outer_block_forward.1} parent=11 // pred_region
        _
      $region48: #{outer_block_forward.1} parent=11 // pred_fallthru
        _
    $region12: #{outer_block_forward.1} parent=5 // pred_fallthru
      _
    %p299 = scmp.lt.s32.totalorder %s16, 2
    // Predicated region
    $region49: #{outer_block_forward.1} parent=5 // pred_check
      %p300 = pneg %p299
    $region50: #{outer_block_forward.1} parent=5 // pred_check_branch
      %302 = sbr.rel (%p300) target = $region52
    $region51: #{outer_block_forward.1} parent=5 // pred_region
      // Predicated region
      $region53: #{outer_block_forward.1} parent=51 // pred_check
        %p303 = pneg %p36
      $region54: #{outer_block_forward.1} parent=51 // pred_check_branch
        %305 = sbr.rel (%p303) target = $region56
      $region55: #{outer_block_forward.1} parent=51 // pred_region
        %p306 = scmp.lt.s32.totalorder %s16, 1
        %s307 = scalar_select %p306, %s16, 1
        %s308 = smul.addr %s307, 2
        %s309 = smul.addr %s308, 4
        %s310 = scalar_lea.vmem %s0, %s309
      $region56: #{outer_block_forward.1} parent=51 // pred_fallthru
        _
    $region52: #{outer_block_forward.1} parent=5 // pred_fallthru
      _
    %p311 = scmp.le.s32.totalorder 1, %s16
    %p312 = scmp.lt.s32.totalorder %s16, 3
    %p313 = pnand %p311, %p312
    %p314 = pneg %p313
    // Predicated region
    $region57: #{outer_block_forward.1} parent=5 // pred_check
      _
    $region58: #{outer_block_forward.1} parent=5 // pred_check_branch
      %316 = sbr.rel (%p313) target = $region60
    $region59: #{outer_block_forward.1} parent=5 // pred_region
      %s317 = ssub.s32 %s16, 1
      %p318 = scmp.lt.s32.totalorder %s21, 1
      %s319 = scalar_select %p318, %s21, 1
      %s320 = smul.addr %s319, 2
      %s321 = smul.addr %s320, 4
      %s322 = scalar_lea.vmem %s0, %s321
      %p323 = pneg %p42
      %p324 = pneg %p39
      %p325 = pneg %p63
      %p326 = pneg %p60
      %p327 = pneg %p84
      %p328 = pneg %p81
      %p329 = pneg %p105
      %p330 = pneg %p102
      %p331 = pneg %p126
      %p332 = pneg %p123
      %p333 = pneg %p147
      %p334 = pneg %p144
      %p335 = pneg %p168
      %p336 = pneg %p165
      %p337 = pneg %p189
      %p338 = pneg %p186
      %p339 = pneg %p210
      %p340 = pneg %p207
      %p341 = pneg %p231
      %p342 = pneg %p228
      %p343 = pneg %p257
      %p344 = pneg %p254
      %p345 = scmp.lt.s32.totalorder %s21, 1
      %s346 = scalar_select %p345, %s21, 1
      %s347 = smul.addr %s346, 2
      %s348 = smul.addr %s347, 8
      %s349 = scalar_lea.vmem %s10, %s348
      %p350 = scmp.lt.s32.totalorder %s21, 1
      %s351 = scalar_select %p350, %s21, 1
      %s352 = smul.addr %s351, 2
      %s353 = smul.addr %s352, 4
      %s354 = scalar_lea.vmem %s0, %s353
      %p355 = scmp.lt.s32.totalorder %s21, 1
      %s356 = scalar_select %p355, %s21, 1
      %s357 = smul.addr %s356, 2
      %s358 = smul.addr %s357, 8
      %s359 = scalar_lea.vmem %s10, %s358
      %v361 = vld [vmem:[%s354] sm:$0xff]
      %v363 = vcombine.high %v361, %v361
      %v365 = vpack.c.bf16 %v361, %v361
      %v366 = vpack.c.bf16 %v363, %v363
      %v367 = vld [vmem:[%s4] sm:$0xf]
      %v368 = vld [vmem:[%s5] sm:$0xff]
      %370 = vset.pattern.permute.xlu0 0
      %371 = vperm.xlu0 %370, %v368
      %v372 = vpop.permute.xlu0 %371
      %vm374 = vcmask 31744
      %v376 = vsel %vm374, %v367, 0
      %vm378 = vcmask 1041408
      %v380 = vsel %vm378, %v365, 0
      %v383 = vsel %vm378, %v366, 0
      %385 = vmatprep.subr.bf16.mxu0 %v383
      %386 = vmatpush1.bf16.msra.mxu0 %v380
      %387 = vmatprep.subr.bf16.mxu0 0
      %388 = vmatpush1.bf16.msra.mxu0 0
      %389 = vmatprep.subr.bf16.mxu0 0
      %390 = vmatpush1.bf16.msra.mxu0 0
      %391 = vmatprep.subr.bf16.mxu0 0
      %392 = vmatpush1.bf16.msra.mxu0 0
      %393 = vmatprep.subr.bf16.mxu0 0
      %394 = vmatpush1.bf16.msra.mxu0 0
      %395 = vmatprep.subr.bf16.mxu0 0
      %396 = vmatpush1.bf16.msra.mxu0 0
      %397 = vmatprep.subr.bf16.mxu0 0
      %398 = vmatpush1.bf16.msra.mxu0 0
      %399 = vmatprep.subr.bf16.mxu0 0
      %400 = vmatpush1.bf16.msra.mxu0 0
      %401 = vmatprep.subr.bf16.mxu0 0
      %402 = vmatpush1.bf16.msra.mxu0 0
      %403 = vmatprep.subr.bf16.mxu0 0
      %404 = vmatpush1.bf16.msra.mxu0 0
      %405 = vmatprep.subr.bf16.mxu0 0
      %406 = vmatpush1.bf16.msra.mxu0 0
      %407 = vmatprep.subr.bf16.mxu0 0
      %408 = vmatpush1.bf16.msra.mxu0 0
      %409 = vmatprep.subr.bf16.mxu0 0
      %410 = vmatpush1.bf16.msra.mxu0 0
      %411 = vmatprep.subr.bf16.mxu0 0
      %412 = vmatpush1.bf16.msra.mxu0 0
      %413 = vmatprep.subr.bf16.mxu0 0
      %414 = vmatpush1.bf16.msra.mxu0 0
      %415 = vmatprep.subr.bf16.mxu0 0
      %416 = vmatpush1.bf16.msra.mxu0 0
      %417 = vmatprep.mubr.bf16.mxu0 0
      %418 = vmatmul.mubr.bf16.gmra.mrb[0].mxu0 %v376
      %v419 = vpop.f32.mrb[0].mxu0
      %v420 = vadd.f32 %v372, %v419
      %v421 = vpop.f32.mrb[0].mxu0
      %v422 = vadd.f32 %v372, %v421
      %v423 = vpop.f32.mrb[0].mxu0
      %v424 = vpop.f32.mrb[0].mxu0
      %425 = vdwg.mxu0
      %428 = vrot.lane.b32.xlu0 %v365, 17
      %v429 = vpop.permute.xlu0 %428
      %430 = vrot.lane.b32.xlu0 %v366, 17
      %v431 = vpop.permute.xlu0 %430
      %vm432 = vcmask 138240
      %v433 = vsel %vm432, %v429, %v431
      %vm435 = vcmask 138240
      %v438 = vsel %vm435, 0, %v429
      %v440 = vld [vmem:[%s1] sm:$0x3]
      %v443 = vunpack.c.l.s4 1966171168
      %v444 = vunpack.c.0.s8 %v443
      %v445 = vlaneseq
      %v446 = vshrl.u32 %v445, 7
      %v447 = vsub.s32 %v444, %v446
      %v448 = vrot.slane %v440, %v447
      %v449 = vcombine.high %v448, %v448
      %v451 = vunpack.c.l.s4 1966171168
      %v452 = vunpack.c.0.s8 %v451
      %v453 = vlaneseq
      %v454 = vshrl.u32 %v453, 7
      %v455 = vsub.s32 %v452, %v454
      %v456 = vrot.slane %v448, %v455
      %v458 = vunpack.c.l.s4 1966171168
      %v459 = vunpack.c.0.s8 %v458
      %v460 = vlaneseq
      %v461 = vshrl.u32 %v460, 7
      %v462 = vsub.s32 %v459, %v461
      %v463 = vrot.slane %v449, %v462
      %v465 = vpack.i.b16 %v456, %v456
      %v467 = vlaneseq
      %v468 = vshrl.u32 %v467, 7
      %v469 = vsub.s32 0, %v468
      %v470 = vrot.slane %v465, %v469
      %v472 = vpack.i.b16 %v463, %v463
      %v474 = vlaneseq
      %v475 = vshrl.u32 %v474, 7
      %v476 = vsub.s32 0, %v475
      %v477 = vrot.slane %v472, %v476
      %v478 = vmul.bf16 %v438, %v470
      %v479 = vmul.bf16 %v433, %v477
      %v480 = vld [vmem:[%s2] sm:$0xf]
      %481 = vrot.lane.b32.xlu0 %v365, 16
      %v482 = vpop.permute.xlu0 %481
      %483 = vrot.lane.b32.xlu0 %v366, 16
      %v484 = vpop.permute.xlu0 %483
      %vm485 = vcmask 130048
      %v486 = vsel %vm485, %v482, %v484
      %vm488 = vcmask 130048
      %v490 = vsel %vm488, 0, %v482
      %s492 = scalar_lea.vmem %s1, 2
      %v493 = vld [vmem:[%s492] sm:$0x3]
      %v496 = vunpack.c.l.s4 1966171168
      %v497 = vunpack.c.0.s8 %v496
      %v498 = vlaneseq
      %v499 = vshrl.u32 %v498, 7
      %v500 = vsub.s32 %v497, %v499
      %v501 = vrot.slane %v493, %v500
      %v502 = vcombine.high %v501, %v501
      %v504 = vunpack.c.l.s4 1966171168
      %v505 = vunpack.c.0.s8 %v504
      %v506 = vlaneseq
      %v507 = vshrl.u32 %v506, 7
      %v508 = vsub.s32 %v505, %v507
      %v509 = vrot.slane %v501, %v508
      %v511 = vunpack.c.l.s4 1966171168
      %v512 = vunpack.c.0.s8 %v511
      %v513 = vlaneseq
      %v514 = vshrl.u32 %v513, 7
      %v515 = vsub.s32 %v512, %v514
      %v516 = vrot.slane %v502, %v515
      %v518 = vpack.i.b16 %v509, %v509
      %v520 = vlaneseq
      %v521 = vshrl.u32 %v520, 7
      %v522 = vsub.s32 0, %v521
      %v523 = vrot.slane %v518, %v522
      %v525 = vpack.i.b16 %v516, %v516
      %v527 = vlaneseq
      %v528 = vshrl.u32 %v527, 7
      %v529 = vsub.s32 0, %v528
      %v530 = vrot.slane %v525, %v529
      %v531 = vmul.bf16 %v490, %v523
      %v532 = vmul.bf16 %v486, %v530
      %s533 = scalar_lea.vmem %s2, 4
      %v534 = vld [vmem:[%s533] sm:$0xf]
      %v536 = vsel %vm374, %v534, 0
      %v539 = vsel %vm378, %v531, 0
      %v542 = vsel %vm378, %v532, 0
      %544 = vmatprep.subr.bf16.mxu0 %v542
      %545 = vmatpush1.bf16.msra.mxu0 %v539
      %546 = vmatprep.subr.bf16.mxu0 0
      %547 = vmatpush1.bf16.msra.mxu0 0
      %548 = vmatprep.subr.bf16.mxu0 0
      %549 = vmatpush1.bf16.msra.mxu0 0
      %550 = vmatprep.subr.bf16.mxu0 0
      %551 = vmatpush1.bf16.msra.mxu0 0
      %552 = vmatprep.subr.bf16.mxu0 0
      %553 = vmatpush1.bf16.msra.mxu0 0
      %554 = vmatprep.subr.bf16.mxu0 0
      %555 = vmatpush1.bf16.msra.mxu0 0
      %556 = vmatprep.subr.bf16.mxu0 0
      %557 = vmatpush1.bf16.msra.mxu0 0
      %558 = vmatprep.subr.bf16.mxu0 0
      %559 = vmatpush1.bf16.msra.mxu0 0
      %560 = vmatprep.subr.bf16.mxu0 0
      %561 = vmatpush1.bf16.msra.mxu0 0
      %562 = vmatprep.subr.bf16.mxu0 0
      %563 = vmatpush1.bf16.msra.mxu0 0
      %564 = vmatprep.subr.bf16.mxu0 0
      %565 = vmatpush1.bf16.msra.mxu0 0
      %566 = vmatprep.subr.bf16.mxu0 0
      %567 = vmatpush1.bf16.msra.mxu0 0
      %568 = vmatprep.subr.bf16.mxu0 0
      %569 = vmatpush1.bf16.msra.mxu0 0
      %570 = vmatprep.subr.bf16.mxu0 0
      %571 = vmatpush1.bf16.msra.mxu0 0
      %572 = vmatprep.subr.bf16.mxu0 0
      %573 = vmatpush1.bf16.msra.mxu0 0
      %574 = vmatprep.subr.bf16.mxu0 0
      %575 = vmatpush1.bf16.msra.mxu0 0
      %576 = vmatprep.mubr.bf16.mxu0 0
      %577 = vmatmul.mubr.bf16.gmra.mrb[0].mxu0 %v536
      %v578 = vpop.f32.mrb[0].mxu0
      %v579 = vadd.f32 0.0, %v578
      %v580 = vpop.f32.mrb[0].mxu0
      %v581 = vadd.f32 0.0, %v580
      %v582 = vpop.f32.mrb[0].mxu0
      %v583 = vpop.f32.mrb[0].mxu0
      %584 = vdwg.mxu0
      %v586 = vsel %vm374, %v480, 0
      %v589 = vsel %vm378, %v478, 0
      %v592 = vsel %vm378, %v479, 0
      %594 = vmatprep.subr.bf16.mxu0 %v592
      %595 = vmatpush1.bf16.msra.mxu0 %v589
      %596 = vmatprep.subr.bf16.mxu0 0
      %597 = vmatpush1.bf16.msra.mxu0 0
      %598 = vmatprep.subr.bf16.mxu0 0
      %599 = vmatpush1.bf16.msra.mxu0 0
      %600 = vmatprep.subr.bf16.mxu0 0
      %601 = vmatpush1.bf16.msra.mxu0 0
      %602 = vmatprep.subr.bf16.mxu0 0
      %603 = vmatpush1.bf16.msra.mxu0 0
      %604 = vmatprep.subr.bf16.mxu0 0
      %605 = vmatpush1.bf16.msra.mxu0 0
      %606 = vmatprep.subr.bf16.mxu0 0
      %607 = vmatpush1.bf16.msra.mxu0 0
      %608 = vmatprep.subr.bf16.mxu0 0
      %609 = vmatpush1.bf16.msra.mxu0 0
      %610 = vmatprep.subr.bf16.mxu0 0
      %611 = vmatpush1.bf16.msra.mxu0 0
      %612 = vmatprep.subr.bf16.mxu0 0
      %613 = vmatpush1.bf16.msra.mxu0 0
      %614 = vmatprep.subr.bf16.mxu0 0
      %615 = vmatpush1.bf16.msra.mxu0 0
      %616 = vmatprep.subr.bf16.mxu0 0
      %617 = vmatpush1.bf16.msra.mxu0 0
      %618 = vmatprep.subr.bf16.mxu0 0
      %619 = vmatpush1.bf16.msra.mxu0 0
      %620 = vmatprep.subr.bf16.mxu0 0
      %621 = vmatpush1.bf16.msra.mxu0 0
      %622 = vmatprep.subr.bf16.mxu0 0
      %623 = vmatpush1.bf16.msra.mxu0 0
      %624 = vmatprep.subr.bf16.mxu0 0
      %625 = vmatpush1.bf16.msra.mxu0 0
      %626 = vmatprep.mubr.bf16.mxu0 0
      %627 = vmatmul.mubr.bf16.gmra.mrb[0].mxu0 %v586
      %v628 = vpop.f32.mrb[0].mxu0
      %v629 = vadd.f32 %v579, %v628
      %v630 = vpop.f32.mrb[0].mxu0
      %v631 = vadd.f32 %v581, %v630
      %v632 = vpop.f32.mrb[0].mxu0
      %v633 = vpop.f32.mrb[0].mxu0
      %634 = vdwg.mxu0
      %635 = vrot.lane.b32.xlu0 %v365, 15
      %v636 = vpop.permute.xlu0 %635
      %637 = vrot.lane.b32.xlu0 %v366, 15
      %v638 = vpop.permute.xlu0 %637
      %vm639 = vcmask 121856
      %v640 = vsel %vm639, %v636, %v638
      %vm642 = vcmask 121856
      %v644 = vsel %vm642, 0, %v636
      %s646 = scalar_lea.vmem %s1, 4
      %v647 = vld [vmem:[%s646] sm:$0x3]
      %v650 = vunpack.c.l.s4 1966171168
      %v651 = vunpack.c.0.s8 %v650
      %v652 = vlaneseq
      %v653 = vshrl.u32 %v652, 7
      %v654 = vsub.s32 %v651, %v653
      %v655 = vrot.slane %v647, %v654
      %v656 = vcombine.high %v655, %v655
      %v658 = vunpack.c.l.s4 1966171168
      %v659 = vunpack.c.0.s8 %v658
      %v660 = vlaneseq
      %v661 = vshrl.u32 %v660, 7
      %v662 = vsub.s32 %v659, %v661
      %v663 = vrot.slane %v655, %v662
      %v665 = vunpack.c.l.s4 1966171168
      %v666 = vunpack.c.0.s8 %v665
      %v667 = vlaneseq
      %v668 = vshrl.u32 %v667, 7
      %v669 = vsub.s32 %v666, %v668
      %v670 = vrot.slane %v656, %v669
      %v672 = vpack.i.b16 %v663, %v663
      %v674 = vlaneseq
      %v675 = vshrl.u32 %v674, 7
      %v676 = vsub.s32 0, %v675
      %v677 = vrot.slane %v672, %v676
      %v679 = vpack.i.b16 %v670, %v670
      %v681 = vlaneseq
      %v682 = vshrl.u32 %v681, 7
      %v683 = vsub.s32 0, %v682
      %v684 = vrot.slane %v679, %v683
      %v685 = vmul.bf16 %v644, %v677
      %v686 = vmul.bf16 %v640, %v684
      %s687 = scalar_lea.vmem %s2, 8
      %v688 = vld [vmem:[%s687] sm:$0xf]
      %v690 = vsel %vm374, %v688, 0
      %v693 = vsel %vm378, %v685, 0
      %v696 = vsel %vm378, %v686, 0
      %698 = vmatprep.subr.bf16.mxu0 %v696
      %699 = vmatpush1.bf16.msra.mxu0 %v693
      %700 = vmatprep.subr.bf16.mxu0 0
      %701 = vmatpush1.bf16.msra.mxu0 0
      %702 = vmatprep.subr.bf16.mxu0 0
      %703 = vmatpush1.bf16.msra.mxu0 0
      %704 = vmatprep.subr.bf16.mxu0 0
      %705 = vmatpush1.bf16.msra.mxu0 0
      %706 = vmatprep.subr.bf16.mxu0 0
      %707 = vmatpush1.bf16.msra.mxu0 0
      %708 = vmatprep.subr.bf16.mxu0 0
      %709 = vmatpush1.bf16.msra.mxu0 0
      %710 = vmatprep.subr.bf16.mxu0 0
      %711 = vmatpush1.bf16.msra.mxu0 0
      %712 = vmatprep.subr.bf16.mxu0 0
      %713 = vmatpush1.bf16.msra.mxu0 0
      %714 = vmatprep.subr.bf16.mxu0 0
      %715 = vmatpush1.bf16.msra.mxu0 0
      %716 = vmatprep.subr.bf16.mxu0 0
      %717 = vmatpush1.bf16.msra.mxu0 0
      %718 = vmatprep.subr.bf16.mxu0 0
      %719 = vmatpush1.bf16.msra.mxu0 0
      %720 = vmatprep.subr.bf16.mxu0 0
      %721 = vmatpush1.bf16.msra.mxu0 0
      %722 = vmatprep.subr.bf16.mxu0 0
      %723 = vmatpush1.bf16.msra.mxu0 0
      %724 = vmatprep.subr.bf16.mxu0 0
      %725 = vmatpush1.bf16.msra.mxu0 0
      %726 = vmatprep.subr.bf16.mxu0 0
      %727 = vmatpush1.bf16.msra.mxu0 0
      %728 = vmatprep.subr.bf16.mxu0 0
      %729 = vmatpush1.bf16.msra.mxu0 0
      %730 = vmatprep.mubr.bf16.mxu0 0
      %731 = vmatmul.mubr.bf16.gmra.mrb[0].mxu0 %v690
      %v732 = vpop.f32.mrb[0].mxu0
      %v733 = vadd.f32 0.0, %v732
      %v734 = vpop.f32.mrb[0].mxu0
      %v735 = vadd.f32 0.0, %v734
      %v736 = vpop.f32.mrb[0].mxu0
      %v737 = vpop.f32.mrb[0].mxu0
      %738 = vdwg.mxu0
      %v739 = vadd.f32 %v629, %v733
      %v740 = vadd.f32 %v631, %v735
      %741 = vrot.lane.b32.xlu0 %v365, 1
      %v742 = vpop.permute.xlu0 %741
      %743 = vrot.lane.b32.xlu0 %v366, 1
      %v744 = vpop.permute.xlu0 %743
      %vm745 = vcmask 7168
      %v746 = vsel %vm745, %v742, %v744
      %vm748 = vcmask 7168
      %v750 = vsel %vm748, 0, %v742
      %s752 = scalar_lea.vmem %s1, 6
      %v753 = vld [vmem:[%s752] sm:$0x3]
      %v756 = vunpack.c.l.s4 1966171168
      %v757 = vunpack.c.0.s8 %v756
      %v758 = vlaneseq
      %v759 = vshrl.u32 %v758, 7
      %v760 = vsub.s32 %v757, %v759
      %v761 = vrot.slane %v753, %v760
      %v762 = vcombine.high %v761, %v761
      %v764 = vunpack.c.l.s4 1966171168
      %v765 = vunpack.c.0.s8 %v764
      %v766 = vlaneseq
      %v767 = vshrl.u32 %v766, 7
      %v768 = vsub.s32 %v765, %v767
      %v769 = vrot.slane %v761, %v768
      %v771 = vunpack.c.l.s4 1966171168
      %v772 = vunpack.c.0.s8 %v771
      %v773 = vlaneseq
      %v774 = vshrl.u32 %v773, 7
      %v775 = vsub.s32 %v772, %v774
      %v776 = vrot.slane %v762, %v775
      %v778 = vpack.i.b16 %v769, %v769
      %v780 = vlaneseq
      %v781 = vshrl.u32 %v780, 7
      %v782 = vsub.s32 0, %v781
      %v783 = vrot.slane %v778, %v782
      %v785 = vpack.i.b16 %v776, %v776
      %v787 = vlaneseq
      %v788 = vshrl.u32 %v787, 7
      %v789 = vsub.s32 0, %v788
      %v790 = vrot.slane %v785, %v789
      %v791 = vmul.bf16 %v750, %v783
      %v792 = vmul.bf16 %v746, %v790
      %s793 = scalar_lea.vmem %s2, 12
      %v794 = vld [vmem:[%s793] sm:$0xf]
      %v796 = vsel %vm374, %v794, 0
      %v799 = vsel %vm378, %v791, 0
      %v802 = vsel %vm378, %v792, 0
      %804 = vmatprep.subr.bf16.mxu0 %v802
      %805 = vmatpush1.bf16.msra.mxu0 %v799
      %806 = vmatprep.subr.bf16.mxu0 0
      %807 = vmatpush1.bf16.msra.mxu0 0
      %808 = vmatprep.subr.bf16.mxu0 0
      %809 = vmatpush1.bf16.msra.mxu0 0
      %810 = vmatprep.subr.bf16.mxu0 0
      %811 = vmatpush1.bf16.msra.mxu0 0
      %812 = vmatprep.subr.bf16.mxu0 0
      %813 = vmatpush1.bf16.msra.mxu0 0
      %814 = vmatprep.subr.bf16.mxu0 0
      %815 = vmatpush1.bf16.msra.mxu0 0
      %816 = vmatprep.subr.bf16.mxu0 0
      %817 = vmatpush1.bf16.msra.mxu0 0
      %818 = vmatprep.subr.bf16.mxu0 0
      %819 = vmatpush1.bf16.msra.mxu0 0
      %820 = vmatprep.subr.bf16.mxu0 0
      %821 = vmatpush1.bf16.msra.mxu0 0
      %822 = vmatprep.subr.bf16.mxu0 0
      %823 = vmatpush1.bf16.msra.mxu0 0
      %824 = vmatprep.subr.bf16.mxu0 0
      %825 = vmatpush1.bf16.msra.mxu0 0
      %826 = vmatprep.subr.bf16.mxu0 0
      %827 = vmatpush1.bf16.msra.mxu0 0
      %828 = vmatprep.subr.bf16.mxu0 0
      %829 = vmatpush1.bf16.msra.mxu0 0
      %830 = vmatprep.subr.bf16.mxu0 0
      %831 = vmatpush1.bf16.msra.mxu0 0
      %832 = vmatprep.subr.bf16.mxu0 0
      %833 = vmatpush1.bf16.msra.mxu0 0
      %834 = vmatprep.subr.bf16.mxu0 0
      %835 = vmatpush1.bf16.msra.mxu0 0
      %836 = vmatprep.mubr.bf16.mxu0 0
      %837 = vmatmul.mubr.bf16.gmra.mrb[0].mxu0 %v796
      %v838 = vpop.f32.mrb[0].mxu0
      %v839 = vadd.f32 0.0, %v838
      %v840 = vpop.f32.mrb[0].mxu0
      %v841 = vadd.f32 0.0, %v840
      %v842 = vpop.f32.mrb[0].mxu0
      %v843 = vpop.f32.mrb[0].mxu0
      %844 = vdwg.mxu0
      %v845 = vadd.f32 %v739, %v839
      %v846 = vadd.f32 %v740, %v841
      %s847 = scalar_lea.vmem %s2, 16
      %v848 = vld [vmem:[%s847] sm:$0xf]
      %v850 = vsel %vm374, %v848, 0
      %852 = vmatprep.subr.bf16.mxu0 %v383
      %853 = vmatpush1.bf16.msra.mxu0 %v380
      %854 = vmatprep.subr.bf16.mxu0 0
      %855 = vmatpush1.bf16.msra.mxu0 0
      %856 = vmatprep.subr.bf16.mxu0 0
      %857 = vmatpush1.bf16.msra.mxu0 0
      %858 = vmatprep.subr.bf16.mxu0 0
      %859 = vmatpush1.bf16.msra.mxu0 0
      %860 = vmatprep.subr.bf16.mxu0 0
      %861 = vmatpush1.bf16.msra.mxu0 0
      %862 = vmatprep.subr.bf16.mxu0 0
      %863 = vmatpush1.bf16.msra.mxu0 0
      %864 = vmatprep.subr.bf16.mxu0 0
      %865 = vmatpush1.bf16.msra.mxu0 0
      %866 = vmatprep.subr.bf16.mxu0 0
      %867 = vmatpush1.bf16.msra.mxu0 0
      %868 = vmatprep.subr.bf16.mxu0 0
      %869 = vmatpush1.bf16.msra.mxu0 0
      %870 = vmatprep.subr.bf16.mxu0 0
      %871 = vmatpush1.bf16.msra.mxu0 0
      %872 = vmatprep.subr.bf16.mxu0 0
      %873 = vmatpush1.bf16.msra.mxu0 0
      %874 = vmatprep.subr.bf16.mxu0 0
      %875 = vmatpush1.bf16.msra.mxu0 0
      %876 = vmatprep.subr.bf16.mxu0 0
      %877 = vmatpush1.bf16.msra.mxu0 0
      %878 = vmatprep.subr.bf16.mxu0 0
      %879 = vmatpush1.bf16.msra.mxu0 0
      %880 = vmatprep.subr.bf16.mxu0 0
      %881 = vmatpush1.bf16.msra.mxu0 0
      %882 = vmatprep.subr.bf16.mxu0 0
      %883 = vmatpush1.bf16.msra.mxu0 0
      %884 = vmatprep.mubr.bf16.mxu0 0
      %885 = vmatmul.mubr.bf16.gmra.mrb[0].mxu0 %v850
      %v886 = vpop.f32.mrb[0].mxu0
      %v887 = vadd.f32 0.0, %v886
      %v888 = vpop.f32.mrb[0].mxu0
      %v889 = vadd.f32 0.0, %v888
      %v890 = vpop.f32.mrb[0].mxu0
      %v891 = vpop.f32.mrb[0].mxu0
      %892 = vdwg.mxu0
      %v893 = vadd.f32 %v845, %v887
      %v894 = vadd.f32 %v846, %v889
      %895 = vrot.lane.b32.xlu0 %v365, 127
      %v896 = vpop.permute.xlu0 %895
      %897 = vrot.lane.b32.xlu0 %v366, 127
      %v898 = vpop.permute.xlu0 %897
      %vm899 = vcmask 1039360
      %v900 = vsel %vm899, %v896, %v898
      %vm902 = vcmask 1039360
      %v904 = vsel %vm902, %v898, 0
      %s906 = scalar_lea.vmem %s1, 10
      %v907 = vld [vmem:[%s906] sm:$0x3]
      %v910 = vunpack.c.l.s4 1966171168
      %v911 = vunpack.c.0.s8 %v910
      %v912 = vlaneseq
      %v913 = vshrl.u32 %v912, 7
      %v914 = vsub.s32 %v911, %v913
      %v915 = vrot.slane %v907, %v914
      %v916 = vcombine.high %v915, %v915
      %v918 = vunpack.c.l.s4 1966171168
      %v919 = vunpack.c.0.s8 %v918
      %v920 = vlaneseq
      %v921 = vshrl.u32 %v920, 7
      %v922 = vsub.s32 %v919, %v921
      %v923 = vrot.slane %v915, %v922
      %v925 = vunpack.c.l.s4 1966171168
      %v926 = vunpack.c.0.s8 %v925
      %v927 = vlaneseq
      %v928 = vshrl.u32 %v927, 7
      %v929 = vsub.s32 %v926, %v928
      %v930 = vrot.slane %v916, %v929
      %v932 = vpack.i.b16 %v923, %v923
      %v934 = vlaneseq
      %v935 = vshrl.u32 %v934, 7
      %v936 = vsub.s32 0, %v935
      %v937 = vrot.slane %v932, %v936
      %v939 = vpack.i.b16 %v930, %v930
      %v941 = vlaneseq
      %v942 = vshrl.u32 %v941, 7
      %v943 = vsub.s32 0, %v942
      %v944 = vrot.slane %v939, %v943
      %v945 = vmul.bf16 %v900, %v937
      %v946 = vmul.bf16 %v904, %v944
      %s947 = scalar_lea.vmem %s2, 20
      %v948 = vld [vmem:[%s947] sm:$0xf]
      %v950 = vsel %vm374, %v948, 0
      %v953 = vsel %vm378, %v945, 0
      %v956 = vsel %vm378, %v946, 0
      %958 = vmatprep.subr.bf16.mxu0 %v956
      %959 = vmatpush1.bf16.msra.mxu0 %v953
      %960 = vmatprep.subr.bf16.mxu0 0
      %961 = vmatpush1.bf16.msra.mxu0 0
      %962 = vmatprep.subr.bf16.mxu0 0
      %963 = vmatpush1.bf16.msra.mxu0 0
      %964 = vmatprep.subr.bf16.mxu0 0
      %965 = vmatpush1.bf16.msra.mxu0 0
      %966 = vmatprep.subr.bf16.mxu0 0
      %967 = vmatpush1.bf16.msra.mxu0 0
      %968 = vmatprep.subr.bf16.mxu0 0
      %969 = vmatpush1.bf16.msra.mxu0 0
      %970 = vmatprep.subr.bf16.mxu0 0
      %971 = vmatpush1.bf16.msra.mxu0 0
      %972 = vmatprep.subr.bf16.mxu0 0
      %973 = vmatpush1.bf16.msra.mxu0 0
      %974 = vmatprep.subr.bf16.mxu0 0
      %975 = vmatpush1.bf16.msra.mxu0 0
      %976 = vmatprep.subr.bf16.mxu0 0
      %977 = vmatpush1.bf16.msra.mxu0 0
      %978 = vmatprep.subr.bf16.mxu0 0
      %979 = vmatpush1.bf16.msra.mxu0 0
      %980 = vmatprep.subr.bf16.mxu0 0
      %981 = vmatpush1.bf16.msra.mxu0 0
      %982 = vmatprep.subr.bf16.mxu0 0
      %983 = vmatpush1.bf16.msra.mxu0 0
      %984 = vmatprep.subr.bf16.mxu0 0
      %985 = vmatpush1.bf16.msra.mxu0 0
      %986 = vmatprep.subr.bf16.mxu0 0
      %987 = vmatpush1.bf16.msra.mxu0 0
      %988 = vmatprep.subr.bf16.mxu0 0
      %989 = vmatpush1.bf16.msra.mxu0 0
      %990 = vmatprep.mubr.bf16.mxu0 0
      %991 = vmatmul.mubr.bf16.gmra.mrb[0].mxu0 %v950
      %v992 = vpop.f32.mrb[0].mxu0
      %v993 = vadd.f32 0.0, %v992
      %v994 = vpop.f32.mrb[0].mxu0
      %v995 = vadd.f32 0.0, %v994
      %v996 = vpop.f32.mrb[0].mxu0
      %v997 = vpop.f32.mrb[0].mxu0
      %998 = vdwg.mxu0
      %v999 = vadd.f32 %v893, %v993
      %v1000 = vadd.f32 %v894, %v995
      %1001 = vrot.lane.b32.xlu0 %v365, 113
      %v1002 = vpop.permute.xlu0 %1001
      %1003 = vrot.lane.b32.xlu0 %v366, 113
      %v1004 = vpop.permute.xlu0 %1003
      %vm1005 = vcmask 924672
      %v1006 = vsel %vm1005, %v1002, %v1004
      %vm1008 = vcmask 924672
      %v1010 = vsel %vm1008, %v1004, 0
      %s1012 = scalar_lea.vmem %s1, 12
      %v1013 = vld [vmem:[%s1012] sm:$0x3]
      %v1016 = vunpack.c.l.s4 1966171168
      %v1017 = vunpack.c.0.s8 %v1016
      %v1018 = vlaneseq
      %v1019 = vshrl.u32 %v1018, 7
      %v1020 = vsub.s32 %v1017, %v1019
      %v1021 = vrot.slane %v1013, %v1020
      %v1022 = vcombine.high %v1021, %v1021
      %v1024 = vunpack.c.l.s4 1966171168
      %v1025 = vunpack.c.0.s8 %v1024
      %v1026 = vlaneseq
      %v1027 = vshrl.u32 %v1026, 7
      %v1028 = vsub.s32 %v1025, %v1027
      %v1029 = vrot.slane %v1021, %v1028
      %v1031 = vunpack.c.l.s4 1966171168
      %v1032 = vunpack.c.0.s8 %v1031
      %v1033 = vlaneseq
      %v1034 = vshrl.u32 %v1033, 7
      %v1035 = vsub.s32 %v1032, %v1034
      %v1036 = vrot.slane %v1022, %v1035
      %v1038 = vpack.i.b16 %v1029, %v1029
      %v1040 = vlaneseq
      %v1041 = vshrl.u32 %v1040, 7
      %v1042 = vsub.s32 0, %v1041
      %v1043 = vrot.slane %v1038, %v1042
      %v1045 = vpack.i.b16 %v1036, %v1036
      %v1047 = vlaneseq
      %v1048 = vshrl.u32 %v1047, 7
      %v1049 = vsub.s32 0, %v1048
      %v1050 = vrot.slane %v1045, %v1049
      %v1051 = vmul.bf16 %v1006, %v1043
      %v1052 = vmul.bf16 %v1010, %v1050
      %s1053 = scalar_lea.vmem %s2, 24
      %v1054 = vld [vmem:[%s1053] sm:$0xf]
      %v1056 = vsel %vm374, %v1054, 0
      %v1059 = vsel %vm378, %v1051, 0
      %v1062 = vsel %vm378, %v1052, 0
      %1064 = vmatprep.subr.bf16.mxu0 %v1062
      %1065 = vmatpush1.bf16.msra.mxu0 %v1059
      %1066 = vmatprep.subr.bf16.mxu0 0
      %1067 = vmatpush1.bf16.msra.mxu0 0
      %1068 = vmatprep.subr.bf16.mxu0 0
      %1069 = vmatpush1.bf16.msra.mxu0 0
      %1070 = vmatprep.subr.bf16.mxu0 0
      %1071 = vmatpush1.bf16.msra.mxu0 0
      %1072 = vmatprep.subr.bf16.mxu0 0
      %1073 = vmatpush1.bf16.msra.mxu0 0
      %1074 = vmatprep.subr.bf16.mxu0 0
      %1075 = vmatpush1.bf16.msra.mxu0 0
      %1076 = vmatprep.subr.bf16.mxu0 0
      %1077 = vmatpush1.bf16.msra.mxu0 0
      %1078 = vmatprep.subr.bf16.mxu0 0
      %1079 = vmatpush1.bf16.msra.mxu0 0
      %1080 = vmatprep.subr.bf16.mxu0 0
      %1081 = vmatpush1.bf16.msra.mxu0 0
      %1082 = vmatprep.subr.bf16.mxu0 0
      %1083 = vmatpush1.bf16.msra.mxu0 0
      %1084 = vmatprep.subr.bf16.mxu0 0
      %1085 = vmatpush1.bf16.msra.mxu0 0
      %1086 = vmatprep.subr.bf16.mxu0 0
      %1087 = vmatpush1.bf16.msra.mxu0 0
      %1088 = vmatprep.subr.bf16.mxu0 0
      %1089 = vmatpush1.bf16.msra.mxu0 0
      %1090 = vmatprep.subr.bf16.mxu0 0
      %1091 = vmatpush1.bf16.msra.mxu0 0
      %1092 = vmatprep.subr.bf16.mxu0 0
      %1093 = vmatpush1.bf16.msra.mxu0 0
      %1094 = vmatprep.subr.bf16.mxu0 0
      %1095 = vmatpush1.bf16.msra.mxu0 0
      %1096 = vmatprep.mubr.bf16.mxu0 0
      %1097 = vmatmul.mubr.bf16.gmra.mrb[0].mxu0 %v1056
      %v1098 = vpop.f32.mrb[0].mxu0
      %v1099 = vadd.f32 0.0, %v1098
      %v1100 = vpop.f32.mrb[0].mxu0
      %v1101 = vadd.f32 0.0, %v1100
      %v1102 = vpop.f32.mrb[0].mxu0
      %v1103 = vpop.f32.mrb[0].mxu0
      %1104 = vdwg.mxu0
      %v1105 = vadd.f32 %v999, %v1099
      %v1106 = vadd.f32 %v1000, %v1101
      %1107 = vrot.lane.b32.xlu0 %v365, 112
      %v1108 = vpop.permute.xlu0 %1107
      %1109 = vrot.lane.b32.xlu0 %v366, 112
      %v1110 = vpop.permute.xlu0 %1109
      %vm1111 = vcmask 916480
      %v1112 = vsel %vm1111, %v1108, %v1110
      %vm1114 = vcmask 916480
      %v1116 = vsel %vm1114, %v1110, 0
      %s1118 = scalar_lea.vmem %s1, 14
      %v1119 = vld [vmem:[%s1118] sm:$0x3]
      %v1122 = vunpack.c.l.s4 1966171168
      %v1123 = vunpack.c.0.s8 %v1122
      %v1124 = vlaneseq
      %v1125 = vshrl.u32 %v1124, 7
      %v1126 = vsub.s32 %v1123, %v1125
      %v1127 = vrot.slane %v1119, %v1126
      %v1128 = vcombine.high %v1127, %v1127
      %v1130 = vunpack.c.l.s4 1966171168
      %v1131 = vunpack.c.0.s8 %v1130
      %v1132 = vlaneseq
      %v1133 = vshrl.u32 %v1132, 7
      %v1134 = vsub.s32 %v1131, %v1133
      %v1135 = vrot.slane %v1127, %v1134
      %v1137 = vunpack.c.l.s4 1966171168
      %v1138 = vunpack.c.0.s8 %v1137
      %v1139 = vlaneseq
      %v1140 = vshrl.u32 %v1139, 7
      %v1141 = vsub.s32 %v1138, %v1140
      %v1142 = vrot.slane %v1128, %v1141
      %v1144 = vpack.i.b16 %v1135, %v1135
      %v1146 = vlaneseq
      %v1147 = vshrl.u32 %v1146, 7
      %v1148 = vsub.s32 0, %v1147
      %v1149 = vrot.slane %v1144, %v1148
      %v1151 = vpack.i.b16 %v1142, %v1142
      %v1153 = vlaneseq
      %v1154 = vshrl.u32 %v1153, 7
      %v1155 = vsub.s32 0, %v1154
      %v1156 = vrot.slane %v1151, %v1155
      %v1157 = vmul.bf16 %v1112, %v1149
      %v1158 = vmul.bf16 %v1116, %v1156
      %s1159 = scalar_lea.vmem %s2, 28
      %v1160 = vld [vmem:[%s1159] sm:$0xf]
      %v1162 = vsel %vm374, %v1160, 0
      %v1165 = vsel %vm378, %v1157, 0
      %v1168 = vsel %vm378, %v1158, 0
      %1170 = vmatprep.subr.bf16.mxu0 %v1168
      %1171 = vmatpush1.bf16.msra.mxu0 %v1165
      %1172 = vmatprep.subr.bf16.mxu0 0
      %1173 = vmatpush1.bf16.msra.mxu0 0
      %1174 = vmatprep.subr.bf16.mxu0 0
      %1175 = vmatpush1.bf16.msra.mxu0 0
      %1176 = vmatprep.subr.bf16.mxu0 0
      %1177 = vmatpush1.bf16.msra.mxu0 0
      %1178 = vmatprep.subr.bf16.mxu0 0
      %1179 = vmatpush1.bf16.msra.mxu0 0
      %1180 = vmatprep.subr.bf16.mxu0 0
      %1181 = vmatpush1.bf16.msra.mxu0 0
      %1182 = vmatprep.subr.bf16.mxu0 0
      %1183 = vmatpush1.bf16.msra.mxu0 0
      %1184 = vmatprep.subr.bf16.mxu0 0
      %1185 = vmatpush1.bf16.msra.mxu0 0
      %1186 = vmatprep.subr.bf16.mxu0 0
      %1187 = vmatpush1.bf16.msra.mxu0 0
      %1188 = vmatprep.subr.bf16.mxu0 0
      %1189 = vmatpush1.bf16.msra.mxu0 0
      %1190 = vmatprep.subr.bf16.mxu0 0
      %1191 = vmatpush1.bf16.msra.mxu0 0
      %1192 = vmatprep.subr.bf16.mxu0 0
      %1193 = vmatpush1.bf16.msra.mxu0 0
      %1194 = vmatprep.subr.bf16.mxu0 0
      %1195 = vmatpush1.bf16.msra.mxu0 0
      %1196 = vmatprep.subr.bf16.mxu0 0
      %1197 = vmatpush1.bf16.msra.mxu0 0
      %1198 = vmatprep.subr.bf16.mxu0 0
      %1199 = vmatpush1.bf16.msra.mxu0 0
      %1200 = vmatprep.subr.bf16.mxu0 0
      %1201 = vmatpush1.bf16.msra.mxu0 0
      %1202 = vmatprep.mubr.bf16.mxu0 0
      %1203 = vmatmul.mubr.bf16.gmra.mrb[0].mxu0 %v1162
      %v1204 = vpop.f32.mrb[0].mxu0
      %v1205 = vadd.f32 0.0, %v1204
      %v1206 = vpop.f32.mrb[0].mxu0
      %v1207 = vadd.f32 0.0, %v1206
      %v1208 = vpop.f32.mrb[0].mxu0
      %v1209 = vpop.f32.mrb[0].mxu0
      %1210 = vdwg.mxu0
      %v1211 = vadd.f32 %v1105, %v1205
      %v1212 = vadd.f32 %v1106, %v1207
      %1213 = vrot.lane.b32.xlu0 %v365, 111
      %v1214 = vpop.permute.xlu0 %1213
      %1215 = vrot.lane.b32.xlu0 %v366, 111
      %v1216 = vpop.permute.xlu0 %1215
      %vm1217 = vcmask 908288
      %v1218 = vsel %vm1217, %v1214, %v1216
      %vm1220 = vcmask 908288
      %v1222 = vsel %vm1220, %v1216, 0
      %s1224 = scalar_lea.vmem %s1, 16
      %v1225 = vld [vmem:[%s1224] sm:$0x3]
      %v1228 = vunpack.c.l.s4 1966171168
      %v1229 = vunpack.c.0.s8 %v1228
      %v1230 = vlaneseq
      %v1231 = vshrl.u32 %v1230, 7
      %v1232 = vsub.s32 %v1229, %v1231
      %v1233 = vrot.slane %v1225, %v1232
      %v1234 = vcombine.high %v1233, %v1233
      %v1236 = vunpack.c.l.s4 1966171168
      %v1237 = vunpack.c.0.s8 %v1236
      %v1238 = vlaneseq
      %v1239 = vshrl.u32 %v1238, 7
      %v1240 = vsub.s32 %v1237, %v1239
      %v1241 = vrot.slane %v1233, %v1240
      %v1243 = vunpack.c.l.s4 1966171168
      %v1244 = vunpack.c.0.s8 %v1243
      %v1245 = vlaneseq
      %v1246 = vshrl.u32 %v1245, 7
      %v1247 = vsub.s32 %v1244, %v1246
      %v1248 = vrot.slane %v1234, %v1247
      %v1250 = vpack.i.b16 %v1241, %v1241
      %v1252 = vlaneseq
      %v1253 = vshrl.u32 %v1252, 7
      %v1254 = vsub.s32 0, %v1253
      %v1255 = vrot.slane %v1250, %v1254
      %v1257 = vpack.i.b16 %v1248, %v1248
      %v1259 = vlaneseq
      %v1260 = vshrl.u32 %v1259, 7
      %v1261 = vsub.s32 0, %v1260
      %v1262 = vrot.slane %v1257, %v1261
      %v1263 = vmul.bf16 %v1218, %v1255
      %v1264 = vmul.bf16 %v1222, %v1262
      %s1265 = scalar_lea.vmem %s2, 32
      %v1266 = vld [vmem:[%s1265] sm:$0xf]
      %v1268 = vsel %vm374, %v1266, 0
      %v1271 = vsel %vm378, %v1263, 0
      %v1274 = vsel %vm378, %v1264, 0
      %1276 = vmatprep.subr.bf16.mxu0 %v1274
      %1277 = vmatpush1.bf16.msra.mxu0 %v1271
      %1278 = vmatprep.subr.bf16.mxu0 0
      %1279 = vmatpush1.bf16.msra.mxu0 0
      %1280 = vmatprep.subr.bf16.mxu0 0
      %1281 = vmatpush1.bf16.msra.mxu0 0
      %1282 = vmatprep.subr.bf16.mxu0 0
      %1283 = vmatpush1.bf16.msra.mxu0 0
      %1284 = vmatprep.subr.bf16.mxu0 0
      %1285 = vmatpush1.bf16.msra.mxu0 0
      %1286 = vmatprep.subr.bf16.mxu0 0
      %1287 = vmatpush1.bf16.msra.mxu0 0
      %1288 = vmatprep.subr.bf16.mxu0 0
      %1289 = vmatpush1.bf16.msra.mxu0 0
      %1290 = vmatprep.subr.bf16.mxu0 0
      %1291 = vmatpush1.bf16.msra.mxu0 0
      %1292 = vmatprep.subr.bf16.mxu0 0
      %1293 = vmatpush1.bf16.msra.mxu0 0
      %1294 = vmatprep.subr.bf16.mxu0 0
      %1295 = vmatpush1.bf16.msra.mxu0 0
      %1296 = vmatprep.subr.bf16.mxu0 0
      %1297 = vmatpush1.bf16.msra.mxu0 0
      %1298 = vmatprep.subr.bf16.mxu0 0
      %1299 = vmatpush1.bf16.msra.mxu0 0
      %1300 = vmatprep.subr.bf16.mxu0 0
      %1301 = vmatpush1.bf16.msra.mxu0 0
      %1302 = vmatprep.subr.bf16.mxu0 0
      %1303 = vmatpush1.bf16.msra.mxu0 0
      %1304 = vmatprep.subr.bf16.mxu0 0
      %1305 = vmatpush1.bf16.msra.mxu0 0
      %1306 = vmatprep.subr.bf16.mxu0 0
      %1307 = vmatpush1.bf16.msra.mxu0 0
      %1308 = vmatprep.mubr.bf16.mxu0 0
      %1309 = vmatmul.mubr.bf16.gmra.mrb[0].mxu0 %v1268
      %v1310 = vpop.f32.mrb[0].mxu0
      %v1311 = vadd.f32 0.0, %v1310
      %v1312 = vpop.f32.mrb[0].mxu0
      %v1313 = vadd.f32 0.0, %v1312
      %v1314 = vpop.f32.mrb[0].mxu0
      %v1315 = vpop.f32.mrb[0].mxu0
      %1316 = vdwg.mxu0
      %v1317 = vadd.f32 %v1211, %v1311
      %v1318 = vadd.f32 %v1212, %v1313
      %v1319 = vld [vmem:[%s3] sm:$0xff]
      %1321 = vset.pattern.permute.xlu0 0
      %1322 = vperm.xlu0 %1321, %v1319
      %v1323 = vpop.permute.xlu0 %1322
      %v1325 = vadd.f32 %v1317, %v1323
      %v1326 = vadd.f32 %v1318, %v1323
      %v1327 = vadd.f32 %v1325, %v420
      %v1328 = vadd.f32 %v1326, %v422
      %v1329 = vmax.f32 %v1327, 0.0
      %v1330 = vmax.f32 %v1328, 0.0
      %v1331 = vpack.c.bf16 %v1329, %v1329
      %v1332 = vpack.c.bf16 %v1330, %v1330
      %1335 = vrot.lane.b32.xlu0 %v1331, 17
      %v1336 = vpop.permute.xlu0 %1335
      %1337 = vrot.lane.b32.xlu0 %v1332, 17
      %v1338 = vpop.permute.xlu0 %1337
      %v1339 = vsel %vm432, %v1336, %v1338
      %v1342 = vsel %vm435, 0, %v1336
      %v1344 = vmul.bf16 %v1342, %v470
      %v1345 = vmul.bf16 %v1339, %v477
      %v1346 = vld [vmem:[%s6] sm:$0xf]
      %1347 = vrot.lane.b32.xlu0 %v1331, 16
      %v1348 = vpop.permute.xlu0 %1347
      %1349 = vrot.lane.b32.xlu0 %v1332, 16
      %v1350 = vpop.permute.xlu0 %1349
      %v1351 = vsel %vm485, %v1348, %v1350
      %v1354 = vsel %vm488, 0, %v1348
      %v1356 = vmul.bf16 %v1354, %v523
      %v1357 = vmul.bf16 %v1351, %v530
      %s1358 = scalar_lea.vmem %s6, 4
      %v1359 = vld [vmem:[%s1358] sm:$0xf]
      %vm1360 = vcmask 64512
      %v1362 = vsel %vm1360, %v1359, 0
      %vm1364 = vcmask 1043456
      %v1366 = vsel %vm1364, %v1356, 0
      %v1369 = vsel %vm1364, %v1357, 0
      %1371 = vmatprep.subr.bf16.mxu0 %v1369
      %1372 = vmatpush1.bf16.msra.mxu0 %v1366
      %1373 = vmatprep.subr.bf16.mxu0 0
      %1374 = vmatpush1.bf16.msra.mxu0 0
      %1375 = vmatprep.subr.bf16.mxu0 0
      %1376 = vmatpush1.bf16.msra.mxu0 0
      %1377 = vmatprep.subr.bf16.mxu0 0
      %1378 = vmatpush1.bf16.msra.mxu0 0
      %1379 = vmatprep.subr.bf16.mxu0 0
      %1380 = vmatpush1.bf16.msra.mxu0 0
      %1381 = vmatprep.subr.bf16.mxu0 0
      %1382 = vmatpush1.bf16.msra.mxu0 0
      %1383 = vmatprep.subr.bf16.mxu0 0
      %1384 = vmatpush1.bf16.msra.mxu0 0
      %1385 = vmatprep.subr.bf16.mxu0 0
      %1386 = vmatpush1.bf16.msra.mxu0 0
      %1387 = vmatprep.subr.bf16.mxu0 0
      %1388 = vmatpush1.bf16.msra.mxu0 0
      %1389 = vmatprep.subr.bf16.mxu0 0
      %1390 = vmatpush1.bf16.msra.mxu0 0
      %1391 = vmatprep.subr.bf16.mxu0 0
      %1392 = vmatpush1.bf16.msra.mxu0 0
      %1393 = vmatprep.subr.bf16.mxu0 0
      %1394 = vmatpush1.bf16.msra.mxu0 0
      %1395 = vmatprep.subr.bf16.mxu0 0
      %1396 = vmatpush1.bf16.msra.mxu0 0
      %1397 = vmatprep.subr.bf16.mxu0 0
      %1398 = vmatpush1.bf16.msra.mxu0 0
      %1399 = vmatprep.subr.bf16.mxu0 0
      %1400 = vmatpush1.bf16.msra.mxu0 0
      %1401 = vmatprep.subr.bf16.mxu0 0
      %1402 = vmatpush1.bf16.msra.mxu0 0
      %1403 = vmatprep.mubr.bf16.mxu0 0
      %1404 = vmatmul.mubr.bf16.gmra.mrb[0].mxu0 %v1362
      %v1405 = vpop.f32.mrb[0].mxu0
      %v1406 = vadd.f32 0.0, %v1405
      %v1407 = vpop.f32.mrb[0].mxu0
      %v1408 = vadd.f32 0.0, %v1407
      %v1409 = vpop.f32.mrb[0].mxu0
      %v1410 = vpop.f32.mrb[0].mxu0
      %1411 = vdwg.mxu0
      %v1413 = vsel %vm1360, %v1346, 0
      %v1416 = vsel %vm1364, %v1344, 0
      %v1419 = vsel %vm1364, %v1345, 0
      %1421 = vmatprep.subr.bf16.mxu0 %v1419
      %1422 = vmatpush1.bf16.msra.mxu0 %v1416
      %1423 = vmatprep.subr.bf16.mxu0 0
      %1424 = vmatpush1.bf16.msra.mxu0 0
      %1425 = vmatprep.subr.bf16.mxu0 0
      %1426 = vmatpush1.bf16.msra.mxu0 0
      %1427 = vmatprep.subr.bf16.mxu0 0
      %1428 = vmatpush1.bf16.msra.mxu0 0
      %1429 = vmatprep.subr.bf16.mxu0 0
      %1430 = vmatpush1.bf16.msra.mxu0 0
      %1431 = vmatprep.subr.bf16.mxu0 0
      %1432 = vmatpush1.bf16.msra.mxu0 0
      %1433 = vmatprep.subr.bf16.mxu0 0
      %1434 = vmatpush1.bf16.msra.mxu0 0
      %1435 = vmatprep.subr.bf16.mxu0 0
      %1436 = vmatpush1.bf16.msra.mxu0 0
      %1437 = vmatprep.subr.bf16.mxu0 0
      %1438 = vmatpush1.bf16.msra.mxu0 0
      %1439 = vmatprep.subr.bf16.mxu0 0
      %1440 = vmatpush1.bf16.msra.mxu0 0
      %1441 = vmatprep.subr.bf16.mxu0 0
      %1442 = vmatpush1.bf16.msra.mxu0 0
      %1443 = vmatprep.subr.bf16.mxu0 0
      %1444 = vmatpush1.bf16.msra.mxu0 0
      %1445 = vmatprep.subr.bf16.mxu0 0
      %1446 = vmatpush1.bf16.msra.mxu0 0
      %1447 = vmatprep.subr.bf16.mxu0 0
      %1448 = vmatpush1.bf16.msra.mxu0 0
      %1449 = vmatprep.subr.bf16.mxu0 0
      %1450 = vmatpush1.bf16.msra.mxu0 0
      %1451 = vmatprep.subr.bf16.mxu0 0
      %1452 = vmatpush1.bf16.msra.mxu0 0
      %1453 = vmatprep.mubr.bf16.mxu0 0
      %1454 = vmatmul.mubr.bf16.gmra.mrb[0].mxu0 %v1413
      %v1455 = vpop.f32.mrb[0].mxu0
      %v1456 = vadd.f32 %v1406, %v1455
      %v1457 = vpop.f32.mrb[0].mxu0
      %v1458 = vadd.f32 %v1408, %v1457
      %v1459 = vpop.f32.mrb[0].mxu0
      %v1460 = vpop.f32.mrb[0].mxu0
      %1461 = vdwg.mxu0
      %1462 = vrot.lane.b32.xlu0 %v1331, 15
      %v1463 = vpop.permute.xlu0 %1462
      %1464 = vrot.lane.b32.xlu0 %v1332, 15
      %v1465 = vpop.permute.xlu0 %1464
      %v1466 = vsel %vm639, %v1463, %v1465
      %v1469 = vsel %vm642, 0, %v1463
      %v1471 = vmul.bf16 %v1469, %v677
      %v1472 = vmul.bf16 %v1466, %v684
      %s1473 = scalar_lea.vmem %s6, 8
      %v1474 = vld [vmem:[%s1473] sm:$0xf]
      %v1476 = vsel %vm1360, %v1474, 0
      %v1479 = vsel %vm1364, %v1471, 0
      %v1482 = vsel %vm1364, %v1472, 0
      %1484 = vmatprep.subr.bf16.mxu0 %v1482
      %1485 = vmatpush1.bf16.msra.mxu0 %v1479
      %1486 = vmatprep.subr.bf16.mxu0 0
      %1487 = vmatpush1.bf16.msra.mxu0 0
      %1488 = vmatprep.subr.bf16.mxu0 0
      %1489 = vmatpush1.bf16.msra.mxu0 0
      %1490 = vmatprep.subr.bf16.mxu0 0
      %1491 = vmatpush1.bf16.msra.mxu0 0
      %1492 = vmatprep.subr.bf16.mxu0 0
      %1493 = vmatpush1.bf16.msra.mxu0 0
      %1494 = vmatprep.subr.bf16.mxu0 0
      %1495 = vmatpush1.bf16.msra.mxu0 0
      %1496 = vmatprep.subr.bf16.mxu0 0
      %1497 = vmatpush1.bf16.msra.mxu0 0
      %1498 = vmatprep.subr.bf16.mxu0 0
      %1499 = vmatpush1.bf16.msra.mxu0 0
      %1500 = vmatprep.subr.bf16.mxu0 0
      %1501 = vmatpush1.bf16.msra.mxu0 0
      %1502 = vmatprep.subr.bf16.mxu0 0
      %1503 = vmatpush1.bf16.msra.mxu0 0
      %1504 = vmatprep.subr.bf16.mxu0 0
      %1505 = vmatpush1.bf16.msra.mxu0 0
      %1506 = vmatprep.subr.bf16.mxu0 0
      %1507 = vmatpush1.bf16.msra.mxu0 0
      %1508 = vmatprep.subr.bf16.mxu0 0
      %1509 = vmatpush1.bf16.msra.mxu0 0
      %1510 = vmatprep.subr.bf16.mxu0 0
      %1511 = vmatpush1.bf16.msra.mxu0 0
      %1512 = vmatprep.subr.bf16.mxu0 0
      %1513 = vmatpush1.bf16.msra.mxu0 0
      %1514 = vmatprep.subr.bf16.mxu0 0
      %1515 = vmatpush1.bf16.msra.mxu0 0
      %1516 = vmatprep.mubr.bf16.mxu0 0
      %1517 = vmatmul.mubr.bf16.gmra.mrb[0].mxu0 %v1476
      %v1518 = vpop.f32.mrb[0].mxu0
      %v1519 = vadd.f32 0.0, %v1518
      %v1520 = vpop.f32.mrb[0].mxu0
      %v1521 = vadd.f32 0.0, %v1520
      %v1522 = vpop.f32.mrb[0].mxu0
      %v1523 = vpop.f32.mrb[0].mxu0
      %1524 = vdwg.mxu0
      %v1525 = vadd.f32 %v1456, %v1519
      %v1526 = vadd.f32 %v1458, %v1521
      %1527 = vrot.lane.b32.xlu0 %v1331, 1
      %v1528 = vpop.permute.xlu0 %1527
      %1529 = vrot.lane.b32.xlu0 %v1332, 1
      %v1530 = vpop.permute.xlu0 %1529
      %v1531 = vsel %vm745, %v1528, %v1530
      %v1534 = vsel %vm748, 0, %v1528
      %v1536 = vmul.bf16 %v1534, %v783
      %v1537 = vmul.bf16 %v1531, %v790
      %s1538 = scalar_lea.vmem %s6, 12
      %v1539 = vld [vmem:[%s1538] sm:$0xf]
      %v1541 = vsel %vm1360, %v1539, 0
      %v1544 = vsel %vm1364, %v1536, 0
      %v1547 = vsel %vm1364, %v1537, 0
      %1549 = vmatprep.subr.bf16.mxu0 %v1547
      %1550 = vmatpush1.bf16.msra.mxu0 %v1544
      %1551 = vmatprep.subr.bf16.mxu0 0
      %1552 = vmatpush1.bf16.msra.mxu0 0
      %1553 = vmatprep.subr.bf16.mxu0 0
      %1554 = vmatpush1.bf16.msra.mxu0 0
      %1555 = vmatprep.subr.bf16.mxu0 0
      %1556 = vmatpush1.bf16.msra.mxu0 0
      %1557 = vmatprep.subr.bf16.mxu0 0
      %1558 = vmatpush1.bf16.msra.mxu0 0
      %1559 = vmatprep.subr.bf16.mxu0 0
      %1560 = vmatpush1.bf16.msra.mxu0 0
      %1561 = vmatprep.subr.bf16.mxu0 0
      %1562 = vmatpush1.bf16.msra.mxu0 0
      %1563 = vmatprep.subr.bf16.mxu0 0
      %1564 = vmatpush1.bf16.msra.mxu0 0
      %1565 = vmatprep.subr.bf16.mxu0 0
      %1566 = vmatpush1.bf16.msra.mxu0 0
      %1567 = vmatprep.subr.bf16.mxu0 0
      %1568 = vmatpush1.bf16.msra.mxu0 0
      %1569 = vmatprep.subr.bf16.mxu0 0
      %1570 = vmatpush1.bf16.msra.mxu0 0
      %1571 = vmatprep.subr.bf16.mxu0 0
      %1572 = vmatpush1.bf16.msra.mxu0 0
      %1573 = vmatprep.subr.bf16.mxu0 0
      %1574 = vmatpush1.bf16.msra.mxu0 0
      %1575 = vmatprep.subr.bf16.mxu0 0
      %1576 = vmatpush1.bf16.msra.mxu0 0
      %1577 = vmatprep.subr.bf16.mxu0 0
      %1578 = vmatpush1.bf16.msra.mxu0 0
      %1579 = vmatprep.subr.bf16.mxu0 0
      %1580 = vmatpush1.bf16.msra.mxu0 0
      %1581 = vmatprep.mubr.bf16.mxu0 0
      %1582 = vmatmul.mubr.bf16.gmra.mrb[0].mxu0 %v1541
      %v1583 = vpop.f32.mrb[0].mxu0
      %v1584 = vadd.f32 0.0, %v1583
      %v1585 = vpop.f32.mrb[0].mxu0
      %v1586 = vadd.f32 0.0, %v1585
      %v1587 = vpop.f32.mrb[0].mxu0
      %v1588 = vpop.f32.mrb[0].mxu0
      %1589 = vdwg.mxu0
      %v1590 = vadd.f32 %v1525, %v1584
      %v1591 = vadd.f32 %v1526, %v1586
      %s1592 = scalar_lea.vmem %s6, 16
      %v1593 = vld [vmem:[%s1592] sm:$0xf]
      %v1595 = vsel %vm1360, %v1593, 0
      %v1598 = vsel %vm1364, %v1331, 0
      %v1601 = vsel %vm1364, %v1332, 0
      %1603 = vmatprep.subr.bf16.mxu0 %v1601
      %1604 = vmatpush1.bf16.msra.mxu0 %v1598
      %1605 = vmatprep.subr.bf16.mxu0 0
      %1606 = vmatpush1.bf16.msra.mxu0 0
      %1607 = vmatprep.subr.bf16.mxu0 0
      %1608 = vmatpush1.bf16.msra.mxu0 0
      %1609 = vmatprep.subr.bf16.mxu0 0
      %1610 = vmatpush1.bf16.msra.mxu0 0
      %1611 = vmatprep.subr.bf16.mxu0 0
      %1612 = vmatpush1.bf16.msra.mxu0 0
      %1613 = vmatprep.subr.bf16.mxu0 0
      %1614 = vmatpush1.bf16.msra.mxu0 0
      %1615 = vmatprep.subr.bf16.mxu0 0
      %1616 = vmatpush1.bf16.msra.mxu0 0
      %1617 = vmatprep.subr.bf16.mxu0 0
      %1618 = vmatpush1.bf16.msra.mxu0 0
      %1619 = vmatprep.subr.bf16.mxu0 0
      %1620 = vmatpush1.bf16.msra.mxu0 0
      %1621 = vmatprep.subr.bf16.mxu0 0
      %1622 = vmatpush1.bf16.msra.mxu0 0
      %1623 = vmatprep.subr.bf16.mxu0 0
      %1624 = vmatpush1.bf16.msra.mxu0 0
      %1625 = vmatprep.subr.bf16.mxu0 0
      %1626 = vmatpush1.bf16.msra.mxu0 0
      %1627 = vmatprep.subr.bf16.mxu0 0
      %1628 = vmatpush1.bf16.msra.mxu0 0
      %1629 = vmatprep.subr.bf16.mxu0 0
      %1630 = vmatpush1.bf16.msra.mxu0 0
      %1631 = vmatprep.subr.bf16.mxu0 0
      %1632 = vmatpush1.bf16.msra.mxu0 0
      %1633 = vmatprep.subr.bf16.mxu0 0
      %1634 = vmatpush1.bf16.msra.mxu0 0
      %1635 = vmatprep.mubr.bf16.mxu0 0
      %1636 = vmatmul.mubr.bf16.gmra.mrb[0].mxu0 %v1595
      %v1637 = vpop.f32.mrb[0].mxu0
      %v1638 = vadd.f32 0.0, %v1637
      %v1639 = vpop.f32.mrb[0].mxu0
      %v1640 = vadd.f32 0.0, %v1639
      %v1641 = vpop.f32.mrb[0].mxu0
      %v1642 = vpop.f32.mrb[0].mxu0
      %1643 = vdwg.mxu0
      %v1644 = vadd.f32 %v1590, %v1638
      %v1645 = vadd.f32 %v1591, %v1640
      %1646 = vrot.lane.b32.xlu0 %v1331, 127
      %v1647 = vpop.permute.xlu0 %1646
      %1648 = vrot.lane.b32.xlu0 %v1332, 127
      %v1649 = vpop.permute.xlu0 %1648
      %v1650 = vsel %vm899, %v1647, %v1649
      %v1653 = vsel %vm902, %v1649, 0
      %v1655 = vmul.bf16 %v1650, %v937
      %v1656 = vmul.bf16 %v1653, %v944
      %s1657 = scalar_lea.vmem %s6, 20
      %v1658 = vld [vmem:[%s1657] sm:$0xf]
      %v1660 = vsel %vm1360, %v1658, 0
      %v1663 = vsel %vm1364, %v1655, 0
      %v1666 = vsel %vm1364, %v1656, 0
      %1668 = vmatprep.subr.bf16.mxu0 %v1666
      %1669 = vmatpush1.bf16.msra.mxu0 %v1663
      %1670 = vmatprep.subr.bf16.mxu0 0
      %1671 = vmatpush1.bf16.msra.mxu0 0
      %1672 = vmatprep.subr.bf16.mxu0 0
      %1673 = vmatpush1.bf16.msra.mxu0 0
      %1674 = vmatprep.subr.bf16.mxu0 0
      %1675 = vmatpush1.bf16.msra.mxu0 0
      %1676 = vmatprep.subr.bf16.mxu0 0
      %1677 = vmatpush1.bf16.msra.mxu0 0
      %1678 = vmatprep.subr.bf16.mxu0 0
      %1679 = vmatpush1.bf16.msra.mxu0 0
      %1680 = vmatprep.subr.bf16.mxu0 0
      %1681 = vmatpush1.bf16.msra.mxu0 0
      %1682 = vmatprep.subr.bf16.mxu0 0
      %1683 = vmatpush1.bf16.msra.mxu0 0
      %1684 = vmatprep.subr.bf16.mxu0 0
      %1685 = vmatpush1.bf16.msra.mxu0 0
      %1686 = vmatprep.subr.bf16.mxu0 0
      %1687 = vmatpush1.bf16.msra.mxu0 0
      %1688 = vmatprep.subr.bf16.mxu0 0
      %1689 = vmatpush1.bf16.msra.mxu0 0
      %1690 = vmatprep.subr.bf16.mxu0 0
      %1691 = vmatpush1.bf16.msra.mxu0 0
      %1692 = vmatprep.subr.bf16.mxu0 0
      %1693 = vmatpush1.bf16.msra.mxu0 0
      %1694 = vmatprep.subr.bf16.mxu0 0
      %1695 = vmatpush1.bf16.msra.mxu0 0
      %1696 = vmatprep.subr.bf16.mxu0 0
      %1697 = vmatpush1.bf16.msra.mxu0 0
      %1698 = vmatprep.subr.bf16.mxu0 0
      %1699 = vmatpush1.bf16.msra.mxu0 0
      %1700 = vmatprep.mubr.bf16.mxu0 0
      %1701 = vmatmul.mubr.bf16.gmra.mrb[0].mxu0 %v1660
      %v1702 = vpop.f32.mrb[0].mxu0
      %v1703 = vadd.f32 0.0, %v1702
      %v1704 = vpop.f32.mrb[0].mxu0
      %v1705 = vadd.f32 0.0, %v1704
      %v1706 = vpop.f32.mrb[0].mxu0
      %v1707 = vpop.f32.mrb[0].mxu0
      %1708 = vdwg.mxu0
      %v1709 = vadd.f32 %v1644, %v1703
      %v1710 = vadd.f32 %v1645, %v1705
      %1711 = vrot.lane.b32.xlu0 %v1331, 113
      %v1712 = vpop.permute.xlu0 %1711
      %1713 = vrot.lane.b32.xlu0 %v1332, 113
      %v1714 = vpop.permute.xlu0 %1713
      %v1715 = vsel %vm1005, %v1712, %v1714
      %v1718 = vsel %vm1008, %v1714, 0
      %v1720 = vmul.bf16 %v1715, %v1043
      %v1721 = vmul.bf16 %v1718, %v1050
      %s1722 = scalar_lea.vmem %s6, 24
      %v1723 = vld [vmem:[%s1722] sm:$0xf]
      %v1725 = vsel %vm1360, %v1723, 0
      %v1728 = vsel %vm1364, %v1720, 0
      %v1731 = vsel %vm1364, %v1721, 0
      %1733 = vmatprep.subr.bf16.mxu0 %v1731
      %1734 = vmatpush1.bf16.msra.mxu0 %v1728
      %1735 = vmatprep.subr.bf16.mxu0 0
      %1736 = vmatpush1.bf16.msra.mxu0 0
      %1737 = vmatprep.subr.bf16.mxu0 0
      %1738 = vmatpush1.bf16.msra.mxu0 0
      %1739 = vmatprep.subr.bf16.mxu0 0
      %1740 = vmatpush1.bf16.msra.mxu0 0
      %1741 = vmatprep.subr.bf16.mxu0 0
      %1742 = vmatpush1.bf16.msra.mxu0 0
      %1743 = vmatprep.subr.bf16.mxu0 0
      %1744 = vmatpush1.bf16.msra.mxu0 0
      %1745 = vmatprep.subr.bf16.mxu0 0
      %1746 = vmatpush1.bf16.msra.mxu0 0
      %1747 = vmatprep.subr.bf16.mxu0 0
      %1748 = vmatpush1.bf16.msra.mxu0 0
      %1749 = vmatprep.subr.bf16.mxu0 0
      %1750 = vmatpush1.bf16.msra.mxu0 0
      %1751 = vmatprep.subr.bf16.mxu0 0
      %1752 = vmatpush1.bf16.msra.mxu0 0
      %1753 = vmatprep.subr.bf16.mxu0 0
      %1754 = vmatpush1.bf16.msra.mxu0 0
      %1755 = vmatprep.subr.bf16.mxu0 0
      %1756 = vmatpush1.bf16.msra.mxu0 0
      %1757 = vmatprep.subr.bf16.mxu0 0
      %1758 = vmatpush1.bf16.msra.mxu0 0
      %1759 = vmatprep.subr.bf16.mxu0 0
      %1760 = vmatpush1.bf16.msra.mxu0 0
      %1761 = vmatprep.subr.bf16.mxu0 0
      %1762 = vmatpush1.bf16.msra.mxu0 0
      %1763 = vmatprep.subr.bf16.mxu0 0
      %1764 = vmatpush1.bf16.msra.mxu0 0
      %1765 = vmatprep.mubr.bf16.mxu0 0
      %1766 = vmatmul.mubr.bf16.gmra.mrb[0].mxu0 %v1725
      %v1767 = vpop.f32.mrb[0].mxu0
      %v1768 = vadd.f32 0.0, %v1767
      %v1769 = vpop.f32.mrb[0].mxu0
      %v1770 = vadd.f32 0.0, %v1769
      %v1771 = vpop.f32.mrb[0].mxu0
      %v1772 = vpop.f32.mrb[0].mxu0
      %1773 = vdwg.mxu0
      %v1774 = vadd.f32 %v1709, %v1768
      %v1775 = vadd.f32 %v1710, %v1770
      %1776 = vrot.lane.b32.xlu0 %v1331, 112
      %v1777 = vpop.permute.xlu0 %1776
      %1778 = vrot.lane.b32.xlu0 %v1332, 112
      %v1779 = vpop.permute.xlu0 %1778
      %v1780 = vsel %vm1111, %v1777, %v1779
      %v1783 = vsel %vm1114, %v1779, 0
      %v1785 = vmul.bf16 %v1780, %v1149
      %v1786 = vmul.bf16 %v1783, %v1156
      %s1787 = scalar_lea.vmem %s6, 28
      %v1788 = vld [vmem:[%s1787] sm:$0xf]
      %v1790 = vsel %vm1360, %v1788, 0
      %v1793 = vsel %vm1364, %v1785, 0
      %v1796 = vsel %vm1364, %v1786, 0
      %1798 = vmatprep.subr.bf16.mxu0 %v1796
      %1799 = vmatpush1.bf16.msra.mxu0 %v1793
      %1800 = vmatprep.subr.bf16.mxu0 0
      %1801 = vmatpush1.bf16.msra.mxu0 0
      %1802 = vmatprep.subr.bf16.mxu0 0
      %1803 = vmatpush1.bf16.msra.mxu0 0
      %1804 = vmatprep.subr.bf16.mxu0 0
      %1805 = vmatpush1.bf16.msra.mxu0 0
      %1806 = vmatprep.subr.bf16.mxu0 0
      %1807 = vmatpush1.bf16.msra.mxu0 0
      %1808 = vmatprep.subr.bf16.mxu0 0
      %1809 = vmatpush1.bf16.msra.mxu0 0
      %1810 = vmatprep.subr.bf16.mxu0 0
      %1811 = vmatpush1.bf16.msra.mxu0 0
      %1812 = vmatprep.subr.bf16.mxu0 0
      %1813 = vmatpush1.bf16.msra.mxu0 0
      %1814 = vmatprep.subr.bf16.mxu0 0
      %1815 = vmatpush1.bf16.msra.mxu0 0
      %1816 = vmatprep.subr.bf16.mxu0 0
      %1817 = vmatpush1.bf16.msra.mxu0 0
      %1818 = vmatprep.subr.bf16.mxu0 0
      %1819 = vmatpush1.bf16.msra.mxu0 0
      %1820 = vmatprep.subr.bf16.mxu0 0
      %1821 = vmatpush1.bf16.msra.mxu0 0
      %1822 = vmatprep.subr.bf16.mxu0 0
      %1823 = vmatpush1.bf16.msra.mxu0 0
      %1824 = vmatprep.subr.bf16.mxu0 0
      %1825 = vmatpush1.bf16.msra.mxu0 0
      %1826 = vmatprep.subr.bf16.mxu0 0
      %1827 = vmatpush1.bf16.msra.mxu0 0
      %1828 = vmatprep.subr.bf16.mxu0 0
      %1829 = vmatpush1.bf16.msra.mxu0 0
      %1830 = vmatprep.mubr.bf16.mxu0 0
      %1831 = vmatmul.mubr.bf16.gmra.mrb[0].mxu0 %v1790
      %v1832 = vpop.f32.mrb[0].mxu0
      %v1833 = vadd.f32 0.0, %v1832
      %v1834 = vpop.f32.mrb[0].mxu0
      %v1835 = vadd.f32 0.0, %v1834
      %v1836 = vpop.f32.mrb[0].mxu0
      %v1837 = vpop.f32.mrb[0].mxu0
      %1838 = vdwg.mxu0
      %v1839 = vadd.f32 %v1774, %v1833
      %v1840 = vadd.f32 %v1775, %v1835
      %1841 = vrot.lane.b32.xlu0 %v1331, 111
      %v1842 = vpop.permute.xlu0 %1841
      %1843 = vrot.lane.b32.xlu0 %v1332, 111
      %v1844 = vpop.permute.xlu0 %1843
      %v1845 = vsel %vm1217, %v1842, %v1844
      %v1848 = vsel %vm1220, %v1844, 0
      %v1850 = vmul.bf16 %v1845, %v1255
      %v1851 = vmul.bf16 %v1848, %v1262
      %s1852 = scalar_lea.vmem %s6, 32
      %v1853 = vld [vmem:[%s1852] sm:$0xf]
      %v1855 = vsel %vm1360, %v1853, 0
      %v1858 = vsel %vm1364, %v1850, 0
      %v1861 = vsel %vm1364, %v1851, 0
      %1863 = vmatprep.subr.bf16.mxu0 %v1861
      %1864 = vmatpush1.bf16.msra.mxu0 %v1858
      %1865 = vmatprep.subr.bf16.mxu0 0
      %1866 = vmatpush1.bf16.msra.mxu0 0
      %1867 = vmatprep.subr.bf16.mxu0 0
      %1868 = vmatpush1.bf16.msra.mxu0 0
      %1869 = vmatprep.subr.bf16.mxu0 0
      %1870 = vmatpush1.bf16.msra.mxu0 0
      %1871 = vmatprep.subr.bf16.mxu0 0
      %1872 = vmatpush1.bf16.msra.mxu0 0
      %1873 = vmatprep.subr.bf16.mxu0 0
      %1874 = vmatpush1.bf16.msra.mxu0 0
      %1875 = vmatprep.subr.bf16.mxu0 0
      %1876 = vmatpush1.bf16.msra.mxu0 0
      %1877 = vmatprep.subr.bf16.mxu0 0
      %1878 = vmatpush1.bf16.msra.mxu0 0
      %1879 = vmatprep.subr.bf16.mxu0 0
      %1880 = vmatpush1.bf16.msra.mxu0 0
      %1881 = vmatprep.subr.bf16.mxu0 0
      %1882 = vmatpush1.bf16.msra.mxu0 0
      %1883 = vmatprep.subr.bf16.mxu0 0
      %1884 = vmatpush1.bf16.msra.mxu0 0
      %1885 = vmatprep.subr.bf16.mxu0 0
      %1886 = vmatpush1.bf16.msra.mxu0 0
      %1887 = vmatprep.subr.bf16.mxu0 0
      %1888 = vmatpush1.bf16.msra.mxu0 0
      %1889 = vmatprep.subr.bf16.mxu0 0
      %1890 = vmatpush1.bf16.msra.mxu0 0
      %1891 = vmatprep.subr.bf16.mxu0 0
      %1892 = vmatpush1.bf16.msra.mxu0 0
      %1893 = vmatprep.subr.bf16.mxu0 0
      %1894 = vmatpush1.bf16.msra.mxu0 0
      %1895 = vmatprep.mubr.bf16.mxu0 0
      %1896 = vmatmul.mubr.bf16.gmra.mrb[0].mxu0 %v1855
      %v1897 = vpop.f32.mrb[0].mxu0
      %v1898 = vadd.f32 0.0, %v1897
      %v1899 = vpop.f32.mrb[0].mxu0
      %v1900 = vadd.f32 0.0, %v1899
      %v1901 = vpop.f32.mrb[0].mxu0
      %v1902 = vpop.f32.mrb[0].mxu0
      %1903 = vdwg.mxu0
      %v1904 = vadd.f32 %v1839, %v1898
      %v1905 = vadd.f32 %v1840, %v1900
      %v1906 = vld [vmem:[%s7] sm:$0xff]
      %1908 = vset.pattern.permute.xlu0 0
      %1909 = vperm.xlu0 %1908, %v1906
      %v1910 = vpop.permute.xlu0 %1909
      %v1912 = vadd.f32 %v1904, %v1910
      %v1913 = vadd.f32 %v1905, %v1910
      %v1914 = vmax.f32 %v1912, 0.0
      %v1915 = vmax.f32 %v1913, 0.0
      %v1916 = vpack.c.bf16 %v1914, %v1914
      %v1917 = vpack.c.bf16 %v1915, %v1915
      %1920 = vrot.lane.b32.xlu0 %v1916, 17
      %v1921 = vpop.permute.xlu0 %1920
      %1922 = vrot.lane.b32.xlu0 %v1917, 17
      %v1923 = vpop.permute.xlu0 %1922
      %v1924 = vsel %vm432, %v1921, %v1923
      %v1927 = vsel %vm435, 0, %v1921
      %v1929 = vmul.bf16 %v1927, %v470
      %v1930 = vmul.bf16 %v1924, %v477
      %v1931 = vld [vmem:[%s8] sm:$0xf]
      %1932 = vrot.lane.b32.xlu0 %v1916, 16
      %v1933 = vpop.permute.xlu0 %1932
      %1934 = vrot.lane.b32.xlu0 %v1917, 16
      %v1935 = vpop.permute.xlu0 %1934
      %v1936 = vsel %vm485, %v1933, %v1935
      %v1939 = vsel %vm488, 0, %v1933
      %v1941 = vmul.bf16 %v1939, %v523
      %v1942 = vmul.bf16 %v1936, %v530
      %s1943 = scalar_lea.vmem %s8, 4
      %v1944 = vld [vmem:[%s1943] sm:$0xf]
      %v1946 = vsel %vm1360, %v1944, 0
      %v1949 = vsel %vm1364, %v1941, 0
      %v1952 = vsel %vm1364, %v1942, 0
      %1954 = vmatprep.subr.bf16.mxu0 %v1952
      %1955 = vmatpush1.bf16.msra.mxu0 %v1949
      %1956 = vmatprep.subr.bf16.mxu0 0
      %1957 = vmatpush1.bf16.msra.mxu0 0
      %1958 = vmatprep.subr.bf16.mxu0 0
      %1959 = vmatpush1.bf16.msra.mxu0 0
      %1960 = vmatprep.subr.bf16.mxu0 0
      %1961 = vmatpush1.bf16.msra.mxu0 0
      %1962 = vmatprep.subr.bf16.mxu0 0
      %1963 = vmatpush1.bf16.msra.mxu0 0
      %1964 = vmatprep.subr.bf16.mxu0 0
      %1965 = vmatpush1.bf16.msra.mxu0 0
      %1966 = vmatprep.subr.bf16.mxu0 0
      %1967 = vmatpush1.bf16.msra.mxu0 0
      %1968 = vmatprep.subr.bf16.mxu0 0
      %1969 = vmatpush1.bf16.msra.mxu0 0
      %1970 = vmatprep.subr.bf16.mxu0 0
      %1971 = vmatpush1.bf16.msra.mxu0 0
      %1972 = vmatprep.subr.bf16.mxu0 0
      %1973 = vmatpush1.bf16.msra.mxu0 0
      %1974 = vmatprep.subr.bf16.mxu0 0
      %1975 = vmatpush1.bf16.msra.mxu0 0
      %1976 = vmatprep.subr.bf16.mxu0 0
      %1977 = vmatpush1.bf16.msra.mxu0 0
      %1978 = vmatprep.subr.bf16.mxu0 0
      %1979 = vmatpush1.bf16.msra.mxu0 0
      %1980 = vmatprep.subr.bf16.mxu0 0
      %1981 = vmatpush1.bf16.msra.mxu0 0
      %1982 = vmatprep.subr.bf16.mxu0 0
      %1983 = vmatpush1.bf16.msra.mxu0 0
      %1984 = vmatprep.subr.bf16.mxu0 0
      %1985 = vmatpush1.bf16.msra.mxu0 0
      %1986 = vmatprep.mubr.bf16.mxu0 0
      %1987 = vmatmul.mubr.bf16.gmra.mrb[0].mxu0 %v1946
      %v1988 = vpop.f32.mrb[0].mxu0
      %v1989 = vadd.f32 0.0, %v1988
      %v1990 = vpop.f32.mrb[0].mxu0
      %v1991 = vadd.f32 0.0, %v1990
      %v1992 = vpop.f32.mrb[0].mxu0
      %v1993 = vpop.f32.mrb[0].mxu0
      %1994 = vdwg.mxu0
      %v1996 = vsel %vm1360, %v1931, 0
      %v1999 = vsel %vm1364, %v1929, 0
      %v2002 = vsel %vm1364, %v1930, 0
      %2004 = vmatprep.subr.bf16.mxu0 %v2002
      %2005 = vmatpush1.bf16.msra.mxu0 %v1999
      %2006 = vmatprep.subr.bf16.mxu0 0
      %2007 = vmatpush1.bf16.msra.mxu0 0
      %2008 = vmatprep.subr.bf16.mxu0 0
      %2009 = vmatpush1.bf16.msra.mxu0 0
      %2010 = vmatprep.subr.bf16.mxu0 0
      %2011 = vmatpush1.bf16.msra.mxu0 0
      %2012 = vmatprep.subr.bf16.mxu0 0
      %2013 = vmatpush1.bf16.msra.mxu0 0
      %2014 = vmatprep.subr.bf16.mxu0 0
      %2015 = vmatpush1.bf16.msra.mxu0 0
      %2016 = vmatprep.subr.bf16.mxu0 0
      %2017 = vmatpush1.bf16.msra.mxu0 0
      %2018 = vmatprep.subr.bf16.mxu0 0
      %2019 = vmatpush1.bf16.msra.mxu0 0
      %2020 = vmatprep.subr.bf16.mxu0 0
      %2021 = vmatpush1.bf16.msra.mxu0 0
      %2022 = vmatprep.subr.bf16.mxu0 0
      %2023 = vmatpush1.bf16.msra.mxu0 0
      %2024 = vmatprep.subr.bf16.mxu0 0
      %2025 = vmatpush1.bf16.msra.mxu0 0
      %2026 = vmatprep.subr.bf16.mxu0 0
      %2027 = vmatpush1.bf16.msra.mxu0 0
      %2028 = vmatprep.subr.bf16.mxu0 0
      %2029 = vmatpush1.bf16.msra.mxu0 0
      %2030 = vmatprep.subr.bf16.mxu0 0
      %2031 = vmatpush1.bf16.msra.mxu0 0
      %2032 = vmatprep.subr.bf16.mxu0 0
      %2033 = vmatpush1.bf16.msra.mxu0 0
      %2034 = vmatprep.subr.bf16.mxu0 0
      %2035 = vmatpush1.bf16.msra.mxu0 0
      %2036 = vmatprep.mubr.bf16.mxu0 0
      %2037 = vmatmul.mubr.bf16.gmra.mrb[0].mxu0 %v1996
      %v2038 = vpop.f32.mrb[0].mxu0
      %v2039 = vadd.f32 %v1989, %v2038
      %v2040 = vpop.f32.mrb[0].mxu0
      %v2041 = vadd.f32 %v1991, %v2040
      %v2042 = vpop.f32.mrb[0].mxu0
      %v2043 = vpop.f32.mrb[0].mxu0
      %2044 = vdwg.mxu0
      %2045 = vrot.lane.b32.xlu0 %v1916, 15
      %v2046 = vpop.permute.xlu0 %2045
      %2047 = vrot.lane.b32.xlu0 %v1917, 15
      %v2048 = vpop.permute.xlu0 %2047
      %v2049 = vsel %vm639, %v2046, %v2048
      %v2052 = vsel %vm642, 0, %v2046
      %v2054 = vmul.bf16 %v2052, %v677
      %v2055 = vmul.bf16 %v2049, %v684
      %s2056 = scalar_lea.vmem %s8, 8
      %v2057 = vld [vmem:[%s2056] sm:$0xf]
      %v2059 = vsel %vm1360, %v2057, 0
      %v2062 = vsel %vm1364, %v2054, 0
      %v2065 = vsel %vm1364, %v2055, 0
      %2067 = vmatprep.subr.bf16.mxu0 %v2065
      %2068 = vmatpush1.bf16.msra.mxu0 %v2062
      %2069 = vmatprep.subr.bf16.mxu0 0
      %2070 = vmatpush1.bf16.msra.mxu0 0
      %2071 = vmatprep.subr.bf16.mxu0 0
      %2072 = vmatpush1.bf16.msra.mxu0 0
      %2073 = vmatprep.subr.bf16.mxu0 0
      %2074 = vmatpush1.bf16.msra.mxu0 0
      %2075 = vmatprep.subr.bf16.mxu0 0
      %2076 = vmatpush1.bf16.msra.mxu0 0
      %2077 = vmatprep.subr.bf16.mxu0 0
      %2078 = vmatpush1.bf16.msra.mxu0 0
      %2079 = vmatprep.subr.bf16.mxu0 0
      %2080 = vmatpush1.bf16.msra.mxu0 0
      %2081 = vmatprep.subr.bf16.mxu0 0
      %2082 = vmatpush1.bf16.msra.mxu0 0
      %2083 = vmatprep.subr.bf16.mxu0 0
      %2084 = vmatpush1.bf16.msra.mxu0 0
      %2085 = vmatprep.subr.bf16.mxu0 0
      %2086 = vmatpush1.bf16.msra.mxu0 0
      %2087 = vmatprep.subr.bf16.mxu0 0
      %2088 = vmatpush1.bf16.msra.mxu0 0
      %2089 = vmatprep.subr.bf16.mxu0 0
      %2090 = vmatpush1.bf16.msra.mxu0 0
      %2091 = vmatprep.subr.bf16.mxu0 0
      %2092 = vmatpush1.bf16.msra.mxu0 0
      %2093 = vmatprep.subr.bf16.mxu0 0
      %2094 = vmatpush1.bf16.msra.mxu0 0
      %2095 = vmatprep.subr.bf16.mxu0 0
      %2096 = vmatpush1.bf16.msra.mxu0 0
      %2097 = vmatprep.subr.bf16.mxu0 0
      %2098 = vmatpush1.bf16.msra.mxu0 0
      %2099 = vmatprep.mubr.bf16.mxu0 0
      %2100 = vmatmul.mubr.bf16.gmra.mrb[0].mxu0 %v2059
      %v2101 = vpop.f32.mrb[0].mxu0
      %v2102 = vadd.f32 0.0, %v2101
      %v2103 = vpop.f32.mrb[0].mxu0
      %v2104 = vadd.f32 0.0, %v2103
      %v2105 = vpop.f32.mrb[0].mxu0
      %v2106 = vpop.f32.mrb[0].mxu0
      %2107 = vdwg.mxu0
      %v2108 = vadd.f32 %v2039, %v2102
      %v2109 = vadd.f32 %v2041, %v2104
      %2110 = vrot.lane.b32.xlu0 %v1916, 1
      %v2111 = vpop.permute.xlu0 %2110
      %2112 = vrot.lane.b32.xlu0 %v1917, 1
      %v2113 = vpop.permute.xlu0 %2112
      %v2114 = vsel %vm745, %v2111, %v2113
      %v2117 = vsel %vm748, 0, %v2111
      %v2119 = vmul.bf16 %v2117, %v783
      %v2120 = vmul.bf16 %v2114, %v790
      %s2121 = scalar_lea.vmem %s8, 12
      %v2122 = vld [vmem:[%s2121] sm:$0xf]
      %v2124 = vsel %vm1360, %v2122, 0
      %v2127 = vsel %vm1364, %v2119, 0
      %v2130 = vsel %vm1364, %v2120, 0
      %2132 = vmatprep.subr.bf16.mxu0 %v2130
      %2133 = vmatpush1.bf16.msra.mxu0 %v2127
      %2134 = vmatprep.subr.bf16.mxu0 0
      %2135 = vmatpush1.bf16.msra.mxu0 0
      %2136 = vmatprep.subr.bf16.mxu0 0
      %2137 = vmatpush1.bf16.msra.mxu0 0
      %2138 = vmatprep.subr.bf16.mxu0 0
      %2139 = vmatpush1.bf16.msra.mxu0 0
      %2140 = vmatprep.subr.bf16.mxu0 0
      %2141 = vmatpush1.bf16.msra.mxu0 0
      %2142 = vmatprep.subr.bf16.mxu0 0
      %2143 = vmatpush1.bf16.msra.mxu0 0
      %2144 = vmatprep.subr.bf16.mxu0 0
      %2145 = vmatpush1.bf16.msra.mxu0 0
      %2146 = vmatprep.subr.bf16.mxu0 0
      %2147 = vmatpush1.bf16.msra.mxu0 0
      %2148 = vmatprep.subr.bf16.mxu0 0
      %2149 = vmatpush1.bf16.msra.mxu0 0
      %2150 = vmatprep.subr.bf16.mxu0 0
      %2151 = vmatpush1.bf16.msra.mxu0 0
      %2152 = vmatprep.subr.bf16.mxu0 0
      %2153 = vmatpush1.bf16.msra.mxu0 0
      %2154 = vmatprep.subr.bf16.mxu0 0
      %2155 = vmatpush1.bf16.msra.mxu0 0
      %2156 = vmatprep.subr.bf16.mxu0 0
      %2157 = vmatpush1.bf16.msra.mxu0 0
      %2158 = vmatprep.subr.bf16.mxu0 0
      %2159 = vmatpush1.bf16.msra.mxu0 0
      %2160 = vmatprep.subr.bf16.mxu0 0
      %2161 = vmatpush1.bf16.msra.mxu0 0
      %2162 = vmatprep.subr.bf16.mxu0 0
      %2163 = vmatpush1.bf16.msra.mxu0 0
      %2164 = vmatprep.mubr.bf16.mxu0 0
      %2165 = vmatmul.mubr.bf16.gmra.mrb[0].mxu0 %v2124
      %v2166 = vpop.f32.mrb[0].mxu0
      %v2167 = vadd.f32 0.0, %v2166
      %v2168 = vpop.f32.mrb[0].mxu0
      %v2169 = vadd.f32 0.0, %v2168
      %v2170 = vpop.f32.mrb[0].mxu0
      %v2171 = vpop.f32.mrb[0].mxu0
      %2172 = vdwg.mxu0
      %v2173 = vadd.f32 %v2108, %v2167
      %v2174 = vadd.f32 %v2109, %v2169
      %s2175 = scalar_lea.vmem %s8, 16
      %v2176 = vld [vmem:[%s2175] sm:$0xf]
      %v2178 = vsel %vm1360, %v2176, 0
      %v2181 = vsel %vm1364, %v1916, 0
      %v2184 = vsel %vm1364, %v1917, 0
      %2186 = vmatprep.subr.bf16.mxu0 %v2184
      %2187 = vmatpush1.bf16.msra.mxu0 %v2181
      %2188 = vmatprep.subr.bf16.mxu0 0
      %2189 = vmatpush1.bf16.msra.mxu0 0
      %2190 = vmatprep.subr.bf16.mxu0 0
      %2191 = vmatpush1.bf16.msra.mxu0 0
      %2192 = vmatprep.subr.bf16.mxu0 0
      %2193 = vmatpush1.bf16.msra.mxu0 0
      %2194 = vmatprep.subr.bf16.mxu0 0
      %2195 = vmatpush1.bf16.msra.mxu0 0
      %2196 = vmatprep.subr.bf16.mxu0 0
      %2197 = vmatpush1.bf16.msra.mxu0 0
      %2198 = vmatprep.subr.bf16.mxu0 0
      %2199 = vmatpush1.bf16.msra.mxu0 0
      %2200 = vmatprep.subr.bf16.mxu0 0
      %2201 = vmatpush1.bf16.msra.mxu0 0
      %2202 = vmatprep.subr.bf16.mxu0 0
      %2203 = vmatpush1.bf16.msra.mxu0 0
      %2204 = vmatprep.subr.bf16.mxu0 0
      %2205 = vmatpush1.bf16.msra.mxu0 0
      %2206 = vmatprep.subr.bf16.mxu0 0
      %2207 = vmatpush1.bf16.msra.mxu0 0
      %2208 = vmatprep.subr.bf16.mxu0 0
      %2209 = vmatpush1.bf16.msra.mxu0 0
      %2210 = vmatprep.subr.bf16.mxu0 0
      %2211 = vmatpush1.bf16.msra.mxu0 0
      %2212 = vmatprep.subr.bf16.mxu0 0
      %2213 = vmatpush1.bf16.msra.mxu0 0
      %2214 = vmatprep.subr.bf16.mxu0 0
      %2215 = vmatpush1.bf16.msra.mxu0 0
      %2216 = vmatprep.subr.bf16.mxu0 0
      %2217 = vmatpush1.bf16.msra.mxu0 0
      %2218 = vmatprep.mubr.bf16.mxu0 0
      %2219 = vmatmul.mubr.bf16.gmra.mrb[0].mxu0 %v2178
      %v2220 = vpop.f32.mrb[0].mxu0
      %v2221 = vadd.f32 0.0, %v2220
      %v2222 = vpop.f32.mrb[0].mxu0
      %v2223 = vadd.f32 0.0, %v2222
      %v2224 = vpop.f32.mrb[0].mxu0
      %v2225 = vpop.f32.mrb[0].mxu0
      %2226 = vdwg.mxu0
      %v2227 = vadd.f32 %v2173, %v2221
      %v2228 = vadd.f32 %v2174, %v2223
      %2229 = vrot.lane.b32.xlu0 %v1916, 127
      %v2230 = vpop.permute.xlu0 %2229
      %2231 = vrot.lane.b32.xlu0 %v1917, 127
      %v2232 = vpop.permute.xlu0 %2231
      %v2233 = vsel %vm899, %v2230, %v2232
      %v2236 = vsel %vm902, %v2232, 0
      %v2238 = vmul.bf16 %v2233, %v937
      %v2239 = vmul.bf16 %v2236, %v944
      %s2240 = scalar_lea.vmem %s8, 20
      %v2241 = vld [vmem:[%s2240] sm:$0xf]
      %v2243 = vsel %vm1360, %v2241, 0
      %v2246 = vsel %vm1364, %v2238, 0
      %v2249 = vsel %vm1364, %v2239, 0
      %2251 = vmatprep.subr.bf16.mxu0 %v2249
      %2252 = vmatpush1.bf16.msra.mxu0 %v2246
      %2253 = vmatprep.subr.bf16.mxu0 0
      %2254 = vmatpush1.bf16.msra.mxu0 0
      %2255 = vmatprep.subr.bf16.mxu0 0
      %2256 = vmatpush1.bf16.msra.mxu0 0
      %2257 = vmatprep.subr.bf16.mxu0 0
      %2258 = vmatpush1.bf16.msra.mxu0 0
      %2259 = vmatprep.subr.bf16.mxu0 0
      %2260 = vmatpush1.bf16.msra.mxu0 0
      %2261 = vmatprep.subr.bf16.mxu0 0
      %2262 = vmatpush1.bf16.msra.mxu0 0
      %2263 = vmatprep.subr.bf16.mxu0 0
      %2264 = vmatpush1.bf16.msra.mxu0 0
      %2265 = vmatprep.subr.bf16.mxu0 0
      %2266 = vmatpush1.bf16.msra.mxu0 0
      %2267 = vmatprep.subr.bf16.mxu0 0
      %2268 = vmatpush1.bf16.msra.mxu0 0
      %2269 = vmatprep.subr.bf16.mxu0 0
      %2270 = vmatpush1.bf16.msra.mxu0 0
      %2271 = vmatprep.subr.bf16.mxu0 0
      %2272 = vmatpush1.bf16.msra.mxu0 0
      %2273 = vmatprep.subr.bf16.mxu0 0
      %2274 = vmatpush1.bf16.msra.mxu0 0
      %2275 = vmatprep.subr.bf16.mxu0 0
      %2276 = vmatpush1.bf16.msra.mxu0 0
      %2277 = vmatprep.subr.bf16.mxu0 0
      %2278 = vmatpush1.bf16.msra.mxu0 0
      %2279 = vmatprep.subr.bf16.mxu0 0
      %2280 = vmatpush1.bf16.msra.mxu0 0
      %2281 = vmatprep.subr.bf16.mxu0 0
      %2282 = vmatpush1.bf16.msra.mxu0 0
      %2283 = vmatprep.mubr.bf16.mxu0 0
      %2284 = vmatmul.mubr.bf16.gmra.mrb[0].mxu0 %v2243
      %v2285 = vpop.f32.mrb[0].mxu0
      %v2286 = vadd.f32 0.0, %v2285
      %v2287 = vpop.f32.mrb[0].mxu0
      %v2288 = vadd.f32 0.0, %v2287
      %v2289 = vpop.f32.mrb[0].mxu0
      %v2290 = vpop.f32.mrb[0].mxu0
      %2291 = vdwg.mxu0
      %v2292 = vadd.f32 %v2227, %v2286
      %v2293 = vadd.f32 %v2228, %v2288
      %2294 = vrot.lane.b32.xlu0 %v1916, 113
      %v2295 = vpop.permute.xlu0 %2294
      %2296 = vrot.lane.b32.xlu0 %v1917, 113
      %v2297 = vpop.permute.xlu0 %2296
      %v2298 = vsel %vm1005, %v2295, %v2297
      %v2301 = vsel %vm1008, %v2297, 0
      %v2303 = vmul.bf16 %v2298, %v1043
      %v2304 = vmul.bf16 %v2301, %v1050
      %s2305 = scalar_lea.vmem %s8, 24
      %v2306 = vld [vmem:[%s2305] sm:$0xf]
      %v2308 = vsel %vm1360, %v2306, 0
      %v2311 = vsel %vm1364, %v2303, 0
      %v2314 = vsel %vm1364, %v2304, 0
      %2316 = vmatprep.subr.bf16.mxu0 %v2314
      %2317 = vmatpush1.bf16.msra.mxu0 %v2311
      %2318 = vmatprep.subr.bf16.mxu0 0
      %2319 = vmatpush1.bf16.msra.mxu0 0
      %2320 = vmatprep.subr.bf16.mxu0 0
      %2321 = vmatpush1.bf16.msra.mxu0 0
      %2322 = vmatprep.subr.bf16.mxu0 0
      %2323 = vmatpush1.bf16.msra.mxu0 0
      %2324 = vmatprep.subr.bf16.mxu0 0
      %2325 = vmatpush1.bf16.msra.mxu0 0
      %2326 = vmatprep.subr.bf16.mxu0 0
      %2327 = vmatpush1.bf16.msra.mxu0 0
      %2328 = vmatprep.subr.bf16.mxu0 0
      %2329 = vmatpush1.bf16.msra.mxu0 0
      %2330 = vmatprep.subr.bf16.mxu0 0
      %2331 = vmatpush1.bf16.msra.mxu0 0
      %2332 = vmatprep.subr.bf16.mxu0 0
      %2333 = vmatpush1.bf16.msra.mxu0 0
      %2334 = vmatprep.subr.bf16.mxu0 0
      %2335 = vmatpush1.bf16.msra.mxu0 0
      %2336 = vmatprep.subr.bf16.mxu0 0
      %2337 = vmatpush1.bf16.msra.mxu0 0
      %2338 = vmatprep.subr.bf16.mxu0 0
      %2339 = vmatpush1.bf16.msra.mxu0 0
      %2340 = vmatprep.subr.bf16.mxu0 0
      %2341 = vmatpush1.bf16.msra.mxu0 0
      %2342 = vmatprep.subr.bf16.mxu0 0
      %2343 = vmatpush1.bf16.msra.mxu0 0
      %2344 = vmatprep.subr.bf16.mxu0 0
      %2345 = vmatpush1.bf16.msra.mxu0 0
      %2346 = vmatprep.subr.bf16.mxu0 0
      %2347 = vmatpush1.bf16.msra.mxu0 0
      %2348 = vmatprep.mubr.bf16.mxu0 0
      %2349 = vmatmul.mubr.bf16.gmra.mrb[0].mxu0 %v2308
      %v2350 = vpop.f32.mrb[0].mxu0
      %v2351 = vadd.f32 0.0, %v2350
      %v2352 = vpop.f32.mrb[0].mxu0
      %v2353 = vadd.f32 0.0, %v2352
      %v2354 = vpop.f32.mrb[0].mxu0
      %v2355 = vpop.f32.mrb[0].mxu0
      %2356 = vdwg.mxu0
      %v2357 = vadd.f32 %v2292, %v2351
      %v2358 = vadd.f32 %v2293, %v2353
      %2359 = vrot.lane.b32.xlu0 %v1916, 112
      %v2360 = vpop.permute.xlu0 %2359
      %2361 = vrot.lane.b32.xlu0 %v1917, 112
      %v2362 = vpop.permute.xlu0 %2361
      %v2363 = vsel %vm1111, %v2360, %v2362
      %v2366 = vsel %vm1114, %v2362, 0
      %v2368 = vmul.bf16 %v2363, %v1149
      %v2369 = vmul.bf16 %v2366, %v1156
      %s2370 = scalar_lea.vmem %s8, 28
      %v2371 = vld [vmem:[%s2370] sm:$0xf]
      %v2373 = vsel %vm1360, %v2371, 0
      %v2376 = vsel %vm1364, %v2368, 0
      %v2379 = vsel %vm1364, %v2369, 0
      %2381 = vmatprep.subr.bf16.mxu0 %v2379
      %2382 = vmatpush1.bf16.msra.mxu0 %v2376
      %2383 = vmatprep.subr.bf16.mxu0 0
      %2384 = vmatpush1.bf16.msra.mxu0 0
      %2385 = vmatprep.subr.bf16.mxu0 0
      %2386 = vmatpush1.bf16.msra.mxu0 0
      %2387 = vmatprep.subr.bf16.mxu0 0
      %2388 = vmatpush1.bf16.msra.mxu0 0
      %2389 = vmatprep.subr.bf16.mxu0 0
      %2390 = vmatpush1.bf16.msra.mxu0 0
      %2391 = vmatprep.subr.bf16.mxu0 0
      %2392 = vmatpush1.bf16.msra.mxu0 0
      %2393 = vmatprep.subr.bf16.mxu0 0
      %2394 = vmatpush1.bf16.msra.mxu0 0
      %2395 = vmatprep.subr.bf16.mxu0 0
      %2396 = vmatpush1.bf16.msra.mxu0 0
      %2397 = vmatprep.subr.bf16.mxu0 0
      %2398 = vmatpush1.bf16.msra.mxu0 0
      %2399 = vmatprep.subr.bf16.mxu0 0
      %2400 = vmatpush1.bf16.msra.mxu0 0
      %2401 = vmatprep.subr.bf16.mxu0 0
      %2402 = vmatpush1.bf16.msra.mxu0 0
      %2403 = vmatprep.subr.bf16.mxu0 0
      %2404 = vmatpush1.bf16.msra.mxu0 0
      %2405 = vmatprep.subr.bf16.mxu0 0
      %2406 = vmatpush1.bf16.msra.mxu0 0
      %2407 = vmatprep.subr.bf16.mxu0 0
      %2408 = vmatpush1.bf16.msra.mxu0 0
      %2409 = vmatprep.subr.bf16.mxu0 0
      %2410 = vmatpush1.bf16.msra.mxu0 0
      %2411 = vmatprep.subr.bf16.mxu0 0
      %2412 = vmatpush1.bf16.msra.mxu0 0
      %2413 = vmatprep.mubr.bf16.mxu0 0
      %2414 = vmatmul.mubr.bf16.gmra.mrb[0].mxu0 %v2373
      %v2415 = vpop.f32.mrb[0].mxu0
      %v2416 = vadd.f32 0.0, %v2415
      %v2417 = vpop.f32.mrb[0].mxu0
      %v2418 = vadd.f32 0.0, %v2417
      %v2419 = vpop.f32.mrb[0].mxu0
      %v2420 = vpop.f32.mrb[0].mxu0
      %2421 = vdwg.mxu0
      %v2422 = vadd.f32 %v2357, %v2416
      %v2423 = vadd.f32 %v2358, %v2418
      %2424 = vrot.lane.b32.xlu0 %v1916, 111
      %v2425 = vpop.permute.xlu0 %2424
      %2426 = vrot.lane.b32.xlu0 %v1917, 111
      %v2427 = vpop.permute.xlu0 %2426
      %v2428 = vsel %vm1217, %v2425, %v2427
      %v2431 = vsel %vm1220, %v2427, 0
      %v2433 = vmul.bf16 %v2428, %v1255
      %v2434 = vmul.bf16 %v2431, %v1262
      %s2435 = scalar_lea.vmem %s8, 32
      %v2436 = vld [vmem:[%s2435] sm:$0xf]
      %v2438 = vsel %vm1360, %v2436, 0
      %v2441 = vsel %vm1364, %v2433, 0
      %v2444 = vsel %vm1364, %v2434, 0
      %2446 = vmatprep.subr.bf16.mxu0 %v2444
      %2447 = vmatpush1.bf16.msra.mxu0 %v2441
      %2448 = vmatprep.subr.bf16.mxu0 0
      %2449 = vmatpush1.bf16.msra.mxu0 0
      %2450 = vmatprep.subr.bf16.mxu0 0
      %2451 = vmatpush1.bf16.msra.mxu0 0
      %2452 = vmatprep.subr.bf16.mxu0 0
      %2453 = vmatpush1.bf16.msra.mxu0 0
      %2454 = vmatprep.subr.bf16.mxu0 0
      %2455 = vmatpush1.bf16.msra.mxu0 0
      %2456 = vmatprep.subr.bf16.mxu0 0
      %2457 = vmatpush1.bf16.msra.mxu0 0
      %2458 = vmatprep.subr.bf16.mxu0 0
      %2459 = vmatpush1.bf16.msra.mxu0 0
      %2460 = vmatprep.subr.bf16.mxu0 0
      %2461 = vmatpush1.bf16.msra.mxu0 0
      %2462 = vmatprep.subr.bf16.mxu0 0
      %2463 = vmatpush1.bf16.msra.mxu0 0
      %2464 = vmatprep.subr.bf16.mxu0 0
      %2465 = vmatpush1.bf16.msra.mxu0 0
      %2466 = vmatprep.subr.bf16.mxu0 0
      %2467 = vmatpush1.bf16.msra.mxu0 0
      %2468 = vmatprep.subr.bf16.mxu0 0
      %2469 = vmatpush1.bf16.msra.mxu0 0
      %2470 = vmatprep.subr.bf16.mxu0 0
      %2471 = vmatpush1.bf16.msra.mxu0 0
      %2472 = vmatprep.subr.bf16.mxu0 0
      %2473 = vmatpush1.bf16.msra.mxu0 0
      %2474 = vmatprep.subr.bf16.mxu0 0
      %2475 = vmatpush1.bf16.msra.mxu0 0
      %2476 = vmatprep.subr.bf16.mxu0 0
      %2477 = vmatpush1.bf16.msra.mxu0 0
      %2478 = vmatprep.mubr.bf16.mxu0 0
      %2479 = vmatmul.mubr.bf16.gmra.mrb[0].mxu0 %v2438
      %v2480 = vpop.f32.mrb[0].mxu0
      %v2481 = vadd.f32 0.0, %v2480
      %v2482 = vpop.f32.mrb[0].mxu0
      %v2483 = vadd.f32 0.0, %v2482
      %v2484 = vpop.f32.mrb[0].mxu0
      %v2485 = vpop.f32.mrb[0].mxu0
      %2486 = vdwg.mxu0
      %v2487 = vadd.f32 %v2422, %v2481
      %v2488 = vadd.f32 %v2423, %v2483
      %v2489 = vld [vmem:[%s9] sm:$0xff]
      %2491 = vset.pattern.permute.xlu0 0
      %2492 = vperm.xlu0 %2491, %v2489
      %v2493 = vpop.permute.xlu0 %2492
      %v2495 = vadd.f32 %v2487, %v2493
      %v2496 = vadd.f32 %v2488, %v2493
      %v2497 = vadd.f32 %v2495, %v1329
      %v2498 = vadd.f32 %v2496, %v1330
      %v2499 = vmax.f32 %v2497, 0.0
      %v2500 = vmax.f32 %v2498, 0.0
      %2501 = vst [vmem:[%s359] sm:$0xff] %v2499
      %2502 = vst [vmem:[%s359 + $0x8] sm:$0xff] %v2500
      %p2503 = scmp.lt.s32.totalorder %s21, 1
      %s2504 = scalar_select %p2503, %s21, 1
      %s2505 = smul.addr %s2504, 2
      %s2506 = smul.addr %s2505, 8
      %s2507 = scalar_lea.vmem %s10, %s2506
      // Predicated region
      $region61: #{outer_block_forward.1} parent=59 // pred_check
        %p2508 = pneg %p254
      $region62: #{outer_block_forward.1} parent=59 // pred_check_branch
        %2510 = sbr.rel (%p2508) target = $region64
      $region63: #{outer_block_forward.1} parent=59 // pred_region
        _
      $region64: #{outer_block_forward.1} parent=59 // pred_fallthru
        _
    $region60: #{outer_block_forward.1} parent=5 // pred_fallthru
      _
    %p2511 = scmp.le.s32.totalorder 2, %s16
    // Predicated region
    $region65: #{outer_block_forward.1} parent=5 // pred_check
      %p2512 = pneg %p2511
    $region66: #{outer_block_forward.1} parent=5 // pred_check_branch
      %2514 = sbr.rel (%p2512) target = $region68
    $region67: #{outer_block_forward.1} parent=5 // pred_region
      %s2515 = ssub.s32 %s16, 2
      // Predicated region
      $region69: #{outer_block_forward.1} parent=67 // pred_check
        %p2516 = pneg %p260
      $region70: #{outer_block_forward.1} parent=67 // pred_check_branch
        %2518 = sbr.rel (%p2516) target = $region72
      $region71: #{outer_block_forward.1} parent=67 // pred_region
        %p2519 = scmp.lt.s32.totalorder %s22, 1
        %s2520 = scalar_select %p2519, %s22, 1
        %s2521 = smul.addr %s2520, 2
        %s2522 = smul.addr %s2521, 8
        %s2523 = scalar_lea.vmem %s10, %s2522
      $region72: #{outer_block_forward.1} parent=67 // pred_fallthru
        _
    $region68: #{outer_block_forward.1} parent=5 // pred_fallthru
      _
  $region6: #{outer_block_forward.1} parent=0 // loop_footer
    %s20 = sadd.s32 1, %s16
  $region7: #{outer_block_forward.1} parent=0 // loop_footer_branch
    %15 = sbr.rel target = $region3
  $region8: #{outer_block_forward.1} parent=0 // loop_exit
    _

</llo_original>
